<compile_context>
chip_gen: v7x
topology: tpu7x:2x2x1
jax: 0.10.0
libtpu: 0.0.40
codegen_flags: <defaults>
</compile_context>

<pallas_src>
import functools

import jax
import jax.numpy as jnp
from jax.experimental import pallas as pl
from jax.experimental.pallas import tpu as pltpu

# ---------------------------------------------------------------------------
# Model hyper-parameters (mirrors MultiModalModel.__init__)
# ---------------------------------------------------------------------------
IMAGE_OUTPUT_SIZE = 256
TEXT_OUTPUT_SIZE = 256
NUM_ACTIONS = 10
BERT_HIDDEN = 768          # bert-base-uncased hidden size
RESNET_FEAT = 512          # resnet18 fc.in_features
HIDDEN = 512               # fusion head width
OUT_PAD = 128              # lane-dense padded logits width

# conv stem (resnet18-style stem, stand-in for the full trunk)
CIN, KH, KW = 3, 7, 7
STRIDE, PAD = 2, 3
CK = CIN * KH * KW         # 147
CKP = 256                  # CK zero-padded to an MXU-friendly K


def _round_up(x, m):
    return (x + m - 1) // m * m


# ---------------------------------------------------------------------------
# Pallas kernel: tiled conv-as-matmul + pooled accumulator + fused head epilogue
# ---------------------------------------------------------------------------
def _multimodal_kernel(
    patches_ref,      # [TP, CKP]            bf16  (current P-tile, flattened b)
    conv_w_ref,       # [CKP, RESNET_FEAT]   bf16
    conv_b_ref,       # [1, RESNET_FEAT]     f32
    text_ref,         # [1, 1, BERT_HIDDEN]  f32   (this batch element's CLS)
    img_fc_w_ref,     # [RESNET_FEAT, IMAGE_OUTPUT_SIZE]
    img_fc_b_ref,     # [1, IMAGE_OUTPUT_SIZE]
    txt_fc_w_ref,     # [BERT_HIDDEN, TEXT_OUTPUT_SIZE]
    txt_fc_b_ref,     # [1, TEXT_OUTPUT_SIZE]
    fc1_w_ref,        # [IMAGE_OUTPUT_SIZE + TEXT_OUTPUT_SIZE, HIDDEN]
    fc1_b_ref,        # [1, HIDDEN]
    ln_g_ref,         # [1, HIDDEN]
    ln_b_ref,         # [1, HIDDEN]
    out_w_ref,        # [HIDDEN, OUT_PAD]    (zero-padded past NUM_ACTIONS)
    out_b_ref,        # [1, OUT_PAD]
    logits_ref,       # [1, 1, OUT_PAD]      output block for this batch element
    acc_ref,          # [1, RESNET_FEAT]     f32 VMEM scratch (pool accumulator)
    *, n_patches, tile_p):
    f32 = jnp.float32
    p = pl.program_id(1)

    # ---- init pooled-sum accumulator at the first P-tile of this batch element
    @pl.when(p == 0)
    def _():
        acc_ref[...] = jnp.zeros_like(acc_ref)

    # ---- conv stem tile: bf16 MXU matmul with f32 accumulation, + bias, ReLU
    conv = jnp.dot(patches_ref[...], conv_w_ref[...],
                   preferred_element_type=f32) + conv_b_ref[...]
    conv = jnp.maximum(conv, 0.0)

    # ---- mask rows beyond the true patch count (only needed if P % TP != 0)
    if n_patches % tile_p != 0:
        row = p * tile_p + jax.lax.broadcasted_iota(jnp.int32, (tile_p, 1), 0)
        conv = jnp.where(row < n_patches, conv, 0.0)

    # ---- accumulate global-average-pool numerator
    acc_ref[...] += jnp.sum(conv, axis=0, keepdims=True)

    # ---- epilogue: run the full fusion head only on the last P-tile
    @pl.when(p == pl.num_programs(1) - 1)
    def _():
        pooled = acc_ref[...] * (1.0 / float(n_patches))        # [1, 512]

        # image_encoder.fc : 512 -> 256
        img_emb = jnp.dot(pooled, img_fc_w_ref[...],
                          preferred_element_type=f32) + img_fc_b_ref[...]

        # text_fc : 768 -> 256 (applied to the BERT CLS hidden state)
        txt = text_ref[0]                                       # [1, 768]
        txt_emb = jnp.dot(txt, txt_fc_w_ref[...],
                          preferred_element_type=f32) + txt_fc_b_ref[...]

        # cat([img, txt]) @ W  folded into a split of the weight matrix
        w_img = fc1_w_ref[0:IMAGE_OUTPUT_SIZE, :]
        w_txt = fc1_w_ref[IMAGE_OUTPUT_SIZE:IMAGE_OUTPUT_SIZE + TEXT_OUTPUT_SIZE, :]
        h = (jnp.dot(img_emb, w_img, preferred_element_type=f32)
             + jnp.dot(txt_emb, w_txt, preferred_element_type=f32)
             + fc1_b_ref[...])                                  # [1, 512]

        # LayerNorm(512), eps=1e-5, elementwise affine
        mean = jnp.mean(h, axis=-1, keepdims=True)
        c = h - mean
        var = jnp.mean(c * c, axis=-1, keepdims=True)
        h = c * jax.lax.rsqrt(var + 1e-5) * ln_g_ref[...] + ln_b_ref[...]

        # ReLU ; Dropout(0.3) is identity in eval mode
        h = jnp.maximum(h, 0.0)

        # output_layer : 512 -> num_actions (lane-dense padded to 128)
        logits_ref[0] = (jnp.dot(h, out_w_ref[...],
                                 preferred_element_type=f32) + out_b_ref[...])


# ---------------------------------------------------------------------------
# Wrapper: im2col glue + pallas_call with a (B, P-tiles) grid
# ---------------------------------------------------------------------------
def _im2col(image_nchw):
    """NCHW -> [B, P, Cin*KH*KW] f32, (c, kh, kw) ordering."""
    B, C, H, W = image_nchw.shape
    OH = (H + 2 * PAD - KH) // STRIDE + 1
    OW = (W + 2 * PAD - KW) // STRIDE + 1
    padded = jnp.pad(image_nchw, ((0, 0), (0, 0), (PAD, PAD), (PAD, PAD)))
    cols = []
    for kh in range(KH):
        for kw in range(KW):
            cols.append(padded[:, :, kh:kh + STRIDE * OH:STRIDE,
                               kw:kw + STRIDE * OW:STRIDE])     # [B, C, OH, OW]
    patches = jnp.stack(cols, axis=2)                           # [B, C, KH*KW, OH, OW]
    patches = patches.reshape(B, CK, OH * OW).transpose(0, 2, 1)
    return patches.astype(jnp.float32), OH * OW


def multimodal_forward(image_nchw, text_cls, params, *, tile_p=512):
    """image_nchw: [B, 3, H, W] float32 ; text_cls: [B, 768] float32."""
    B, C, H, W = image_nchw.shape
    assert C == CIN

    patches, P = _im2col(image_nchw)                            # [B, P, CK] f32

    TP = min(tile_p, _round_up(P, 8))
    P_pad = _round_up(P, TP)
    NP = P_pad // TP

    # zero-pad patch count (masked in-kernel) and contraction dim CK -> 256,
    # flatten batch into rows and cast to bf16 (halves the dominant HBM stream)
    patches = jnp.pad(patches, ((0, 0), (0, P_pad - P), (0, CKP - CK)))
    patches = patches.reshape(B * P_pad, CKP).astype(jnp.bfloat16)

    conv_w = jnp.pad(params["conv_w"], ((0, CKP - CK), (0, 0))).astype(jnp.bfloat16)
    out_w = jnp.pad(params["out_w"], ((0, 0), (0, OUT_PAD - NUM_ACTIONS)))
    out_b = jnp.pad(params["out_b"], ((0, 0), (0, OUT_PAD - NUM_ACTIONS)))
    text3 = text_cls.astype(jnp.float32).reshape(B, 1, BERT_HIDDEN)

    inputs = (
        patches, conv_w, params["conv_b"], text3,
        params["img_fc_w"], params["img_fc_b"],
        params["txt_fc_w"], params["txt_fc_b"],
        params["fc1_w"], params["fc1_b"],
        params["ln_g"], params["ln_b"],
        out_w, out_b,
    )

    def _resident(shape):
        nd = len(shape)
        return pl.BlockSpec(shape, lambda b, p, _nd=nd: (0,) * _nd)

    in_specs = [
        pl.BlockSpec((TP, CKP), lambda b, p: (b * NP + p, 0)),      # patches tile
        _resident(conv_w.shape),
        _resident(params["conv_b"].shape),
        pl.BlockSpec((1, 1, BERT_HIDDEN), lambda b, p: (b, 0, 0)),  # CLS per batch
        _resident(params["img_fc_w"].shape),
        _resident(params["img_fc_b"].shape),
        _resident(params["txt_fc_w"].shape),
        _resident(params["txt_fc_b"].shape),
        _resident(params["fc1_w"].shape),
        _resident(params["fc1_b"].shape),
        _resident(params["ln_g"].shape),
        _resident(params["ln_b"].shape),
        _resident(out_w.shape),
        _resident(out_b.shape),
    ]

    kernel = functools.partial(_multimodal_kernel, n_patches=P, tile_p=TP)

    out = pl.pallas_call(
        kernel,
        out_shape=jax.ShapeDtypeStruct((B, 1, OUT_PAD), jnp.float32),
        grid=(B, NP),
        in_specs=in_specs,
        out_specs=pl.BlockSpec((1, 1, OUT_PAD), lambda b, p: (b, 0, 0)),
        scratch_shapes=[pltpu.VMEM((1, RESNET_FEAT), jnp.float32)],
        compiler_params=pltpu.CompilerParams(
            dimension_semantics=("parallel", "arbitrary"),
            vmem_limit_bytes=32 * 1024 * 1024),
    )(*inputs)

    return out[:, 0, :NUM_ACTIONS]


# ---------------------------------------------------------------------------
# Deterministic parameter init (synthetic — shapes from the module __init__)
# ---------------------------------------------------------------------------
def init_params(key):
    ks = jax.random.split(key, 10)

    def dense(k, fan_in, shape):
        return (jax.random.normal(k, shape, jnp.float32)
                * (1.0 / jnp.sqrt(jnp.float32(fan_in))))

    return {
        "conv_w":   dense(ks[0], CK, (CK, RESNET_FEAT)),
        "conv_b":   jnp.zeros((1, RESNET_FEAT), jnp.float32),
        "img_fc_w": dense(ks[1], RESNET_FEAT, (RESNET_FEAT, IMAGE_OUTPUT_SIZE)),
        "img_fc_b": jnp.zeros((1, IMAGE_OUTPUT_SIZE), jnp.float32),
        "txt_fc_w": dense(ks[2], BERT_HIDDEN, (BERT_HIDDEN, TEXT_OUTPUT_SIZE)),
        "txt_fc_b": jnp.zeros((1, TEXT_OUTPUT_SIZE), jnp.float32),
        "fc1_w":    dense(ks[3], IMAGE_OUTPUT_SIZE + TEXT_OUTPUT_SIZE,
                          (IMAGE_OUTPUT_SIZE + TEXT_OUTPUT_SIZE, HIDDEN)),
        "fc1_b":    jnp.zeros((1, HIDDEN), jnp.float32),
        "ln_g":     jnp.ones((1, HIDDEN), jnp.float32),
        "ln_b":     jnp.zeros((1, HIDDEN), jnp.float32),
        "out_w":    dense(ks[4], HIDDEN, (HIDDEN, NUM_ACTIONS)),
        "out_b":    jnp.zeros((1, NUM_ACTIONS), jnp.float32),
    }


# ---------------------------------------------------------------------------
# Pure-JAX reference (same simplified graph, bf16 conv path to match the kernel)
# ---------------------------------------------------------------------------
def reference_forward(image_nchw, text_cls, p):
    patches, _ = _im2col(image_nchw)
    conv = jnp.einsum("bpc,cd->bpd",
                      patches.astype(jnp.bfloat16),
                      p["conv_w"].astype(jnp.bfloat16),
                      preferred_element_type=jnp.float32) + p["conv_b"]
    conv = jnp.maximum(conv, 0.0)
    pooled = jnp.mean(conv, axis=1)
    img_emb = pooled @ p["img_fc_w"] + p["img_fc_b"]
    txt_emb = text_cls @ p["txt_fc_w"] + p["txt_fc_b"]
    comb = jnp.concatenate([img_emb, txt_emb], axis=1)
    h = comb @ p["fc1_w"] + p["fc1_b"]
    mu = h.mean(-1, keepdims=True)
    var = ((h - mu) ** 2).mean(-1, keepdims=True)
    h = (h - mu) * jax.lax.rsqrt(var + 1e-5) * p["ln_g"] + p["ln_b"]
    h = jnp.maximum(h, 0.0)
    return h @ p["out_w"] + p["out_b"]


if __name__ == "__main__":
    key = jax.random.PRNGKey(0)
    k_img, k_txt, k_par = jax.random.split(key, 3)

    B, H, W = 2, 16, 16
    image = jax.random.normal(k_img, (B, CIN, H, W), jnp.float32)      # NCHW
    text_cls = jax.random.normal(k_txt, (B, BERT_HIDDEN), jnp.float32) # BERT CLS stand-in
    params = init_params(k_par)

    logits = multimodal_forward(image, text_cls, params)
    logits = jax.block_until_ready(logits)

    ref = reference_forward(image, text_cls, params)
    assert logits.shape == (B, NUM_ACTIONS)
    assert jnp.allclose(logits, ref, atol=1e-2, rtol=1e-2), (
        float(jnp.max(jnp.abs(logits - ref))))

    print("KERNEL_OK")
</pallas_src>

<mosaic_0001>
module attributes {stable_mosaic.version = 11 : i64} {
  func.func @_multimodal_kernel(%arg0: i32, %arg1: i32, %arg2: memref<64x256xbf16, #tpu.memory_space<vmem>>, %arg3: memref<256x512xbf16, #tpu.memory_space<vmem>>, %arg4: memref<1x512xf32, #tpu.memory_space<vmem>>, %arg5: memref<1x1x768xf32, #tpu.memory_space<vmem>>, %arg6: memref<512x256xf32, #tpu.memory_space<vmem>>, %arg7: memref<1x256xf32, #tpu.memory_space<vmem>>, %arg8: memref<768x256xf32, #tpu.memory_space<vmem>>, %arg9: memref<1x256xf32, #tpu.memory_space<vmem>>, %arg10: memref<512x512xf32, #tpu.memory_space<vmem>>, %arg11: memref<1x512xf32, #tpu.memory_space<vmem>>, %arg12: memref<1x512xf32, #tpu.memory_space<vmem>>, %arg13: memref<1x512xf32, #tpu.memory_space<vmem>>, %arg14: memref<512x128xf32, #tpu.memory_space<vmem>>, %arg15: memref<1x128xf32, #tpu.memory_space<vmem>>, %arg16: memref<1x1x128xf32, #tpu.memory_space<vmem>>, %arg17: memref<1x512xf32, #tpu.memory_space<vmem>>) attributes {dimension_semantics = [#tpu.dimension_semantics<parallel>, #tpu.dimension_semantics<arbitrary>], iteration_bounds = array<i64: 2, 1>, scalar_prefetch = 0 : i64, scratch_operands = 1 : i64, tpu.core_type = #tpu.core_type<tc>, window_params = [{transform_indices = @transform_0, window_bounds = array<i64: 64, 256>}, {pipeline_mode = #tpu.pipeline_mode<synchronous>, transform_indices = @transform_1, window_bounds = array<i64: 256, 512>}, {pipeline_mode = #tpu.pipeline_mode<synchronous>, transform_indices = @transform_2, window_bounds = array<i64: 1, 512>}, {transform_indices = @transform_3, window_bounds = array<i64: 1, 1, 768>}, {pipeline_mode = #tpu.pipeline_mode<synchronous>, transform_indices = @transform_4, window_bounds = array<i64: 512, 256>}, {pipeline_mode = #tpu.pipeline_mode<synchronous>, transform_indices = @transform_5, window_bounds = array<i64: 1, 256>}, {pipeline_mode = #tpu.pipeline_mode<synchronous>, transform_indices = @transform_6, window_bounds = array<i64: 768, 256>}, {pipeline_mode = #tpu.pipeline_mode<synchronous>, transform_indices = @transform_7, window_bounds = array<i64: 1, 256>}, {pipeline_mode = #tpu.pipeline_mode<synchronous>, transform_indices = @transform_8, window_bounds = array<i64: 512, 512>}, {pipeline_mode = #tpu.pipeline_mode<synchronous>, transform_indices = @transform_9, window_bounds = array<i64: 1, 512>}, {pipeline_mode = #tpu.pipeline_mode<synchronous>, transform_indices = @transform_10, window_bounds = array<i64: 1, 512>}, {pipeline_mode = #tpu.pipeline_mode<synchronous>, transform_indices = @transform_11, window_bounds = array<i64: 1, 512>}, {pipeline_mode = #tpu.pipeline_mode<synchronous>, transform_indices = @transform_12, window_bounds = array<i64: 512, 128>}, {pipeline_mode = #tpu.pipeline_mode<synchronous>, transform_indices = @transform_13, window_bounds = array<i64: 1, 128>}, {transform_indices = @transform_14, window_bounds = array<i64: 1, 1, 128>}]} {
    %c0_i32 = arith.constant 0 : i32
    %0 = arith.cmpi eq, %arg1, %c0_i32 : i32
    %1 = arith.extui %0 : i1 to i32
    %c0_i32_0 = arith.constant 0 : i32
    %2 = arith.cmpi ne, %1, %c0_i32_0 : i32
    scf.if %2 {
      %cst_14 = arith.constant 0.000000e+00 : f32
      %19 = vector.broadcast %cst_14 : f32 to vector<1x512xf32>
      %c0_15 = arith.constant 0 : index
      %c0_16 = arith.constant 0 : index
      %20 = vector.load %arg17[%c0_15, %c0_16] : memref<1x512xf32, #tpu.memory_space<vmem>>, vector<1x512xf32>
      tpu.vector_store %arg17[%c0_15, %c0_16], %19 {strides = array<i32>} : memref<1x512xf32, #tpu.memory_space<vmem>>, vector<1x512xf32>,
    } else {
    }
    %c0 = arith.constant 0 : index
    %c0_1 = arith.constant 0 : index
    %3 = vector.load %arg2[%c0, %c0_1] : memref<64x256xbf16, #tpu.memory_space<vmem>>, vector<64x256xbf16>
    %c0_2 = arith.constant 0 : index
    %c0_3 = arith.constant 0 : index
    %4 = vector.load %arg3[%c0_2, %c0_3] : memref<256x512xbf16, #tpu.memory_space<vmem>>, vector<256x512xbf16>
    %cst = arith.constant dense<0.000000e+00> : vector<64x512xf32>
    %5 = tpu.matmul %3, %4, %cst {dimension_numbers = #tpu.dot_dimension_numbers<[1], [0], [0], [1], [0, 0, 1, 1], [], []>} : vector<64x256xbf16>, vector<256x512xbf16>, vector<64x512xf32> -> vector<64x512xf32>
    %c0_4 = arith.constant 0 : index
    %c0_5 = arith.constant 0 : index
    %6 = vector.load %arg4[%c0_4, %c0_5] : memref<1x512xf32, #tpu.memory_space<vmem>>, vector<1x512xf32>
    %7 = vector.broadcast %6 : vector<1x512xf32> to vector<64x512xf32>
    %8 = arith.addf %5, %7 : vector<64x512xf32>
    %cst_6 = arith.constant 0.000000e+00 : f32
    %9 = vector.broadcast %cst_6 : f32 to vector<64x512xf32>
    %10 = arith.maximumf %8, %9 : vector<64x512xf32>
    %c0_7 = arith.constant 0 : index
    %c0_8 = arith.constant 0 : index
    %11 = vector.load %arg17[%c0_7, %c0_8] : memref<1x512xf32, #tpu.memory_space<vmem>>, vector<1x512xf32>
    %cst_9 = arith.constant dense<0.000000e+00> : vector<512xf32>
    %12 = vector.multi_reduction <add>, %10, %cst_9 [0] : vector<64x512xf32> to vector<512xf32>
    %13 = vector.shape_cast %12 : vector<512xf32> to vector<1x512xf32>
    %14 = arith.addf %11, %13 : vector<1x512xf32>
    %c0_10 = arith.constant 0 : index
    %c0_11 = arith.constant 0 : index
    %15 = vector.load %arg17[%c0_10, %c0_11] : memref<1x512xf32, #tpu.memory_space<vmem>>, vector<1x512xf32>
    tpu.vector_store %arg17[%c0_10, %c0_11], %14 {strides = array<i32>} : memref<1x512xf32, #tpu.memory_space<vmem>>, vector<1x512xf32>,
    %c0_i32_12 = arith.constant 0 : i32
    %16 = arith.cmpi eq, %arg1, %c0_i32_12 : i32
    %17 = arith.extui %16 : i1 to i32
    %c0_i32_13 = arith.constant 0 : i32
    %18 = arith.cmpi ne, %17, %c0_i32_13 : i32
    scf.if %18 {
      %c0_14 = arith.constant 0 : index
      %c0_15 = arith.constant 0 : index
      %19 = vector.load %arg17[%c0_14, %c0_15] : memref<1x512xf32, #tpu.memory_space<vmem>>, vector<1x512xf32>
      %cst_16 = arith.constant 1.562500e-02 : f32
      %20 = vector.broadcast %cst_16 : f32 to vector<1x512xf32>
      %21 = arith.mulf %19, %20 : vector<1x512xf32>
      %c0_17 = arith.constant 0 : index
      %c0_18 = arith.constant 0 : index
      %22 = vector.load %arg6[%c0_17, %c0_18] : memref<512x256xf32, #tpu.memory_space<vmem>>, vector<512x256xf32>
      %cst_19 = arith.constant dense<0.000000e+00> : vector<1x256xf32>
      %23 = tpu.matmul %21, %22, %cst_19 {dimension_numbers = #tpu.dot_dimension_numbers<[1], [0], [0], [1], [0, 0, 1, 1], [], []>} : vector<1x512xf32>, vector<512x256xf32>, vector<1x256xf32> -> vector<1x256xf32>
      %c0_20 = arith.constant 0 : index
      %c0_21 = arith.constant 0 : index
      %24 = vector.load %arg7[%c0_20, %c0_21] : memref<1x256xf32, #tpu.memory_space<vmem>>, vector<1x256xf32>
      %25 = arith.addf %23, %24 : vector<1x256xf32>
      %c0_22 = arith.constant 0 : index
      %c0_23 = arith.constant 0 : index
      %c0_24 = arith.constant 0 : index
      %26 = vector.load %arg5[%c0_22, %c0_23, %c0_24] : memref<1x1x768xf32, #tpu.memory_space<vmem>>, vector<1x1x768xf32>
      %27 = vector.shape_cast %26 : vector<1x1x768xf32> to vector<1x768xf32>
      %c0_25 = arith.constant 0 : index
      %c0_26 = arith.constant 0 : index
      %28 = vector.load %arg8[%c0_25, %c0_26] : memref<768x256xf32, #tpu.memory_space<vmem>>, vector<768x256xf32>
      %cst_27 = arith.constant dense<0.000000e+00> : vector<1x256xf32>
      %29 = tpu.matmul %27, %28, %cst_27 {dimension_numbers = #tpu.dot_dimension_numbers<[1], [0], [0], [1], [0, 0, 1, 1], [], []>} : vector<1x768xf32>, vector<768x256xf32>, vector<1x256xf32> -> vector<1x256xf32>
      %c0_28 = arith.constant 0 : index
      %c0_29 = arith.constant 0 : index
      %30 = vector.load %arg9[%c0_28, %c0_29] : memref<1x256xf32, #tpu.memory_space<vmem>>, vector<1x256xf32>
      %31 = arith.addf %29, %30 : vector<1x256xf32>
      %c0_30 = arith.constant 0 : index
      %c0_31 = arith.constant 0 : index
      %32 = vector.load %arg10[%c0_30, %c0_31] : memref<512x512xf32, #tpu.memory_space<vmem>>, vector<256x512xf32>
      %c256 = arith.constant 256 : index
      %c0_32 = arith.constant 0 : index
      %33 = vector.load %arg10[%c256, %c0_32] : memref<512x512xf32, #tpu.memory_space<vmem>>, vector<256x512xf32>
      %cst_33 = arith.constant dense<0.000000e+00> : vector<1x512xf32>
      %34 = tpu.matmul %25, %32, %cst_33 {dimension_numbers = #tpu.dot_dimension_numbers<[1], [0], [0], [1], [0, 0, 1, 1], [], []>} : vector<1x256xf32>, vector<256x512xf32>, vector<1x512xf32> -> vector<1x512xf32>
      %cst_34 = arith.constant dense<0.000000e+00> : vector<1x512xf32>
      %35 = tpu.matmul %31, %33, %cst_34 {dimension_numbers = #tpu.dot_dimension_numbers<[1], [0], [0], [1], [0, 0, 1, 1], [], []>} : vector<1x256xf32>, vector<256x512xf32>, vector<1x512xf32> -> vector<1x512xf32>
      %36 = arith.addf %34, %35 : vector<1x512xf32>
      %c0_35 = arith.constant 0 : index
      %c0_36 = arith.constant 0 : index
      %37 = vector.load %arg11[%c0_35, %c0_36] : memref<1x512xf32, #tpu.memory_space<vmem>>, vector<1x512xf32>
      %38 = arith.addf %36, %37 : vector<1x512xf32>
      %cst_37 = arith.constant dense<0.000000e+00> : vector<1xf32>
      %39 = vector.multi_reduction <add>, %38, %cst_37 [1] : vector<1x512xf32> to vector<1xf32>
      %40 = vector.shape_cast %39 : vector<1xf32> to vector<1x1xf32>
      %cst_38 = arith.constant 5.120000e+02 : f32
      %41 = vector.broadcast %cst_38 : f32 to vector<1x1xf32>
      %42 = arith.divf %40, %41 : vector<1x1xf32>
      %43 = vector.broadcast %42 : vector<1x1xf32> to vector<1x512xf32>
      %44 = arith.subf %38, %43 : vector<1x512xf32>
      %45 = arith.mulf %44, %44 : vector<1x512xf32>
      %cst_39 = arith.constant dense<0.000000e+00> : vector<1xf32>
      %46 = vector.multi_reduction <add>, %45, %cst_39 [1] : vector<1x512xf32> to vector<1xf32>
      %47 = vector.shape_cast %46 : vector<1xf32> to vector<1x1xf32>
      %cst_40 = arith.constant 5.120000e+02 : f32
      %48 = vector.broadcast %cst_40 : f32 to vector<1x1xf32>
      %49 = arith.divf %47, %48 : vector<1x1xf32>
      %cst_41 = arith.constant 9.99999974E-6 : f32
      %50 = vector.broadcast %cst_41 : f32 to vector<1x1xf32>
      %51 = arith.addf %49, %50 : vector<1x1xf32>
      %52 = math.rsqrt %51 : vector<1x1xf32>
      %53 = vector.broadcast %52 : vector<1x1xf32> to vector<1x512xf32>
      %54 = arith.mulf %44, %53 : vector<1x512xf32>
      %c0_42 = arith.constant 0 : index
      %c0_43 = arith.constant 0 : index
      %55 = vector.load %arg12[%c0_42, %c0_43] : memref<1x512xf32, #tpu.memory_space<vmem>>, vector<1x512xf32>
      %56 = arith.mulf %54, %55 : vector<1x512xf32>
      %c0_44 = arith.constant 0 : index
      %c0_45 = arith.constant 0 : index
      %57 = vector.load %arg13[%c0_44, %c0_45] : memref<1x512xf32, #tpu.memory_space<vmem>>, vector<1x512xf32>
      %58 = arith.addf %56, %57 : vector<1x512xf32>
      %cst_46 = arith.constant 0.000000e+00 : f32
      %59 = vector.broadcast %cst_46 : f32 to vector<1x512xf32>
      %60 = arith.maximumf %58, %59 : vector<1x512xf32>
      %c0_47 = arith.constant 0 : index
      %c0_48 = arith.constant 0 : index
      %61 = vector.load %arg14[%c0_47, %c0_48] : memref<512x128xf32, #tpu.memory_space<vmem>>, vector<512x128xf32>
      %cst_49 = arith.constant dense<0.000000e+00> : vector<1x128xf32>
      %62 = tpu.matmul %60, %61, %cst_49 {dimension_numbers = #tpu.dot_dimension_numbers<[1], [0], [0], [1], [0, 0, 1, 1], [], []>} : vector<1x512xf32>, vector<512x128xf32>, vector<1x128xf32> -> vector<1x128xf32>
      %c0_50 = arith.constant 0 : index
      %c0_51 = arith.constant 0 : index
      %63 = vector.load %arg15[%c0_50, %c0_51] : memref<1x128xf32, #tpu.memory_space<vmem>>, vector<1x128xf32>
      %64 = arith.addf %62, %63 : vector<1x128xf32>
      %c0_52 = arith.constant 0 : index
      %c0_53 = arith.constant 0 : index
      %c0_54 = arith.constant 0 : index
      %65 = vector.load %arg16[%c0_52, %c0_53, %c0_54] : memref<1x1x128xf32, #tpu.memory_space<vmem>>, vector<1x1x128xf32>
      %66 = vector.shape_cast %65 : vector<1x1x128xf32> to vector<1x128xf32>
      %67 = vector.shape_cast %64 : vector<1x128xf32> to vector<1x1x128xf32>
      tpu.vector_store %arg16[%c0_52, %c0_53, %c0_54], %67 {strides = array<i32>} : memref<1x1x128xf32, #tpu.memory_space<vmem>>, vector<1x1x128xf32>,
    } else {
    }
    return
  }
  func.func @transform_0(%arg0: i32, %arg1: i32) -> (i32, i32) {
    %c1_i32 = arith.constant 1 : i32
    %0 = arith.muli %arg0, %c1_i32 : i32
    %1 = arith.addi %0, %arg1 : i32
    %c0_i32 = arith.constant 0 : i32
    %c0_i32_0 = arith.constant 0 : i32
    return %1, %c0_i32 : i32, i32
  }
  func.func @transform_1(%arg0: i32, %arg1: i32) -> (i32, i32) {
    %c0_i32 = arith.constant 0 : i32
    %c0_i32_0 = arith.constant 0 : i32
    %c0_i32_1 = arith.constant 0 : i32
    return %c0_i32, %c0_i32_0 : i32, i32
  }
  func.func @transform_2(%arg0: i32, %arg1: i32) -> (i32, i32) {
    %c0_i32 = arith.constant 0 : i32
    %c0_i32_0 = arith.constant 0 : i32
    %c0_i32_1 = arith.constant 0 : i32
    return %c0_i32, %c0_i32_0 : i32, i32
  }
  func.func @transform_3(%arg0: i32, %arg1: i32) -> (i32, i32, i32) {
    %c0_i32 = arith.constant 0 : i32
    %c0_i32_0 = arith.constant 0 : i32
    %c0_i32_1 = arith.constant 0 : i32
    return %arg0, %c0_i32, %c0_i32_0 : i32, i32, i32
  }
  func.func @transform_4(%arg0: i32, %arg1: i32) -> (i32, i32) {
    %c0_i32 = arith.constant 0 : i32
    %c0_i32_0 = arith.constant 0 : i32
    %c0_i32_1 = arith.constant 0 : i32
    return %c0_i32, %c0_i32_0 : i32, i32
  }
  func.func @transform_5(%arg0: i32, %arg1: i32) -> (i32, i32) {
    %c0_i32 = arith.constant 0 : i32
    %c0_i32_0 = arith.constant 0 : i32
    %c0_i32_1 = arith.constant 0 : i32
    return %c0_i32, %c0_i32_0 : i32, i32
  }
  func.func @transform_6(%arg0: i32, %arg1: i32) -> (i32, i32) {
    %c0_i32 = arith.constant 0 : i32
    %c0_i32_0 = arith.constant 0 : i32
    %c0_i32_1 = arith.constant 0 : i32
    return %c0_i32, %c0_i32_0 : i32, i32
  }
  func.func @transform_7(%arg0: i32, %arg1: i32) -> (i32, i32) {
    %c0_i32 = arith.constant 0 : i32
    %c0_i32_0 = arith.constant 0 : i32
    %c0_i32_1 = arith.constant 0 : i32
    return %c0_i32, %c0_i32_0 : i32, i32
  }
  func.func @transform_8(%arg0: i32, %arg1: i32) -> (i32, i32) {
    %c0_i32 = arith.constant 0 : i32
    %c0_i32_0 = arith.constant 0 : i32
    %c0_i32_1 = arith.constant 0 : i32
    return %c0_i32, %c0_i32_0 : i32, i32
  }
  func.func @transform_9(%arg0: i32, %arg1: i32) -> (i32, i32) {
    %c0_i32 = arith.constant 0 : i32
    %c0_i32_0 = arith.constant 0 : i32
    %c0_i32_1 = arith.constant 0 : i32
    return %c0_i32, %c0_i32_0 : i32, i32
  }
  func.func @transform_10(%arg0: i32, %arg1: i32) -> (i32, i32) {
    %c0_i32 = arith.constant 0 : i32
    %c0_i32_0 = arith.constant 0 : i32
    %c0_i32_1 = arith.constant 0 : i32
    return %c0_i32, %c0_i32_0 : i32, i32
  }
  func.func @transform_11(%arg0: i32, %arg1: i32) -> (i32, i32) {
    %c0_i32 = arith.constant 0 : i32
    %c0_i32_0 = arith.constant 0 : i32
    %c0_i32_1 = arith.constant 0 : i32
    return %c0_i32, %c0_i32_0 : i32, i32
  }
  func.func @transform_12(%arg0: i32, %arg1: i32) -> (i32, i32) {
    %c0_i32 = arith.constant 0 : i32
    %c0_i32_0 = arith.constant 0 : i32
    %c0_i32_1 = arith.constant 0 : i32
    return %c0_i32, %c0_i32_0 : i32, i32
  }
  func.func @transform_13(%arg0: i32, %arg1: i32) -> (i32, i32) {
    %c0_i32 = arith.constant 0 : i32
    %c0_i32_0 = arith.constant 0 : i32
    %c0_i32_1 = arith.constant 0 : i32
    return %c0_i32, %c0_i32_0 : i32, i32
  }
  func.func @transform_14(%arg0: i32, %arg1: i32) -> (i32, i32, i32) {
    %c0_i32 = arith.constant 0 : i32
    %c0_i32_0 = arith.constant 0 : i32
    %c0_i32_1 = arith.constant 0 : i32
    return %arg0, %c0_i32, %c0_i32_0 : i32, i32, i32
  }
}

</mosaic_0001>

<llo_original>
// kernel: tpu_custom_call.1
$region0: #{tpu_custom_call.1}
  #allocation0 [shape = 'u32[]', space=smem, size = 0x4, offset = 0x4, fixed_abs, tag = 'smem constant byte address 0x4 - core index']
  #allocation1 [shape = 'u32[144,128]{1,0:T(1,128)}', space=vmem, size = 0x12000, scoped, tag = 'internal scratch']
  #allocation2 [shape = 'f32[1,512]{1,0:T(1,128)}', space=vmem, size = 0x800, scoped, tag = 'scratch operand']
  %s0 = inlined_call_operand.hbm [shape: bf16[128,256], index: 0, kind: input, shape index: {}]
  %s1 = inlined_call_operand.hbm [shape: bf16[256,512], index: 1, kind: input, shape index: {}]
  %s2 = inlined_call_operand.vmem [shape: f32[1,512], index: 2, kind: input, shape index: {}]
  %s3 = inlined_call_operand.hbm [shape: f32[2,1,768], index: 3, kind: input, shape index: {}]
  %s4 = inlined_call_operand.hbm [shape: f32[512,256], index: 4, kind: input, shape index: {}]
  %s5 = inlined_call_operand.vmem [shape: f32[1,256], index: 5, kind: input, shape index: {}]
  %s6 = inlined_call_operand.hbm [shape: f32[768,256], index: 6, kind: input, shape index: {}]
  %s7 = inlined_call_operand.vmem [shape: f32[1,256], index: 7, kind: input, shape index: {}]
  %s8 = inlined_call_operand.hbm [shape: f32[512,512], index: 8, kind: input, shape index: {}]
  %s9 = inlined_call_operand.vmem [shape: f32[1,512], index: 9, kind: input, shape index: {}]
  %s10 = inlined_call_operand.vmem [shape: f32[1,512], index: 10, kind: input, shape index: {}]
  %s11 = inlined_call_operand.vmem [shape: f32[1,512], index: 11, kind: input, shape index: {}]
  %s12 = inlined_call_operand.hbm [shape: f32[512,128], index: 12, kind: input, shape index: {}]
  %s13 = inlined_call_operand.vmem [shape: f32[1,128], index: 13, kind: input, shape index: {}]
  %s14 = inlined_call_operand.hbm [shape: f32[2,1,128], index: 14, kind: output, shape index: {}]
  %s15 = sld [smem:[#allocation0]]
  $region125: #{tpu_custom_call.1} parent=0
    _
  %s17 = ssub.s32 1, %s15
  %s18 = scalar_select 0, %s17, %s15
  $region1: #{tpu_custom_call.1} parent=0
    #allocation3 [shape = 'u8[65536]{0}', space=vmem, size = 0x10000, scoped, tag = 'input window, operand 0']
    #allocation4 [shape = 's32[2]{0}', space=sflag, size = 0x8, scoped, tag = 'scoped memory for tpu_custom_call.1']
    #allocation5 [shape = 's32[2]{0}', space=sflag, size = 0x8, scoped, tag = 'scoped memory for tpu_custom_call.1']
    #allocation6 [shape = 'u8[262144]{0}', space=vmem, size = 0x40000, scoped, tag = 'input window, operand 1, single buffered']
    #allocation7 [shape = 's32[1]{0}', space=sflag, size = 0x4, scoped, tag = 'scoped memory for tpu_custom_call.1']
    #allocation8 [shape = 'u8[6144]{0}', space=vmem, size = 0x1800, scoped, tag = 'input window, operand 3']
    #allocation9 [shape = 'u8[524288]{0}', space=vmem, size = 0x80000, scoped, tag = 'input window, operand 4, single buffered']
    #allocation10 [shape = 'u8[786432]{0}', space=vmem, size = 0xc0000, scoped, tag = 'input window, operand 6, single buffered']
    #allocation11 [shape = 's32[1]{0}', space=sflag, size = 0x4, scoped, tag = 'scoped memory for tpu_custom_call.1']
    #allocation12 [shape = 'u8[1048576]{0}', space=vmem, size = 0x100000, scoped, tag = 'input window, operand 8, single buffered']
    #allocation13 [shape = 'u8[262144]{0}', space=vmem, size = 0x40000, scoped, tag = 'input window, operand 12, single buffered']
    #allocation14 [shape = 's32[1]{0}', space=sflag, size = 0x4, scoped, tag = 'scoped memory for tpu_custom_call.1']
    #allocation15 [shape = 'u8[1024]{0}', space=vmem, size = 0x400, scoped, tag = 'output window, operand 0']
    %19 = vsyncpa [#allocation4], 0
    %s20 = scalar_lea.sflag [#allocation4], 1
    %21 = vsyncpa %s20, 0
    %22 = vsyncpa [#allocation7], 0
    %23 = vsyncpa [#allocation11], 0
    %24 = vsyncpa [#allocation14], 0
    %25 = vsyncpa [#allocation5], 0
    %s26 = scalar_lea.sflag [#allocation5], 1
    %27 = vsyncpa %s26, 0
    loop: start=0, step=1, limit=4
    $region2: #{tpu_custom_call.1} parent=1 // loop_pre_header
      _
    $region3: #{tpu_custom_call.1} parent=1 // loop_header
      %s29 = sphi 0, %s33
      %p30 = scmp.ge.s32.totalorder %s29, 4
      %s36 = sphi 0, %s48
      %s37 = sphi 0, %s44
      %s38 = sphi 0, %s36
      %s39 = sphi 0, %s37
      %s40 = sphi 0, %s38
      %s41 = sphi 0, %s39
      %s53 = sphi 0, %s55
      %s56 = sphi 0, %s53
      %s57 = sphi 0, %s56
      %s73 = sphi 0, %s57
      %s77 = sphi 0, %s77
      %s79 = sphi 0, %s77
      %s80 = sphi 0, %s79
      %s94 = sphi 0, %s80
      %s98 = sphi 0, %s98
      %s100 = sphi 0, %s98
      %s101 = sphi 0, %s100
      %s115 = sphi 0, %s101
      %s121 = sphi 0, %s123
      %s124 = sphi 0, %s121
      %s125 = sphi 0, %s124
      %s141 = sphi 0, %s125
      %s145 = sphi 0, %s145
      %s147 = sphi 0, %s145
      %s148 = sphi 0, %s147
      %s162 = sphi 0, %s148
      %s166 = sphi 0, %s166
      %s168 = sphi 0, %s166
      %s169 = sphi 0, %s168
      %s183 = sphi 0, %s169
      %s187 = sphi 0, %s187
      %s189 = sphi 0, %s187
      %s190 = sphi 0, %s189
      %s204 = sphi 0, %s190
      %s208 = sphi 0, %s208
      %s210 = sphi 0, %s208
      %s211 = sphi 0, %s210
      %s225 = sphi 0, %s211
      %s229 = sphi 0, %s229
      %s231 = sphi 0, %s229
      %s232 = sphi 0, %s231
      %s246 = sphi 0, %s232
      %s250 = sphi 0, %s250
      %s252 = sphi 0, %s250
      %s253 = sphi 0, %s252
      %s267 = sphi 0, %s253
      %s271 = sphi 0, %s271
      %s273 = sphi 0, %s271
      %s274 = sphi 0, %s273
      %s288 = sphi 0, %s274
      %s292 = sphi 0, %s292
      %s294 = sphi 0, %s292
      %s295 = sphi 0, %s294
      %s309 = sphi 0, %s295
      %s313 = sphi 0, %s313
      %s315 = sphi 0, %s313
      %s316 = sphi 0, %s315
      %s330 = sphi 0, %s316
      %s334 = sphi 0, %s334
      %s336 = sphi 0, %s334
      %s337 = sphi 0, %s336
      %s351 = sphi 0, %s337
      %s357 = sphi 0, %s359
      %s360 = sphi 0, %s357
      %s361 = sphi 0, %s360
      %s377 = sphi 0, %s361
    $region4: #{tpu_custom_call.1} parent=1 // loop_header_branch
      %32 = sbr.rel (%p30) target = $region8
    $region5: #{tpu_custom_call.1} parent=1 // loop_body
      %s34 = ssub.s32 %s29, 1
      %s35 = ssub.s32 %s29, 2
      %s42 = sadd.s32 1, %s37
      %p43 = scmp.ge.s32.totalorder %s42, 1
      %s44 = scalar_select %p43, 0, %s42
      %s45 = sadd.s32 1, %s36
      %s46 = scalar_select %p43, %s45, %s36
      %p47 = scmp.ge.s32.totalorder %s46, 2
      %s48 = scalar_select %p47, 0, %s46
      %s49 = sadd.s32 %s36, %s37
      %s50 = sadd.s32 %s48, %s44
      %s51 = ssub.s32 %s49, %s50
      %p52 = scmp.eq.s32.totalorder %s51, 0
      %s54 = sadd.s32 %s53, 1
      %s55 = scalar_select %p52, %s53, %s54
      %p58 = pneg %p52
      %p59 = scmp.eq.s32.totalorder %s29, 1
      %p60 = por %p58, %p59
      %p61 = scmp.ne.s32.totalorder %s53, %s56
      %p62 = scmp.eq.s32.totalorder %s29, 0
      %p63 = por %p61, %p62
      %p64 = scmp.ne.s32.totalorder %s53, %s56
      %p65 = scmp.eq.s32.totalorder %s34, 1
      %p66 = por %p64, %p65
      %p67 = scmp.ne.s32.totalorder %s56, %s57
      %p68 = scmp.eq.s32.totalorder %s34, 0
      %p69 = por %p67, %p68
      %p70 = scmp.ne.s32.totalorder %s56, %s57
      %p71 = scmp.eq.s32.totalorder %s35, 1
      %p72 = por %p70, %p71
      %p74 = scmp.ne.s32.totalorder %s57, %s73
      %p75 = scmp.eq.s32.totalorder %s35, 0
      %p76 = por %p74, %p75
      %s78 = sadd.s32 %s77, 1
      %p81 = scmp.eq.s32.totalorder %s29, 1
      %p82 = scmp.ne.s32.totalorder %s77, %s79
      %p83 = scmp.eq.s32.totalorder %s29, 0
      %p84 = por %p82, %p83
      %p85 = scmp.ne.s32.totalorder %s77, %s79
      %p86 = scmp.eq.s32.totalorder %s34, 1
      %p87 = por %p85, %p86
      %p88 = scmp.ne.s32.totalorder %s79, %s80
      %p89 = scmp.eq.s32.totalorder %s34, 0
      %p90 = por %p88, %p89
      %p91 = scmp.ne.s32.totalorder %s79, %s80
      %p92 = scmp.eq.s32.totalorder %s35, 1
      %p93 = por %p91, %p92
      %p95 = scmp.ne.s32.totalorder %s80, %s94
      %p96 = scmp.eq.s32.totalorder %s35, 0
      %p97 = por %p95, %p96
      %s99 = sadd.s32 %s98, 1
      %p102 = scmp.eq.s32.totalorder %s29, 1
      %p103 = scmp.ne.s32.totalorder %s98, %s100
      %p104 = scmp.eq.s32.totalorder %s29, 0
      %p105 = por %p103, %p104
      %p106 = scmp.ne.s32.totalorder %s98, %s100
      %p107 = scmp.eq.s32.totalorder %s34, 1
      %p108 = por %p106, %p107
      %p109 = scmp.ne.s32.totalorder %s100, %s101
      %p110 = scmp.eq.s32.totalorder %s34, 0
      %p111 = por %p109, %p110
      %p112 = scmp.ne.s32.totalorder %s100, %s101
      %p113 = scmp.eq.s32.totalorder %s35, 1
      %p114 = por %p112, %p113
      %p116 = scmp.ne.s32.totalorder %s101, %s115
      %p117 = scmp.eq.s32.totalorder %s35, 0
      %p118 = por %p116, %p117
      %s119 = ssub.s32 %s36, %s48
      %p120 = scmp.eq.s32.totalorder %s119, 0
      %s122 = sadd.s32 %s121, 1
      %s123 = scalar_select %p120, %s121, %s122
      %p126 = pneg %p120
      %p127 = scmp.eq.s32.totalorder %s29, 1
      %p128 = por %p126, %p127
      %p129 = scmp.ne.s32.totalorder %s121, %s124
      %p130 = scmp.eq.s32.totalorder %s29, 0
      %p131 = por %p129, %p130
      %p132 = scmp.ne.s32.totalorder %s121, %s124
      %p133 = scmp.eq.s32.totalorder %s34, 1
      %p134 = por %p132, %p133
      %p135 = scmp.ne.s32.totalorder %s124, %s125
      %p136 = scmp.eq.s32.totalorder %s34, 0
      %p137 = por %p135, %p136
      %p138 = scmp.ne.s32.totalorder %s124, %s125
      %p139 = scmp.eq.s32.totalorder %s35, 1
      %p140 = por %p138, %p139
      %p142 = scmp.ne.s32.totalorder %s125, %s141
      %p143 = scmp.eq.s32.totalorder %s35, 0
      %p144 = por %p142, %p143
      %s146 = sadd.s32 %s145, 1
      %p149 = scmp.eq.s32.totalorder %s29, 1
      %p150 = scmp.ne.s32.totalorder %s145, %s147
      %p151 = scmp.eq.s32.totalorder %s29, 0
      %p152 = por %p150, %p151
      %p153 = scmp.ne.s32.totalorder %s145, %s147
      %p154 = scmp.eq.s32.totalorder %s34, 1
      %p155 = por %p153, %p154
      %p156 = scmp.ne.s32.totalorder %s147, %s148
      %p157 = scmp.eq.s32.totalorder %s34, 0
      %p158 = por %p156, %p157
      %p159 = scmp.ne.s32.totalorder %s147, %s148
      %p160 = scmp.eq.s32.totalorder %s35, 1
      %p161 = por %p159, %p160
      %p163 = scmp.ne.s32.totalorder %s148, %s162
      %p164 = scmp.eq.s32.totalorder %s35, 0
      %p165 = por %p163, %p164
      %s167 = sadd.s32 %s166, 1
      %p170 = scmp.eq.s32.totalorder %s29, 1
      %p171 = scmp.ne.s32.totalorder %s166, %s168
      %p172 = scmp.eq.s32.totalorder %s29, 0
      %p173 = por %p171, %p172
      %p174 = scmp.ne.s32.totalorder %s166, %s168
      %p175 = scmp.eq.s32.totalorder %s34, 1
      %p176 = por %p174, %p175
      %p177 = scmp.ne.s32.totalorder %s168, %s169
      %p178 = scmp.eq.s32.totalorder %s34, 0
      %p179 = por %p177, %p178
      %p180 = scmp.ne.s32.totalorder %s168, %s169
      %p181 = scmp.eq.s32.totalorder %s35, 1
      %p182 = por %p180, %p181
      %p184 = scmp.ne.s32.totalorder %s169, %s183
      %p185 = scmp.eq.s32.totalorder %s35, 0
      %p186 = por %p184, %p185
      %s188 = sadd.s32 %s187, 1
      %p191 = scmp.eq.s32.totalorder %s29, 1
      %p192 = scmp.ne.s32.totalorder %s187, %s189
      %p193 = scmp.eq.s32.totalorder %s29, 0
      %p194 = por %p192, %p193
      %p195 = scmp.ne.s32.totalorder %s187, %s189
      %p196 = scmp.eq.s32.totalorder %s34, 1
      %p197 = por %p195, %p196
      %p198 = scmp.ne.s32.totalorder %s189, %s190
      %p199 = scmp.eq.s32.totalorder %s34, 0
      %p200 = por %p198, %p199
      %p201 = scmp.ne.s32.totalorder %s189, %s190
      %p202 = scmp.eq.s32.totalorder %s35, 1
      %p203 = por %p201, %p202
      %p205 = scmp.ne.s32.totalorder %s190, %s204
      %p206 = scmp.eq.s32.totalorder %s35, 0
      %p207 = por %p205, %p206
      %s209 = sadd.s32 %s208, 1
      %p212 = scmp.eq.s32.totalorder %s29, 1
      %p213 = scmp.ne.s32.totalorder %s208, %s210
      %p214 = scmp.eq.s32.totalorder %s29, 0
      %p215 = por %p213, %p214
      %p216 = scmp.ne.s32.totalorder %s208, %s210
      %p217 = scmp.eq.s32.totalorder %s34, 1
      %p218 = por %p216, %p217
      %p219 = scmp.ne.s32.totalorder %s210, %s211
      %p220 = scmp.eq.s32.totalorder %s34, 0
      %p221 = por %p219, %p220
      %p222 = scmp.ne.s32.totalorder %s210, %s211
      %p223 = scmp.eq.s32.totalorder %s35, 1
      %p224 = por %p222, %p223
      %p226 = scmp.ne.s32.totalorder %s211, %s225
      %p227 = scmp.eq.s32.totalorder %s35, 0
      %p228 = por %p226, %p227
      %s230 = sadd.s32 %s229, 1
      %p233 = scmp.eq.s32.totalorder %s29, 1
      %p234 = scmp.ne.s32.totalorder %s229, %s231
      %p235 = scmp.eq.s32.totalorder %s29, 0
      %p236 = por %p234, %p235
      %p237 = scmp.ne.s32.totalorder %s229, %s231
      %p238 = scmp.eq.s32.totalorder %s34, 1
      %p239 = por %p237, %p238
      %p240 = scmp.ne.s32.totalorder %s231, %s232
      %p241 = scmp.eq.s32.totalorder %s34, 0
      %p242 = por %p240, %p241
      %p243 = scmp.ne.s32.totalorder %s231, %s232
      %p244 = scmp.eq.s32.totalorder %s35, 1
      %p245 = por %p243, %p244
      %p247 = scmp.ne.s32.totalorder %s232, %s246
      %p248 = scmp.eq.s32.totalorder %s35, 0
      %p249 = por %p247, %p248
      %s251 = sadd.s32 %s250, 1
      %p254 = scmp.eq.s32.totalorder %s29, 1
      %p255 = scmp.ne.s32.totalorder %s250, %s252
      %p256 = scmp.eq.s32.totalorder %s29, 0
      %p257 = por %p255, %p256
      %p258 = scmp.ne.s32.totalorder %s250, %s252
      %p259 = scmp.eq.s32.totalorder %s34, 1
      %p260 = por %p258, %p259
      %p261 = scmp.ne.s32.totalorder %s252, %s253
      %p262 = scmp.eq.s32.totalorder %s34, 0
      %p263 = por %p261, %p262
      %p264 = scmp.ne.s32.totalorder %s252, %s253
      %p265 = scmp.eq.s32.totalorder %s35, 1
      %p266 = por %p264, %p265
      %p268 = scmp.ne.s32.totalorder %s253, %s267
      %p269 = scmp.eq.s32.totalorder %s35, 0
      %p270 = por %p268, %p269
      %s272 = sadd.s32 %s271, 1
      %p275 = scmp.eq.s32.totalorder %s29, 1
      %p276 = scmp.ne.s32.totalorder %s271, %s273
      %p277 = scmp.eq.s32.totalorder %s29, 0
      %p278 = por %p276, %p277
      %p279 = scmp.ne.s32.totalorder %s271, %s273
      %p280 = scmp.eq.s32.totalorder %s34, 1
      %p281 = por %p279, %p280
      %p282 = scmp.ne.s32.totalorder %s273, %s274
      %p283 = scmp.eq.s32.totalorder %s34, 0
      %p284 = por %p282, %p283
      %p285 = scmp.ne.s32.totalorder %s273, %s274
      %p286 = scmp.eq.s32.totalorder %s35, 1
      %p287 = por %p285, %p286
      %p289 = scmp.ne.s32.totalorder %s274, %s288
      %p290 = scmp.eq.s32.totalorder %s35, 0
      %p291 = por %p289, %p290
      %s293 = sadd.s32 %s292, 1
      %p296 = scmp.eq.s32.totalorder %s29, 1
      %p297 = scmp.ne.s32.totalorder %s292, %s294
      %p298 = scmp.eq.s32.totalorder %s29, 0
      %p299 = por %p297, %p298
      %p300 = scmp.ne.s32.totalorder %s292, %s294
      %p301 = scmp.eq.s32.totalorder %s34, 1
      %p302 = por %p300, %p301
      %p303 = scmp.ne.s32.totalorder %s294, %s295
      %p304 = scmp.eq.s32.totalorder %s34, 0
      %p305 = por %p303, %p304
      %p306 = scmp.ne.s32.totalorder %s294, %s295
      %p307 = scmp.eq.s32.totalorder %s35, 1
      %p308 = por %p306, %p307
      %p310 = scmp.ne.s32.totalorder %s295, %s309
      %p311 = scmp.eq.s32.totalorder %s35, 0
      %p312 = por %p310, %p311
      %s314 = sadd.s32 %s313, 1
      %p317 = scmp.eq.s32.totalorder %s29, 1
      %p318 = scmp.ne.s32.totalorder %s313, %s315
      %p319 = scmp.eq.s32.totalorder %s29, 0
      %p320 = por %p318, %p319
      %p321 = scmp.ne.s32.totalorder %s313, %s315
      %p322 = scmp.eq.s32.totalorder %s34, 1
      %p323 = por %p321, %p322
      %p324 = scmp.ne.s32.totalorder %s315, %s316
      %p325 = scmp.eq.s32.totalorder %s34, 0
      %p326 = por %p324, %p325
      %p327 = scmp.ne.s32.totalorder %s315, %s316
      %p328 = scmp.eq.s32.totalorder %s35, 1
      %p329 = por %p327, %p328
      %p331 = scmp.ne.s32.totalorder %s316, %s330
      %p332 = scmp.eq.s32.totalorder %s35, 0
      %p333 = por %p331, %p332
      %s335 = sadd.s32 %s334, 1
      %p338 = scmp.eq.s32.totalorder %s29, 1
      %p339 = scmp.ne.s32.totalorder %s334, %s336
      %p340 = scmp.eq.s32.totalorder %s29, 0
      %p341 = por %p339, %p340
      %p342 = scmp.ne.s32.totalorder %s334, %s336
      %p343 = scmp.eq.s32.totalorder %s34, 1
      %p344 = por %p342, %p343
      %p345 = scmp.ne.s32.totalorder %s336, %s337
      %p346 = scmp.eq.s32.totalorder %s34, 0
      %p347 = por %p345, %p346
      %p348 = scmp.ne.s32.totalorder %s336, %s337
      %p349 = scmp.eq.s32.totalorder %s35, 1
      %p350 = por %p348, %p349
      %p352 = scmp.ne.s32.totalorder %s337, %s351
      %p353 = scmp.eq.s32.totalorder %s35, 0
      %p354 = por %p352, %p353
      %s355 = ssub.s32 %s36, %s48
      %p356 = scmp.eq.s32.totalorder %s355, 0
      %s358 = sadd.s32 %s357, 1
      %s359 = scalar_select %p356, %s357, %s358
      %p362 = pneg %p356
      %p363 = scmp.eq.s32.totalorder %s29, 1
      %p364 = por %p362, %p363
      %p365 = scmp.ne.s32.totalorder %s357, %s360
      %p366 = scmp.eq.s32.totalorder %s29, 0
      %p367 = por %p365, %p366
      %p368 = scmp.ne.s32.totalorder %s357, %s360
      %p369 = scmp.eq.s32.totalorder %s34, 1
      %p370 = por %p368, %p369
      %p371 = scmp.ne.s32.totalorder %s360, %s361
      %p372 = scmp.eq.s32.totalorder %s34, 0
      %p373 = por %p371, %p372
      %p374 = scmp.ne.s32.totalorder %s360, %s361
      %p375 = scmp.eq.s32.totalorder %s35, 1
      %p376 = por %p374, %p375
      %p378 = scmp.ne.s32.totalorder %s361, %s377
      %p379 = scmp.eq.s32.totalorder %s35, 0
      %p380 = por %p378, %p379
      %p381 = scmp.le.s32.totalorder 1, %s29
      %p382 = scmp.lt.s32.totalorder %s29, 3
      %p383 = pnand %p381, %p382
      %p384 = pneg %p383
      // Predicated region
      $region9: #{tpu_custom_call.1} parent=5 // pred_check
        _
      $region10: #{tpu_custom_call.1} parent=5 // pred_check_branch
        %386 = sbr.rel (%p383) target = $region12
      $region11: #{tpu_custom_call.1} parent=5 // pred_region
        %s387 = ssub.s32 %s29, 1
        // Predicated region
        $region13: #{tpu_custom_call.1} parent=11 // pred_check
          %p388 = pneg %p90
        $region14: #{tpu_custom_call.1} parent=11 // pred_check_branch
          %390 = sbr.rel (%p388) target = $region16
        $region15: #{tpu_custom_call.1} parent=11 // pred_region
          %s392 = ssub.s32 8192, 8192
          %393 = vsyncadd [#allocation7], %s392
          %s394 = sshll.u32 [#allocation6], 4
          %s395 = int_to_ptr.vmem [resolvable:$true] %s394
          %400 = dma.hbm_to_vmem [thread:$0]  %s1, 8192, %s395, [#allocation7], 256, 256, 16
        $region16: #{tpu_custom_call.1} parent=11 // pred_fallthru
          _
        // Predicated region
        $region17: #{tpu_custom_call.1} parent=11 // pred_check
          %p401 = pneg %p111
        $region18: #{tpu_custom_call.1} parent=11 // pred_check_branch
          %403 = sbr.rel (%p401) target = $region20
        $region19: #{tpu_custom_call.1} parent=11 // pred_region
          _
        $region20: #{tpu_custom_call.1} parent=11 // pred_fallthru
          _
        // Predicated region
        $region21: #{tpu_custom_call.1} parent=11 // pred_check
          %p404 = pneg %p158
        $region22: #{tpu_custom_call.1} parent=11 // pred_check_branch
          %406 = sbr.rel (%p404) target = $region24
        $region23: #{tpu_custom_call.1} parent=11 // pred_region
          %s408 = ssub.s32 16384, 16384
          %409 = vsyncadd [#allocation7], %s408
          %s410 = sshll.u32 [#allocation9], 4
          %s411 = int_to_ptr.vmem [resolvable:$true] %s410
          %416 = dma.hbm_to_vmem [thread:$0]  %s4, 16384, %s411, [#allocation7], 256, 256, 16
        $region24: #{tpu_custom_call.1} parent=11 // pred_fallthru
          _
        // Predicated region
        $region25: #{tpu_custom_call.1} parent=11 // pred_check
          %p417 = pneg %p179
        $region26: #{tpu_custom_call.1} parent=11 // pred_check_branch
          %419 = sbr.rel (%p417) target = $region28
        $region27: #{tpu_custom_call.1} parent=11 // pred_region
          _
        $region28: #{tpu_custom_call.1} parent=11 // pred_fallthru
          _
        // Predicated region
        $region29: #{tpu_custom_call.1} parent=11 // pred_check
          %p420 = pneg %p200
        $region30: #{tpu_custom_call.1} parent=11 // pred_check_branch
          %422 = sbr.rel (%p420) target = $region32
        $region31: #{tpu_custom_call.1} parent=11 // pred_region
          %s424 = ssub.s32 24576, 24576
          %425 = vsyncadd [#allocation11], %s424
          %s426 = sshll.u32 [#allocation10], 4
          %s427 = int_to_ptr.vmem [resolvable:$true] %s426
          %432 = dma.hbm_to_vmem [thread:$0]  %s6, 24576, %s427, [#allocation11], 256, 256, 16
        $region32: #{tpu_custom_call.1} parent=11 // pred_fallthru
          _
        // Predicated region
        $region33: #{tpu_custom_call.1} parent=11 // pred_check
          %p433 = pneg %p221
        $region34: #{tpu_custom_call.1} parent=11 // pred_check_branch
          %435 = sbr.rel (%p433) target = $region36
        $region35: #{tpu_custom_call.1} parent=11 // pred_region
          _
        $region36: #{tpu_custom_call.1} parent=11 // pred_fallthru
          _
        // Predicated region
        $region37: #{tpu_custom_call.1} parent=11 // pred_check
          %p436 = pneg %p242
        $region38: #{tpu_custom_call.1} parent=11 // pred_check_branch
          %438 = sbr.rel (%p436) target = $region40
        $region39: #{tpu_custom_call.1} parent=11 // pred_region
          %s440 = ssub.s32 32768, 32768
          %441 = vsyncadd [#allocation11], %s440
          %s442 = sshll.u32 [#allocation12], 4
          %s443 = int_to_ptr.vmem [resolvable:$true] %s442
          %448 = dma.hbm_to_vmem [thread:$0]  %s8, 32768, %s443, [#allocation11], 512, 512, 32
        $region40: #{tpu_custom_call.1} parent=11 // pred_fallthru
          _
        // Predicated region
        $region41: #{tpu_custom_call.1} parent=11 // pred_check
          %p449 = pneg %p263
        $region42: #{tpu_custom_call.1} parent=11 // pred_check_branch
          %451 = sbr.rel (%p449) target = $region44
        $region43: #{tpu_custom_call.1} parent=11 // pred_region
          _
        $region44: #{tpu_custom_call.1} parent=11 // pred_fallthru
          _
        // Predicated region
        $region45: #{tpu_custom_call.1} parent=11 // pred_check
          %p452 = pneg %p284
        $region46: #{tpu_custom_call.1} parent=11 // pred_check_branch
          %454 = sbr.rel (%p452) target = $region48
        $region47: #{tpu_custom_call.1} parent=11 // pred_region
          _
        $region48: #{tpu_custom_call.1} parent=11 // pred_fallthru
          _
        // Predicated region
        $region49: #{tpu_custom_call.1} parent=11 // pred_check
          %p455 = pneg %p305
        $region50: #{tpu_custom_call.1} parent=11 // pred_check_branch
          %457 = sbr.rel (%p455) target = $region52
        $region51: #{tpu_custom_call.1} parent=11 // pred_region
          _
        $region52: #{tpu_custom_call.1} parent=11 // pred_fallthru
          _
        // Predicated region
        $region53: #{tpu_custom_call.1} parent=11 // pred_check
          %p458 = pneg %p326
        $region54: #{tpu_custom_call.1} parent=11 // pred_check_branch
          %460 = sbr.rel (%p458) target = $region56
        $region55: #{tpu_custom_call.1} parent=11 // pred_region
          %s462 = ssub.s32 8192, 8192
          %463 = vsyncadd [#allocation14], %s462
          %s464 = sshll.u32 [#allocation13], 4
          %s465 = int_to_ptr.vmem [resolvable:$true] %s464
          %470 = dma.hbm_to_vmem [thread:$0]  %s12, 8192, %s465, [#allocation14], 128, 128, 8
        $region56: #{tpu_custom_call.1} parent=11 // pred_fallthru
          _
        // Predicated region
        $region57: #{tpu_custom_call.1} parent=11 // pred_check
          %p471 = pneg %p347
        $region58: #{tpu_custom_call.1} parent=11 // pred_check_branch
          %473 = sbr.rel (%p471) target = $region60
        $region59: #{tpu_custom_call.1} parent=11 // pred_region
          _
        $region60: #{tpu_custom_call.1} parent=11 // pred_fallthru
          _
      $region12: #{tpu_custom_call.1} parent=5 // pred_fallthru
        _
      %p474 = scmp.lt.s32.totalorder %s29, 2
      // Predicated region
      $region61: #{tpu_custom_call.1} parent=5 // pred_check
        %p475 = pneg %p474
      $region62: #{tpu_custom_call.1} parent=5 // pred_check_branch
        %477 = sbr.rel (%p475) target = $region64
      $region63: #{tpu_custom_call.1} parent=5 // pred_region
        // Predicated region
        $region65: #{tpu_custom_call.1} parent=63 // pred_check
          %p478 = pneg %p63
        $region66: #{tpu_custom_call.1} parent=63 // pred_check_branch
          %480 = sbr.rel (%p478) target = $region68
        $region67: #{tpu_custom_call.1} parent=63 // pred_region
          %s481 = sand.u32 %s29, 1
          %s482 = scalar_lea.sflag [#allocation4], %s481
          %s483 = sand.u32 %s53, 1
          %s484 = smul.addr %s483, 64
          %s485 = scalar_lea.vmem [#allocation3], %s484
          %s486 = sadd.s32 %s36, %s37
          %s487 = smul.u32 8, %s486
          %s489 = ssub.s32 1024, 1024
          %490 = vsyncadd %s482, %s489
          %s491 = smul.addr %s487, 2
          %s492 = smul.addr %s491, 64
          %s493 = scalar_lea.hbm %s0, %s492
          %s494 = sshll.u32 %s485, 4
          %s495 = int_to_ptr.vmem [resolvable:$true] %s494
          %500 = dma.hbm_to_vmem [thread:$0]  %s493, 1024, %s495, %s482, 128, 128, 8
        $region68: #{tpu_custom_call.1} parent=63 // pred_fallthru
          _
        // Predicated region
        $region69: #{tpu_custom_call.1} parent=63 // pred_check
          %p501 = pneg %p131
        $region70: #{tpu_custom_call.1} parent=63 // pred_check_branch
          %503 = sbr.rel (%p501) target = $region72
        $region71: #{tpu_custom_call.1} parent=63 // pred_region
          %s504 = sand.u32 %s29, 1
          %s505 = scalar_lea.sflag [#allocation4], %s504
          %s506 = sand.u32 %s121, 1
          %s507 = smul.addr %s506, 6
          %s508 = scalar_lea.vmem [#allocation8], %s507
          %s510 = ssub.s32 96, 96
          %511 = vsyncadd %s505, %s510
          %s512 = smul.addr %s36, 6
          %s513 = smul.addr %s512, 16
          %s514 = scalar_lea.hbm %s3, %s513
          %s516 = sshll.u32 %s508, 4
          %s517 = int_to_ptr.vmem [resolvable:$true] %s516
          %519 = dma.hbm_to_vmem [thread:$0]  %s514, 96, %s517, %s505
        $region72: #{tpu_custom_call.1} parent=63 // pred_fallthru
          _
      $region64: #{tpu_custom_call.1} parent=5 // pred_fallthru
        _
      %p520 = scmp.le.s32.totalorder 1, %s29
      %p521 = scmp.lt.s32.totalorder %s29, 3
      %p522 = pnand %p520, %p521
      %p523 = pneg %p522
      // Predicated region
      $region73: #{tpu_custom_call.1} parent=5 // pred_check
        _
      $region74: #{tpu_custom_call.1} parent=5 // pred_check_branch
        %525 = sbr.rel (%p522) target = $region76
      $region75: #{tpu_custom_call.1} parent=5 // pred_region
        %s526 = ssub.s32 %s29, 1
        %s527 = sand.u32 %s34, 1
        %s528 = scalar_lea.sflag [#allocation4], %s527
        %s529 = sand.u32 %s56, 1
        %s530 = smul.addr %s529, 64
        %s531 = scalar_lea.vmem [#allocation3], %s530
        // Predicated region
        $region77: #{tpu_custom_call.1} parent=75 // pred_check
          %p532 = pneg %p69
        $region78: #{tpu_custom_call.1} parent=75 // pred_check_branch
          %534 = sbr.rel (%p532) target = $region80
        $region79: #{tpu_custom_call.1} parent=75 // pred_region
          %535 = dma.done %s528, 1024
        $region80: #{tpu_custom_call.1} parent=75 // pred_fallthru
          _
        // Predicated region
        $region81: #{tpu_custom_call.1} parent=75 // pred_check
          %p536 = pneg %p90
        $region82: #{tpu_custom_call.1} parent=75 // pred_check_branch
          %538 = sbr.rel (%p536) target = $region84
        $region83: #{tpu_custom_call.1} parent=75 // pred_region
          %539 = dma.done [#allocation7], 8192
        $region84: #{tpu_custom_call.1} parent=75 // pred_fallthru
          _
        %s540 = sand.u32 %s34, 1
        %s541 = scalar_lea.sflag [#allocation4], %s540
        %s542 = sand.u32 %s124, 1
        %s543 = smul.addr %s542, 6
        %s544 = scalar_lea.vmem [#allocation8], %s543
        // Predicated region
        $region85: #{tpu_custom_call.1} parent=75 // pred_check
          %p545 = pneg %p137
        $region86: #{tpu_custom_call.1} parent=75 // pred_check_branch
          %547 = sbr.rel (%p545) target = $region88
        $region87: #{tpu_custom_call.1} parent=75 // pred_region
          %548 = dma.done %s541, 96
        $region88: #{tpu_custom_call.1} parent=75 // pred_fallthru
          _
        // Predicated region
        $region89: #{tpu_custom_call.1} parent=75 // pred_check
          %p549 = pneg %p158
        $region90: #{tpu_custom_call.1} parent=75 // pred_check_branch
          %551 = sbr.rel (%p549) target = $region92
        $region91: #{tpu_custom_call.1} parent=75 // pred_region
          %552 = dma.done [#allocation7], 16384
        $region92: #{tpu_custom_call.1} parent=75 // pred_fallthru
          _
        // Predicated region
        $region93: #{tpu_custom_call.1} parent=75 // pred_check
          %p553 = pneg %p200
        $region94: #{tpu_custom_call.1} parent=75 // pred_check_branch
          %555 = sbr.rel (%p553) target = $region96
        $region95: #{tpu_custom_call.1} parent=75 // pred_region
          %556 = dma.done [#allocation11], 24576
        $region96: #{tpu_custom_call.1} parent=75 // pred_fallthru
          _
        // Predicated region
        $region97: #{tpu_custom_call.1} parent=75 // pred_check
          %p557 = pneg %p242
        $region98: #{tpu_custom_call.1} parent=75 // pred_check_branch
          %559 = sbr.rel (%p557) target = $region100
        $region99: #{tpu_custom_call.1} parent=75 // pred_region
          %560 = dma.done [#allocation11], 32768
        $region100: #{tpu_custom_call.1} parent=75 // pred_fallthru
          _
        // Predicated region
        $region101: #{tpu_custom_call.1} parent=75 // pred_check
          %p561 = pneg %p326
        $region102: #{tpu_custom_call.1} parent=75 // pred_check_branch
          %563 = sbr.rel (%p561) target = $region104
        $region103: #{tpu_custom_call.1} parent=75 // pred_region
          %564 = dma.done [#allocation14], 8192
        $region104: #{tpu_custom_call.1} parent=75 // pred_fallthru
          _
        %s565 = sand.u32 %s34, 1
        %s566 = scalar_lea.sflag [#allocation4], %s565
        %s567 = sand.u32 %s56, 1
        %s568 = smul.addr %s567, 64
        %s569 = scalar_lea.vmem [#allocation3], %s568
        %p570 = pneg %p69
        %p571 = pneg %p66
        %p572 = pneg %p90
        %p573 = pneg %p87
        %p574 = pneg %p111
        %p575 = pneg %p108
        %s576 = sand.u32 %s34, 1
        %s577 = scalar_lea.sflag [#allocation4], %s576
        %s578 = sand.u32 %s124, 1
        %s579 = smul.addr %s578, 6
        %s580 = scalar_lea.vmem [#allocation8], %s579
        %p581 = pneg %p137
        %p582 = pneg %p134
        %p583 = pneg %p158
        %p584 = pneg %p155
        %p585 = pneg %p179
        %p586 = pneg %p176
        %p587 = pneg %p200
        %p588 = pneg %p197
        %p589 = pneg %p221
        %p590 = pneg %p218
        %p591 = pneg %p242
        %p592 = pneg %p239
        %p593 = pneg %p263
        %p594 = pneg %p260
        %p595 = pneg %p284
        %p596 = pneg %p281
        %p597 = pneg %p305
        %p598 = pneg %p302
        %p599 = pneg %p326
        %p600 = pneg %p323
        %p601 = pneg %p347
        %p602 = pneg %p344
        %p603 = pneg %p373
        %p604 = pneg %p370
        %s605 = sand.u32 %s360, 1
        %s606 = scalar_lea.sflag [#allocation5], %s605
        %s607 = sand.u32 %s360, 1
        %s608 = scalar_lea.vmem [#allocation15], %s607
        %s609 = sadd.s32 %s38, %s39
        %s610 = smul.u32 8, %s609
        %p611 = scmp.eq.s32.totalorder %s39, 0
        // Predicated region
        $region105: #{tpu_custom_call.1} parent=75 // pred_check
          %p612 = pneg %p611
        $region106: #{tpu_custom_call.1} parent=75 // pred_check_branch
          %614 = sbr.rel (%p612) target = $region108
        $region107: #{tpu_custom_call.1} parent=75 // pred_region
          %v615 = vlaneseq
          %vm616 = vcmp.ge.s32.totalorder %v615, 0
          %vm617 = vcmp.lt.s32.totalorder %v615, 512
          %vm618 = vmand %vm616, %vm617
          %619 = vst.msk [vmem:[#allocation2] sm:$0xf] %vm618, 0.0
        $region108: #{tpu_custom_call.1} parent=75 // pred_fallthru
          _
        %v620 = vld [vmem:[%s531] sm:$0xff]
        %v621 = vld [vmem:[%s531 + $0x8] sm:$0xff]
        %v622 = vld [vmem:[%s531 + $0x10] sm:$0xff]
        %v623 = vld [vmem:[%s531 + $0x18] sm:$0xff]
        %v624 = vld [vmem:[%s531 + $0x20] sm:$0xff]
        %v625 = vld [vmem:[%s531 + $0x28] sm:$0xff]
        %v626 = vld [vmem:[%s531 + $0x30] sm:$0xff]
        %v627 = vld [vmem:[%s531 + $0x38] sm:$0xff]
        %v628 = vld [vmem:[#allocation6] sm:$0xff]
        %v629 = vld [vmem:[#allocation6 + $0x8] sm:$0xff]
        %v630 = vld [vmem:[#allocation6 + $0x10] sm:$0xff]
        %v631 = vld [vmem:[#allocation6 + $0x18] sm:$0xff]
        %v632 = vld [vmem:[#allocation6 + $0x20] sm:$0xff]
        %v633 = vld [vmem:[#allocation6 + $0x28] sm:$0xff]
        %v634 = vld [vmem:[#allocation6 + $0x30] sm:$0xff]
        %v635 = vld [vmem:[#allocation6 + $0x38] sm:$0xff]
        %v636 = vld [vmem:[#allocation6 + $0x40] sm:$0xff]
        %v637 = vld [vmem:[#allocation6 + $0x48] sm:$0xff]
        %v638 = vld [vmem:[#allocation6 + $0x50] sm:$0xff]
        %v639 = vld [vmem:[#allocation6 + $0x58] sm:$0xff]
        %v640 = vld [vmem:[#allocation6 + $0x60] sm:$0xff]
        %v641 = vld [vmem:[#allocation6 + $0x68] sm:$0xff]
        %v642 = vld [vmem:[#allocation6 + $0x70] sm:$0xff]
        %v643 = vld [vmem:[#allocation6 + $0x78] sm:$0xff]
        %v644 = vld [vmem:[#allocation6 + $0x80] sm:$0xff]
        %v645 = vld [vmem:[#allocation6 + $0x88] sm:$0xff]
        %v646 = vld [vmem:[#allocation6 + $0x90] sm:$0xff]
        %v647 = vld [vmem:[#allocation6 + $0x98] sm:$0xff]
        %v648 = vld [vmem:[#allocation6 + $0xa0] sm:$0xff]
        %v649 = vld [vmem:[#allocation6 + $0xa8] sm:$0xff]
        %v650 = vld [vmem:[#allocation6 + $0xb0] sm:$0xff]
        %v651 = vld [vmem:[#allocation6 + $0xb8] sm:$0xff]
        %v652 = vld [vmem:[#allocation6 + $0xc0] sm:$0xff]
        %v653 = vld [vmem:[#allocation6 + $0xc8] sm:$0xff]
        %v654 = vld [vmem:[#allocation6 + $0xd0] sm:$0xff]
        %v655 = vld [vmem:[#allocation6 + $0xd8] sm:$0xff]
        %v656 = vld [vmem:[#allocation6 + $0xe0] sm:$0xff]
        %v657 = vld [vmem:[#allocation6 + $0xe8] sm:$0xff]
        %v658 = vld [vmem:[#allocation6 + $0xf0] sm:$0xff]
        %v659 = vld [vmem:[#allocation6 + $0xf8] sm:$0xff]
        %v660 = vld [vmem:[#allocation6 + $0x100] sm:$0xff]
        %v661 = vld [vmem:[#allocation6 + $0x108] sm:$0xff]
        %v662 = vld [vmem:[#allocation6 + $0x110] sm:$0xff]
        %v663 = vld [vmem:[#allocation6 + $0x118] sm:$0xff]
        %v664 = vld [vmem:[#allocation6 + $0x120] sm:$0xff]
        %v665 = vld [vmem:[#allocation6 + $0x128] sm:$0xff]
        %v666 = vld [vmem:[#allocation6 + $0x130] sm:$0xff]
        %v667 = vld [vmem:[#allocation6 + $0x138] sm:$0xff]
        %v668 = vld [vmem:[#allocation6 + $0x140] sm:$0xff]
        %v669 = vld [vmem:[#allocation6 + $0x148] sm:$0xff]
        %v670 = vld [vmem:[#allocation6 + $0x150] sm:$0xff]
        %v671 = vld [vmem:[#allocation6 + $0x158] sm:$0xff]
        %v672 = vld [vmem:[#allocation6 + $0x160] sm:$0xff]
        %v673 = vld [vmem:[#allocation6 + $0x168] sm:$0xff]
        %v674 = vld [vmem:[#allocation6 + $0x170] sm:$0xff]
        %v675 = vld [vmem:[#allocation6 + $0x178] sm:$0xff]
        %v676 = vld [vmem:[#allocation6 + $0x180] sm:$0xff]
        %v677 = vld [vmem:[#allocation6 + $0x188] sm:$0xff]
        %v678 = vld [vmem:[#allocation6 + $0x190] sm:$0xff]
        %v679 = vld [vmem:[#allocation6 + $0x198] sm:$0xff]
        %v680 = vld [vmem:[#allocation6 + $0x1a0] sm:$0xff]
        %v681 = vld [vmem:[#allocation6 + $0x1a8] sm:$0xff]
        %v682 = vld [vmem:[#allocation6 + $0x1b0] sm:$0xff]
        %v683 = vld [vmem:[#allocation6 + $0x1b8] sm:$0xff]
        %v684 = vld [vmem:[#allocation6 + $0x1c0] sm:$0xff]
        %v685 = vld [vmem:[#allocation6 + $0x1c8] sm:$0xff]
        %v686 = vld [vmem:[#allocation6 + $0x1d0] sm:$0xff]
        %v687 = vld [vmem:[#allocation6 + $0x1d8] sm:$0xff]
        %v688 = vld [vmem:[#allocation6 + $0x1e0] sm:$0xff]
        %v689 = vld [vmem:[#allocation6 + $0x1e8] sm:$0xff]
        %v690 = vld [vmem:[#allocation6 + $0x1f0] sm:$0xff]
        %v691 = vld [vmem:[#allocation6 + $0x1f8] sm:$0xff]
        %v692 = vld [vmem:[%s2] sm:$0xf]
        %v694 = vlaneseq
        %v695 = vshrl.u32 %v694, 7
        %v696 = vsub.s32 0, %v695
        %v697 = vrot.slane %v692, %v696
        %v698 = vlaneseq
        %v699 = vshrl.u32 %v698, 7
        %v700 = vsub.s32 1, %v699
        %v701 = vrot.slane %v692, %v700
        %v702 = vlaneseq
        %v703 = vshrl.u32 %v702, 7
        %v704 = vsub.s32 2, %v703
        %v705 = vrot.slane %v692, %v704
        %v706 = vlaneseq
        %v707 = vshrl.u32 %v706, 7
        %v708 = vsub.s32 3, %v707
        %v709 = vrot.slane %v692, %v708
        %v722 = vunpack.c.l.b16 %v620
        %v723 = vunpack.c.h.b16 %v620
        %v724 = vunpack.c.l.b16 %v621
        %v725 = vunpack.c.h.b16 %v621
        %v726 = vunpack.c.l.b16 %v622
        %v727 = vunpack.c.h.b16 %v622
        %v728 = vunpack.c.l.b16 %v623
        %v729 = vunpack.c.h.b16 %v623
        %v730 = vunpack.c.l.b16 %v624
        %v731 = vunpack.c.h.b16 %v624
        %v732 = vunpack.c.l.b16 %v625
        %v733 = vunpack.c.h.b16 %v625
        %v734 = vunpack.c.l.b16 %v626
        %v735 = vunpack.c.h.b16 %v626
        %v736 = vunpack.c.l.b16 %v627
        %v737 = vunpack.c.h.b16 %v627
        %v738 = vpack.c.b16 %v724, %v722
        %v739 = vpack.c.b16 %v725, %v723
        %v740 = vpack.c.b16 %v728, %v726
        %v741 = vpack.c.b16 %v729, %v727
        %v742 = vpack.c.b16 %v732, %v730
        %v743 = vpack.c.b16 %v733, %v731
        %v744 = vpack.c.b16 %v736, %v734
        %v745 = vpack.c.b16 %v737, %v735
        %v818 = vunpack.c.l.b16 %v628
        %v819 = vunpack.c.h.b16 %v628
        %v820 = vunpack.c.l.b16 %v629
        %v821 = vunpack.c.h.b16 %v629
        %v822 = vunpack.c.l.b16 %v630
        %v823 = vunpack.c.h.b16 %v630
        %v824 = vunpack.c.l.b16 %v631
        %v825 = vunpack.c.h.b16 %v631
        %v826 = vunpack.c.l.b16 %v632
        %v827 = vunpack.c.h.b16 %v632
        %v828 = vunpack.c.l.b16 %v633
        %v829 = vunpack.c.h.b16 %v633
        %v830 = vunpack.c.l.b16 %v634
        %v831 = vunpack.c.h.b16 %v634
        %v832 = vunpack.c.l.b16 %v635
        %v833 = vunpack.c.h.b16 %v635
        %v834 = vunpack.c.l.b16 %v636
        %v835 = vunpack.c.h.b16 %v636
        %v836 = vunpack.c.l.b16 %v637
        %v837 = vunpack.c.h.b16 %v637
        %v838 = vunpack.c.l.b16 %v638
        %v839 = vunpack.c.h.b16 %v638
        %v840 = vunpack.c.l.b16 %v639
        %v841 = vunpack.c.h.b16 %v639
        %v842 = vunpack.c.l.b16 %v640
        %v843 = vunpack.c.h.b16 %v640
        %v844 = vunpack.c.l.b16 %v641
        %v845 = vunpack.c.h.b16 %v641
        %v846 = vunpack.c.l.b16 %v642
        %v847 = vunpack.c.h.b16 %v642
        %v848 = vunpack.c.l.b16 %v643
        %v849 = vunpack.c.h.b16 %v643
        %v850 = vunpack.c.l.b16 %v644
        %v851 = vunpack.c.h.b16 %v644
        %v852 = vunpack.c.l.b16 %v645
        %v853 = vunpack.c.h.b16 %v645
        %v854 = vunpack.c.l.b16 %v646
        %v855 = vunpack.c.h.b16 %v646
        %v856 = vunpack.c.l.b16 %v647
        %v857 = vunpack.c.h.b16 %v647
        %v858 = vunpack.c.l.b16 %v648
        %v859 = vunpack.c.h.b16 %v648
        %v860 = vunpack.c.l.b16 %v649
        %v861 = vunpack.c.h.b16 %v649
        %v862 = vunpack.c.l.b16 %v650
        %v863 = vunpack.c.h.b16 %v650
        %v864 = vunpack.c.l.b16 %v651
        %v865 = vunpack.c.h.b16 %v651
        %v866 = vunpack.c.l.b16 %v652
        %v867 = vunpack.c.h.b16 %v652
        %v868 = vunpack.c.l.b16 %v653
        %v869 = vunpack.c.h.b16 %v653
        %v870 = vunpack.c.l.b16 %v654
        %v871 = vunpack.c.h.b16 %v654
        %v872 = vunpack.c.l.b16 %v655
        %v873 = vunpack.c.h.b16 %v655
        %v874 = vunpack.c.l.b16 %v656
        %v875 = vunpack.c.h.b16 %v656
        %v876 = vunpack.c.l.b16 %v657
        %v877 = vunpack.c.h.b16 %v657
        %v878 = vunpack.c.l.b16 %v658
        %v879 = vunpack.c.h.b16 %v658
        %v880 = vunpack.c.l.b16 %v659
        %v881 = vunpack.c.h.b16 %v659
        %v882 = vunpack.c.l.b16 %v660
        %v883 = vunpack.c.h.b16 %v660
        %v884 = vunpack.c.l.b16 %v661
        %v885 = vunpack.c.h.b16 %v661
        %v886 = vunpack.c.l.b16 %v662
        %v887 = vunpack.c.h.b16 %v662
        %v888 = vunpack.c.l.b16 %v663
        %v889 = vunpack.c.h.b16 %v663
        %v890 = vunpack.c.l.b16 %v664
        %v891 = vunpack.c.h.b16 %v664
        %v892 = vunpack.c.l.b16 %v665
        %v893 = vunpack.c.h.b16 %v665
        %v894 = vunpack.c.l.b16 %v666
        %v895 = vunpack.c.h.b16 %v666
        %v896 = vunpack.c.l.b16 %v667
        %v897 = vunpack.c.h.b16 %v667
        %v898 = vunpack.c.l.b16 %v668
        %v899 = vunpack.c.h.b16 %v668
        %v900 = vunpack.c.l.b16 %v669
        %v901 = vunpack.c.h.b16 %v669
        %v902 = vunpack.c.l.b16 %v670
        %v903 = vunpack.c.h.b16 %v670
        %v904 = vunpack.c.l.b16 %v671
        %v905 = vunpack.c.h.b16 %v671
        %v906 = vunpack.c.l.b16 %v672
        %v907 = vunpack.c.h.b16 %v672
        %v908 = vunpack.c.l.b16 %v673
        %v909 = vunpack.c.h.b16 %v673
        %v910 = vunpack.c.l.b16 %v674
        %v911 = vunpack.c.h.b16 %v674
        %v912 = vunpack.c.l.b16 %v675
        %v913 = vunpack.c.h.b16 %v675
        %v914 = vunpack.c.l.b16 %v676
        %v915 = vunpack.c.h.b16 %v676
        %v916 = vunpack.c.l.b16 %v677
        %v917 = vunpack.c.h.b16 %v677
        %v918 = vunpack.c.l.b16 %v678
        %v919 = vunpack.c.h.b16 %v678
        %v920 = vunpack.c.l.b16 %v679
        %v921 = vunpack.c.h.b16 %v679
        %v922 = vunpack.c.l.b16 %v680
        %v923 = vunpack.c.h.b16 %v680
        %v924 = vunpack.c.l.b16 %v681
        %v925 = vunpack.c.h.b16 %v681
        %v926 = vunpack.c.l.b16 %v682
        %v927 = vunpack.c.h.b16 %v682
        %v928 = vunpack.c.l.b16 %v683
        %v929 = vunpack.c.h.b16 %v683
        %v930 = vunpack.c.l.b16 %v684
        %v931 = vunpack.c.h.b16 %v684
        %v932 = vunpack.c.l.b16 %v685
        %v933 = vunpack.c.h.b16 %v685
        %v934 = vunpack.c.l.b16 %v686
        %v935 = vunpack.c.h.b16 %v686
        %v936 = vunpack.c.l.b16 %v687
        %v937 = vunpack.c.h.b16 %v687
        %v938 = vunpack.c.l.b16 %v688
        %v939 = vunpack.c.h.b16 %v688
        %v940 = vunpack.c.l.b16 %v689
        %v941 = vunpack.c.h.b16 %v689
        %v942 = vunpack.c.l.b16 %v690
        %v943 = vunpack.c.h.b16 %v690
        %v944 = vunpack.c.l.b16 %v691
        %v945 = vunpack.c.h.b16 %v691
        %v946 = vpack.c.b16 %v822, %v818
        %v947 = vpack.c.b16 %v823, %v819
        %v948 = vpack.c.b16 %v824, %v820
        %v949 = vpack.c.b16 %v825, %v821
        %v950 = vpack.c.b16 %v830, %v826
        %v951 = vpack.c.b16 %v831, %v827
        %v952 = vpack.c.b16 %v832, %v828
        %v953 = vpack.c.b16 %v833, %v829
        %v954 = vpack.c.b16 %v838, %v834
        %v955 = vpack.c.b16 %v839, %v835
        %v956 = vpack.c.b16 %v840, %v836
        %v957 = vpack.c.b16 %v841, %v837
        %v958 = vpack.c.b16 %v846, %v842
        %v959 = vpack.c.b16 %v847, %v843
        %v960 = vpack.c.b16 %v848, %v844
        %v961 = vpack.c.b16 %v849, %v845
        %v962 = vpack.c.b16 %v854, %v850
        %v963 = vpack.c.b16 %v855, %v851
        %v964 = vpack.c.b16 %v856, %v852
        %v965 = vpack.c.b16 %v857, %v853
        %v966 = vpack.c.b16 %v862, %v858
        %v967 = vpack.c.b16 %v863, %v859
        %v968 = vpack.c.b16 %v864, %v860
        %v969 = vpack.c.b16 %v865, %v861
        %v970 = vpack.c.b16 %v870, %v866
        %v971 = vpack.c.b16 %v871, %v867
        %v972 = vpack.c.b16 %v872, %v868
        %v973 = vpack.c.b16 %v873, %v869
        %v974 = vpack.c.b16 %v878, %v874
        %v975 = vpack.c.b16 %v879, %v875
        %v976 = vpack.c.b16 %v880, %v876
        %v977 = vpack.c.b16 %v881, %v877
        %v978 = vpack.c.b16 %v886, %v882
        %v979 = vpack.c.b16 %v887, %v883
        %v980 = vpack.c.b16 %v888, %v884
        %v981 = vpack.c.b16 %v889, %v885
        %v982 = vpack.c.b16 %v894, %v890
        %v983 = vpack.c.b16 %v895, %v891
        %v984 = vpack.c.b16 %v896, %v892
        %v985 = vpack.c.b16 %v897, %v893
        %v986 = vpack.c.b16 %v902, %v898
        %v987 = vpack.c.b16 %v903, %v899
        %v988 = vpack.c.b16 %v904, %v900
        %v989 = vpack.c.b16 %v905, %v901
        %v990 = vpack.c.b16 %v910, %v906
        %v991 = vpack.c.b16 %v911, %v907
        %v992 = vpack.c.b16 %v912, %v908
        %v993 = vpack.c.b16 %v913, %v909
        %v994 = vpack.c.b16 %v918, %v914
        %v995 = vpack.c.b16 %v919, %v915
        %v996 = vpack.c.b16 %v920, %v916
        %v997 = vpack.c.b16 %v921, %v917
        %v998 = vpack.c.b16 %v926, %v922
        %v999 = vpack.c.b16 %v927, %v923
        %v1000 = vpack.c.b16 %v928, %v924
        %v1001 = vpack.c.b16 %v929, %v925
        %v1002 = vpack.c.b16 %v934, %v930
        %v1003 = vpack.c.b16 %v935, %v931
        %v1004 = vpack.c.b16 %v936, %v932
        %v1005 = vpack.c.b16 %v937, %v933
        %v1006 = vpack.c.b16 %v942, %v938
        %v1007 = vpack.c.b16 %v943, %v939
        %v1008 = vpack.c.b16 %v944, %v940
        %v1009 = vpack.c.b16 %v945, %v941
        %1074 = vmatprep.subr.bf16.mxu0 %v947
        %1075 = vmatpush1.bf16.msra.mxu0 %v946
        %1076 = vmatprep.subr.bf16.mxu0 %v951
        %1077 = vmatpush1.bf16.msra.mxu0 %v950
        %1078 = vmatprep.subr.bf16.mxu0 %v955
        %1079 = vmatpush1.bf16.msra.mxu0 %v954
        %1080 = vmatprep.subr.bf16.mxu0 %v959
        %1081 = vmatpush1.bf16.msra.mxu0 %v958
        %1082 = vmatprep.subr.bf16.mxu0 %v963
        %1083 = vmatpush1.bf16.msra.mxu0 %v962
        %1084 = vmatprep.subr.bf16.mxu0 %v967
        %1085 = vmatpush1.bf16.msra.mxu0 %v966
        %1086 = vmatprep.subr.bf16.mxu0 %v971
        %1087 = vmatpush1.bf16.msra.mxu0 %v970
        %1088 = vmatprep.subr.bf16.mxu0 %v975
        %1089 = vmatpush1.bf16.msra.mxu0 %v974
        %1090 = vmatprep.subr.bf16.mxu0 %v979
        %1091 = vmatpush1.bf16.msra.mxu0 %v978
        %1092 = vmatprep.subr.bf16.mxu0 %v983
        %1093 = vmatpush1.bf16.msra.mxu0 %v982
        %1094 = vmatprep.subr.bf16.mxu0 %v987
        %1095 = vmatpush1.bf16.msra.mxu0 %v986
        %1096 = vmatprep.subr.bf16.mxu0 %v991
        %1097 = vmatpush1.bf16.msra.mxu0 %v990
        %1098 = vmatprep.subr.bf16.mxu0 %v995
        %1099 = vmatpush1.bf16.msra.mxu0 %v994
        %1100 = vmatprep.subr.bf16.mxu0 %v999
        %1101 = vmatpush1.bf16.msra.mxu0 %v998
        %1102 = vmatprep.subr.bf16.mxu0 %v1003
        %1103 = vmatpush1.bf16.msra.mxu0 %v1002
        %1104 = vmatprep.subr.bf16.mxu0 %v1007
        %1105 = vmatpush1.bf16.msra.mxu0 %v1006
        %1106 = vmatprep.mubr.bf16.mxu0 %v739
        %1107 = vmatmul.mubr.bf16.gmra.mrb[0].mxu0 %v738
        %v1108 = vpop.f32.mrb[0].mxu0
        %v1109 = vadd.f32 %v697, %v1108
        %v1110 = vpop.f32.mrb[0].mxu0
        %v1111 = vadd.f32 %v701, %v1110
        %v1112 = vpop.f32.mrb[0].mxu0
        %v1113 = vadd.f32 %v697, %v1112
        %v1114 = vpop.f32.mrb[0].mxu0
        %v1115 = vadd.f32 %v701, %v1114
        %1116 = vmatprep.mubr.bf16.mxu0 %v741
        %1117 = vmatmul.mubr.bf16.gmra.mrb[0].mxu0 %v740
        %v1118 = vpop.f32.mrb[0].mxu0
        %v1119 = vadd.f32 %v697, %v1118
        %v1120 = vpop.f32.mrb[0].mxu0
        %v1121 = vadd.f32 %v701, %v1120
        %v1122 = vpop.f32.mrb[0].mxu0
        %v1123 = vadd.f32 %v697, %v1122
        %v1124 = vpop.f32.mrb[0].mxu0
        %v1125 = vadd.f32 %v701, %v1124
        %1126 = vmatprep.mubr.bf16.mxu0 %v743
        %1127 = vmatmul.mubr.bf16.gmra.mrb[0].mxu0 %v742
        %v1128 = vpop.f32.mrb[0].mxu0
        %v1129 = vadd.f32 %v697, %v1128
        %v1130 = vpop.f32.mrb[0].mxu0
        %v1131 = vadd.f32 %v701, %v1130
        %v1132 = vpop.f32.mrb[0].mxu0
        %v1133 = vadd.f32 %v697, %v1132
        %v1134 = vpop.f32.mrb[0].mxu0
        %v1135 = vadd.f32 %v701, %v1134
        %1136 = vmatprep.mubr.bf16.mxu0 %v745
        %1137 = vmatmul.mubr.bf16.gmra.mrb[0].mxu0 %v744
        %v1138 = vpop.f32.mrb[0].mxu0
        %v1139 = vadd.f32 %v697, %v1138
        %v1140 = vpop.f32.mrb[0].mxu0
        %v1141 = vadd.f32 %v701, %v1140
        %v1142 = vpop.f32.mrb[0].mxu0
        %v1143 = vadd.f32 %v697, %v1142
        %v1144 = vpop.f32.mrb[0].mxu0
        %v1145 = vadd.f32 %v701, %v1144
        %1146 = vdwg.mxu0
        %1147 = vmatprep.subr.bf16.mxu0 %v949
        %1148 = vmatpush1.bf16.msra.mxu0 %v948
        %1149 = vmatprep.subr.bf16.mxu0 %v953
        %1150 = vmatpush1.bf16.msra.mxu0 %v952
        %1151 = vmatprep.subr.bf16.mxu0 %v957
        %1152 = vmatpush1.bf16.msra.mxu0 %v956
        %1153 = vmatprep.subr.bf16.mxu0 %v961
        %1154 = vmatpush1.bf16.msra.mxu0 %v960
        %1155 = vmatprep.subr.bf16.mxu0 %v965
        %1156 = vmatpush1.bf16.msra.mxu0 %v964
        %1157 = vmatprep.subr.bf16.mxu0 %v969
        %1158 = vmatpush1.bf16.msra.mxu0 %v968
        %1159 = vmatprep.subr.bf16.mxu0 %v973
        %1160 = vmatpush1.bf16.msra.mxu0 %v972
        %1161 = vmatprep.subr.bf16.mxu0 %v977
        %1162 = vmatpush1.bf16.msra.mxu0 %v976
        %1163 = vmatprep.subr.bf16.mxu0 %v981
        %1164 = vmatpush1.bf16.msra.mxu0 %v980
        %1165 = vmatprep.subr.bf16.mxu0 %v985
        %1166 = vmatpush1.bf16.msra.mxu0 %v984
        %1167 = vmatprep.subr.bf16.mxu0 %v989
        %1168 = vmatpush1.bf16.msra.mxu0 %v988
        %1169 = vmatprep.subr.bf16.mxu0 %v993
        %1170 = vmatpush1.bf16.msra.mxu0 %v992
        %1171 = vmatprep.subr.bf16.mxu0 %v997
        %1172 = vmatpush1.bf16.msra.mxu0 %v996
        %1173 = vmatprep.subr.bf16.mxu0 %v1001
        %1174 = vmatpush1.bf16.msra.mxu0 %v1000
        %1175 = vmatprep.subr.bf16.mxu0 %v1005
        %1176 = vmatpush1.bf16.msra.mxu0 %v1004
        %1177 = vmatprep.subr.bf16.mxu0 %v1009
        %1178 = vmatpush1.bf16.msra.mxu0 %v1008
        %1179 = vmatprep.mubr.bf16.mxu0 %v739
        %1180 = vmatmul.mubr.bf16.gmra.mrb[0].mxu0 %v738
        %v1181 = vpop.f32.mrb[0].mxu0
        %v1182 = vadd.f32 %v705, %v1181
        %v1183 = vpop.f32.mrb[0].mxu0
        %v1184 = vadd.f32 %v709, %v1183
        %v1185 = vpop.f32.mrb[0].mxu0
        %v1186 = vadd.f32 %v705, %v1185
        %v1187 = vpop.f32.mrb[0].mxu0
        %v1188 = vadd.f32 %v709, %v1187
        %1189 = vmatprep.mubr.bf16.mxu0 %v741
        %1190 = vmatmul.mubr.bf16.gmra.mrb[0].mxu0 %v740
        %v1191 = vpop.f32.mrb[0].mxu0
        %v1192 = vadd.f32 %v705, %v1191
        %v1193 = vpop.f32.mrb[0].mxu0
        %v1194 = vadd.f32 %v709, %v1193
        %v1195 = vpop.f32.mrb[0].mxu0
        %v1196 = vadd.f32 %v705, %v1195
        %v1197 = vpop.f32.mrb[0].mxu0
        %v1198 = vadd.f32 %v709, %v1197
        %1199 = vmatprep.mubr.bf16.mxu0 %v743
        %1200 = vmatmul.mubr.bf16.gmra.mrb[0].mxu0 %v742
        %v1201 = vpop.f32.mrb[0].mxu0
        %v1202 = vadd.f32 %v705, %v1201
        %v1203 = vpop.f32.mrb[0].mxu0
        %v1204 = vadd.f32 %v709, %v1203
        %v1205 = vpop.f32.mrb[0].mxu0
        %v1206 = vadd.f32 %v705, %v1205
        %v1207 = vpop.f32.mrb[0].mxu0
        %v1208 = vadd.f32 %v709, %v1207
        %1209 = vmatprep.mubr.bf16.mxu0 %v745
        %1210 = vmatmul.mubr.bf16.gmra.mrb[0].mxu0 %v744
        %v1211 = vpop.f32.mrb[0].mxu0
        %v1212 = vadd.f32 %v705, %v1211
        %v1213 = vpop.f32.mrb[0].mxu0
        %v1214 = vadd.f32 %v709, %v1213
        %v1215 = vpop.f32.mrb[0].mxu0
        %v1216 = vadd.f32 %v705, %v1215
        %v1217 = vpop.f32.mrb[0].mxu0
        %v1218 = vadd.f32 %v709, %v1217
        %1219 = vdwg.mxu0
        %v1220 = vmax.f32 %v1109, 0.0
        %v1221 = vmax.f32 %v1111, 0.0
        %v1222 = vmax.f32 %v1182, 0.0
        %v1223 = vmax.f32 %v1184, 0.0
        %v1224 = vmax.f32 %v1113, 0.0
        %v1225 = vmax.f32 %v1115, 0.0
        %v1226 = vmax.f32 %v1186, 0.0
        %v1227 = vmax.f32 %v1188, 0.0
        %v1228 = vmax.f32 %v1119, 0.0
        %v1229 = vmax.f32 %v1121, 0.0
        %v1230 = vmax.f32 %v1192, 0.0
        %v1231 = vmax.f32 %v1194, 0.0
        %v1232 = vmax.f32 %v1123, 0.0
        %v1233 = vmax.f32 %v1125, 0.0
        %v1234 = vmax.f32 %v1196, 0.0
        %v1235 = vmax.f32 %v1198, 0.0
        %v1236 = vmax.f32 %v1129, 0.0
        %v1237 = vmax.f32 %v1131, 0.0
        %v1238 = vmax.f32 %v1202, 0.0
        %v1239 = vmax.f32 %v1204, 0.0
        %v1240 = vmax.f32 %v1133, 0.0
        %v1241 = vmax.f32 %v1135, 0.0
        %v1242 = vmax.f32 %v1206, 0.0
        %v1243 = vmax.f32 %v1208, 0.0
        %v1244 = vmax.f32 %v1139, 0.0
        %v1245 = vmax.f32 %v1141, 0.0
        %v1246 = vmax.f32 %v1212, 0.0
        %v1247 = vmax.f32 %v1214, 0.0
        %v1248 = vmax.f32 %v1143, 0.0
        %v1249 = vmax.f32 %v1145, 0.0
        %v1250 = vmax.f32 %v1216, 0.0
        %v1251 = vmax.f32 %v1218, 0.0
        %v1252 = vld [vmem:[#allocation2] sm:$0xf]
        %v1253 = vadd.f32 %v1220, %v1224
        %v1254 = vadd.f32 %v1253, %v1228
        %v1255 = vadd.f32 %v1254, %v1232
        %v1256 = vadd.f32 %v1255, %v1236
        %v1257 = vadd.f32 %v1256, %v1240
        %v1258 = vadd.f32 %v1257, %v1244
        %v1259 = vadd.f32 %v1258, %v1248
        %v1260 = vrot.slane %v1259, 4
        %v1261 = vadd.f32 %v1259, %v1260
        %v1262 = vrot.slane %v1261, 2
        %v1263 = vadd.f32 %v1261, %v1262
        %v1264 = vrot.slane %v1263, 1
        %v1265 = vadd.f32 %v1263, %v1264
        %v1266 = vadd.f32 %v1221, %v1225
        %v1267 = vadd.f32 %v1266, %v1229
        %v1268 = vadd.f32 %v1267, %v1233
        %v1269 = vadd.f32 %v1268, %v1237
        %v1270 = vadd.f32 %v1269, %v1241
        %v1271 = vadd.f32 %v1270, %v1245
        %v1272 = vadd.f32 %v1271, %v1249
        %v1273 = vrot.slane %v1272, 4
        %v1274 = vadd.f32 %v1272, %v1273
        %v1275 = vrot.slane %v1274, 2
        %v1276 = vadd.f32 %v1274, %v1275
        %v1277 = vrot.slane %v1276, 1
        %v1278 = vadd.f32 %v1276, %v1277
        %v1279 = vadd.f32 %v1222, %v1226
        %v1280 = vadd.f32 %v1279, %v1230
        %v1281 = vadd.f32 %v1280, %v1234
        %v1282 = vadd.f32 %v1281, %v1238
        %v1283 = vadd.f32 %v1282, %v1242
        %v1284 = vadd.f32 %v1283, %v1246
        %v1285 = vadd.f32 %v1284, %v1250
        %v1286 = vrot.slane %v1285, 4
        %v1287 = vadd.f32 %v1285, %v1286
        %v1288 = vrot.slane %v1287, 2
        %v1289 = vadd.f32 %v1287, %v1288
        %v1290 = vrot.slane %v1289, 1
        %v1291 = vadd.f32 %v1289, %v1290
        %v1292 = vadd.f32 %v1223, %v1227
        %v1293 = vadd.f32 %v1292, %v1231
        %v1294 = vadd.f32 %v1293, %v1235
        %v1295 = vadd.f32 %v1294, %v1239
        %v1296 = vadd.f32 %v1295, %v1243
        %v1297 = vadd.f32 %v1296, %v1247
        %v1298 = vadd.f32 %v1297, %v1251
        %v1299 = vrot.slane %v1298, 4
        %v1300 = vadd.f32 %v1298, %v1299
        %v1301 = vrot.slane %v1300, 2
        %v1302 = vadd.f32 %v1300, %v1301
        %v1303 = vrot.slane %v1302, 1
        %v1304 = vadd.f32 %v1302, %v1303
        %v1309 = vcombine.low %v1265, %v1278
        %v1310 = vcombine.low %v1291, %v1304
        %v1312 = vunpack.c.l.s4 1966171168
        %v1313 = vunpack.c.0.s8 %v1312
        %v1314 = vlaneseq
        %v1315 = vshrl.u32 %v1314, 7
        %v1316 = vsub.s32 %v1313, %v1315
        %v1317 = vrot.slane %v1309, %v1316
        %v1319 = vunpack.c.l.s4 1966171168
        %v1320 = vunpack.c.0.s8 %v1319
        %v1321 = vlaneseq
        %v1322 = vshrl.u32 %v1321, 7
        %v1323 = vsub.s32 %v1320, %v1322
        %v1324 = vrot.slane %v1310, %v1323
        %v1325 = vcombine.low %v1317, %v1324
        %v1327 = vunpack.c.l.s4 1966171168
        %v1328 = vunpack.c.0.s8 %v1327
        %v1329 = vlaneseq
        %v1330 = vshrl.u32 %v1329, 7
        %v1331 = vsub.s32 %v1328, %v1330
        %v1332 = vrot.slane %v1325, %v1331
        %v1334 = vadd.f32 %v1252, %v1332
        %v1335 = vlaneseq
        %vm1336 = vcmp.ge.s32.totalorder %v1335, 0
        %vm1337 = vcmp.lt.s32.totalorder %v1335, 512
        %vm1338 = vmand %vm1336, %vm1337
        %1339 = vst.msk [vmem:[#allocation2] sm:$0xf] %vm1338, %v1334
        // Predicated region
        $region109: #{tpu_custom_call.1} parent=75 // pred_check
          %p1340 = pneg %p611
        $region110: #{tpu_custom_call.1} parent=75 // pred_check_branch
          %1342 = sbr.rel (%p1340) target = $region112
        $region111: #{tpu_custom_call.1} parent=75 // pred_region
          %v1343 = vld [vmem:[#allocation2] sm:$0xf]
          %v1344 = vmul.f32 %v1343, 0.015625
          %v1345 = vld [vmem:[#allocation9] sm:$0xff]
          %v1346 = vld [vmem:[#allocation9 + $0x8] sm:$0xff]
          %v1347 = vld [vmem:[#allocation9 + $0x10] sm:$0xff]
          %v1348 = vld [vmem:[#allocation9 + $0x18] sm:$0xff]
          %v1349 = vld [vmem:[#allocation9 + $0x20] sm:$0xff]
          %v1350 = vld [vmem:[#allocation9 + $0x28] sm:$0xff]
          %v1351 = vld [vmem:[#allocation9 + $0x30] sm:$0xff]
          %v1352 = vld [vmem:[#allocation9 + $0x38] sm:$0xff]
          %v1353 = vld [vmem:[#allocation9 + $0x40] sm:$0xff]
          %v1354 = vld [vmem:[#allocation9 + $0x48] sm:$0xff]
          %v1355 = vld [vmem:[#allocation9 + $0x50] sm:$0xff]
          %v1356 = vld [vmem:[#allocation9 + $0x58] sm:$0xff]
          %v1357 = vld [vmem:[#allocation9 + $0x60] sm:$0xff]
          %v1358 = vld [vmem:[#allocation9 + $0x68] sm:$0xff]
          %v1359 = vld [vmem:[#allocation9 + $0x70] sm:$0xff]
          %v1360 = vld [vmem:[#allocation9 + $0x78] sm:$0xff]
          %v1361 = vld [vmem:[#allocation9 + $0x80] sm:$0xff]
          %v1362 = vld [vmem:[#allocation9 + $0x88] sm:$0xff]
          %v1363 = vld [vmem:[#allocation9 + $0x90] sm:$0xff]
          %v1364 = vld [vmem:[#allocation9 + $0x98] sm:$0xff]
          %v1365 = vld [vmem:[#allocation9 + $0xa0] sm:$0xff]
          %v1366 = vld [vmem:[#allocation9 + $0xa8] sm:$0xff]
          %v1367 = vld [vmem:[#allocation9 + $0xb0] sm:$0xff]
          %v1368 = vld [vmem:[#allocation9 + $0xb8] sm:$0xff]
          %v1369 = vld [vmem:[#allocation9 + $0xc0] sm:$0xff]
          %v1370 = vld [vmem:[#allocation9 + $0xc8] sm:$0xff]
          %v1371 = vld [vmem:[#allocation9 + $0xd0] sm:$0xff]
          %v1372 = vld [vmem:[#allocation9 + $0xd8] sm:$0xff]
          %v1373 = vld [vmem:[#allocation9 + $0xe0] sm:$0xff]
          %v1374 = vld [vmem:[#allocation9 + $0xe8] sm:$0xff]
          %v1375 = vld [vmem:[#allocation9 + $0xf0] sm:$0xff]
          %v1376 = vld [vmem:[#allocation9 + $0xf8] sm:$0xff]
          %v1377 = vld [vmem:[#allocation9 + $0x100] sm:$0xff]
          %v1378 = vld [vmem:[#allocation9 + $0x108] sm:$0xff]
          %v1379 = vld [vmem:[#allocation9 + $0x110] sm:$0xff]
          %v1380 = vld [vmem:[#allocation9 + $0x118] sm:$0xff]
          %v1381 = vld [vmem:[#allocation9 + $0x120] sm:$0xff]
          %v1382 = vld [vmem:[#allocation9 + $0x128] sm:$0xff]
          %v1383 = vld [vmem:[#allocation9 + $0x130] sm:$0xff]
          %v1384 = vld [vmem:[#allocation9 + $0x138] sm:$0xff]
          %v1385 = vld [vmem:[#allocation9 + $0x140] sm:$0xff]
          %v1386 = vld [vmem:[#allocation9 + $0x148] sm:$0xff]
          %v1387 = vld [vmem:[#allocation9 + $0x150] sm:$0xff]
          %v1388 = vld [vmem:[#allocation9 + $0x158] sm:$0xff]
          %v1389 = vld [vmem:[#allocation9 + $0x160] sm:$0xff]
          %v1390 = vld [vmem:[#allocation9 + $0x168] sm:$0xff]
          %v1391 = vld [vmem:[#allocation9 + $0x170] sm:$0xff]
          %v1392 = vld [vmem:[#allocation9 + $0x178] sm:$0xff]
          %v1393 = vld [vmem:[#allocation9 + $0x180] sm:$0xff]
          %v1394 = vld [vmem:[#allocation9 + $0x188] sm:$0xff]
          %v1395 = vld [vmem:[#allocation9 + $0x190] sm:$0xff]
          %v1396 = vld [vmem:[#allocation9 + $0x198] sm:$0xff]
          %v1397 = vld [vmem:[#allocation9 + $0x1a0] sm:$0xff]
          %v1398 = vld [vmem:[#allocation9 + $0x1a8] sm:$0xff]
          %v1399 = vld [vmem:[#allocation9 + $0x1b0] sm:$0xff]
          %v1400 = vld [vmem:[#allocation9 + $0x1b8] sm:$0xff]
          %v1401 = vld [vmem:[#allocation9 + $0x1c0] sm:$0xff]
          %v1402 = vld [vmem:[#allocation9 + $0x1c8] sm:$0xff]
          %v1403 = vld [vmem:[#allocation9 + $0x1d0] sm:$0xff]
          %v1404 = vld [vmem:[#allocation9 + $0x1d8] sm:$0xff]
          %v1405 = vld [vmem:[#allocation9 + $0x1e0] sm:$0xff]
          %v1406 = vld [vmem:[#allocation9 + $0x1e8] sm:$0xff]
          %v1407 = vld [vmem:[#allocation9 + $0x1f0] sm:$0xff]
          %v1408 = vld [vmem:[#allocation9 + $0x1f8] sm:$0xff]
          %v1409 = vld [vmem:[#allocation9 + $0x200] sm:$0xff]
          %v1410 = vld [vmem:[#allocation9 + $0x208] sm:$0xff]
          %v1411 = vld [vmem:[#allocation9 + $0x210] sm:$0xff]
          %v1412 = vld [vmem:[#allocation9 + $0x218] sm:$0xff]
          %v1413 = vld [vmem:[#allocation9 + $0x220] sm:$0xff]
          %v1414 = vld [vmem:[#allocation9 + $0x228] sm:$0xff]
          %v1415 = vld [vmem:[#allocation9 + $0x230] sm:$0xff]
          %v1416 = vld [vmem:[#allocation9 + $0x238] sm:$0xff]
          %v1417 = vld [vmem:[#allocation9 + $0x240] sm:$0xff]
          %v1418 = vld [vmem:[#allocation9 + $0x248] sm:$0xff]
          %v1419 = vld [vmem:[#allocation9 + $0x250] sm:$0xff]
          %v1420 = vld [vmem:[#allocation9 + $0x258] sm:$0xff]
          %v1421 = vld [vmem:[#allocation9 + $0x260] sm:$0xff]
          %v1422 = vld [vmem:[#allocation9 + $0x268] sm:$0xff]
          %v1423 = vld [vmem:[#allocation9 + $0x270] sm:$0xff]
          %v1424 = vld [vmem:[#allocation9 + $0x278] sm:$0xff]
          %v1425 = vld [vmem:[#allocation9 + $0x280] sm:$0xff]
          %v1426 = vld [vmem:[#allocation9 + $0x288] sm:$0xff]
          %v1427 = vld [vmem:[#allocation9 + $0x290] sm:$0xff]
          %v1428 = vld [vmem:[#allocation9 + $0x298] sm:$0xff]
          %v1429 = vld [vmem:[#allocation9 + $0x2a0] sm:$0xff]
          %v1430 = vld [vmem:[#allocation9 + $0x2a8] sm:$0xff]
          %v1431 = vld [vmem:[#allocation9 + $0x2b0] sm:$0xff]
          %v1432 = vld [vmem:[#allocation9 + $0x2b8] sm:$0xff]
          %v1433 = vld [vmem:[#allocation9 + $0x2c0] sm:$0xff]
          %v1434 = vld [vmem:[#allocation9 + $0x2c8] sm:$0xff]
          %v1435 = vld [vmem:[#allocation9 + $0x2d0] sm:$0xff]
          %v1436 = vld [vmem:[#allocation9 + $0x2d8] sm:$0xff]
          %v1437 = vld [vmem:[#allocation9 + $0x2e0] sm:$0xff]
          %v1438 = vld [vmem:[#allocation9 + $0x2e8] sm:$0xff]
          %v1439 = vld [vmem:[#allocation9 + $0x2f0] sm:$0xff]
          %v1440 = vld [vmem:[#allocation9 + $0x2f8] sm:$0xff]
          %v1441 = vld [vmem:[#allocation9 + $0x300] sm:$0xff]
          %v1442 = vld [vmem:[#allocation9 + $0x308] sm:$0xff]
          %v1443 = vld [vmem:[#allocation9 + $0x310] sm:$0xff]
          %v1444 = vld [vmem:[#allocation9 + $0x318] sm:$0xff]
          %v1445 = vld [vmem:[#allocation9 + $0x320] sm:$0xff]
          %v1446 = vld [vmem:[#allocation9 + $0x328] sm:$0xff]
          %v1447 = vld [vmem:[#allocation9 + $0x330] sm:$0xff]
          %v1448 = vld [vmem:[#allocation9 + $0x338] sm:$0xff]
          %v1449 = vld [vmem:[#allocation9 + $0x340] sm:$0xff]
          %v1450 = vld [vmem:[#allocation9 + $0x348] sm:$0xff]
          %v1451 = vld [vmem:[#allocation9 + $0x350] sm:$0xff]
          %v1452 = vld [vmem:[#allocation9 + $0x358] sm:$0xff]
          %v1453 = vld [vmem:[#allocation9 + $0x360] sm:$0xff]
          %v1454 = vld [vmem:[#allocation9 + $0x368] sm:$0xff]
          %v1455 = vld [vmem:[#allocation9 + $0x370] sm:$0xff]
          %v1456 = vld [vmem:[#allocation9 + $0x378] sm:$0xff]
          %v1457 = vld [vmem:[#allocation9 + $0x380] sm:$0xff]
          %v1458 = vld [vmem:[#allocation9 + $0x388] sm:$0xff]
          %v1459 = vld [vmem:[#allocation9 + $0x390] sm:$0xff]
          %v1460 = vld [vmem:[#allocation9 + $0x398] sm:$0xff]
          %v1461 = vld [vmem:[#allocation9 + $0x3a0] sm:$0xff]
          %v1462 = vld [vmem:[#allocation9 + $0x3a8] sm:$0xff]
          %v1463 = vld [vmem:[#allocation9 + $0x3b0] sm:$0xff]
          %v1464 = vld [vmem:[#allocation9 + $0x3b8] sm:$0xff]
          %v1465 = vld [vmem:[#allocation9 + $0x3c0] sm:$0xff]
          %v1466 = vld [vmem:[#allocation9 + $0x3c8] sm:$0xff]
          %v1467 = vld [vmem:[#allocation9 + $0x3d0] sm:$0xff]
          %v1468 = vld [vmem:[#allocation9 + $0x3d8] sm:$0xff]
          %v1469 = vld [vmem:[#allocation9 + $0x3e0] sm:$0xff]
          %v1470 = vld [vmem:[#allocation9 + $0x3e8] sm:$0xff]
          %v1471 = vld [vmem:[#allocation9 + $0x3f0] sm:$0xff]
          %v1472 = vld [vmem:[#allocation9 + $0x3f8] sm:$0xff]
          %v1473 = vld [vmem:[%s5] sm:$0x3]
          %v1475 = vlaneseq
          %v1476 = vshrl.u32 %v1475, 7
          %v1477 = vsub.s32 0, %v1476
          %v1478 = vrot.slane %v1344, %v1477
          %v1479 = vlaneseq
          %v1480 = vshrl.u32 %v1479, 7
          %v1481 = vsub.s32 1, %v1480
          %v1482 = vrot.slane %v1344, %v1481
          %v1483 = vlaneseq
          %v1484 = vshrl.u32 %v1483, 7
          %v1485 = vsub.s32 2, %v1484
          %v1486 = vrot.slane %v1344, %v1485
          %v1487 = vlaneseq
          %v1488 = vshrl.u32 %v1487, 7
          %v1489 = vsub.s32 3, %v1488
          %v1490 = vrot.slane %v1344, %v1489
          %v1496 = vlaneseq
          %v1497 = vshrl.u32 %v1496, 7
          %v1498 = vsub.s32 0, %v1497
          %v1499 = vrot.slane %v1473, %v1498
          %v1500 = vlaneseq
          %v1501 = vshrl.u32 %v1500, 7
          %v1502 = vsub.s32 1, %v1501
          %v1503 = vrot.slane %v1473, %v1502
          %1506 = vmatprep.subr.mxu0 %v1346
          %1507 = vmatpush1.msra.mxu0 %v1345
          %1508 = vmatprep.subr.mxu0 %v1348
          %1509 = vmatpush1.msra.mxu0 %v1347
          %1510 = vmatprep.subr.mxu0 %v1350
          %1511 = vmatpush1.msra.mxu0 %v1349
          %1512 = vmatprep.subr.mxu0 %v1352
          %1513 = vmatpush1.msra.mxu0 %v1351
          %1514 = vmatprep.subr.mxu0 %v1354
          %1515 = vmatpush1.msra.mxu0 %v1353
          %1516 = vmatprep.subr.mxu0 %v1356
          %1517 = vmatpush1.msra.mxu0 %v1355
          %1518 = vmatprep.subr.mxu0 %v1358
          %1519 = vmatpush1.msra.mxu0 %v1357
          %1520 = vmatprep.subr.mxu0 %v1360
          %1521 = vmatpush1.msra.mxu0 %v1359
          %1522 = vmatprep.subr.mxu0 %v1362
          %1523 = vmatpush1.msra.mxu0 %v1361
          %1524 = vmatprep.subr.mxu0 %v1364
          %1525 = vmatpush1.msra.mxu0 %v1363
          %1526 = vmatprep.subr.mxu0 %v1366
          %1527 = vmatpush1.msra.mxu0 %v1365
          %1528 = vmatprep.subr.mxu0 %v1368
          %1529 = vmatpush1.msra.mxu0 %v1367
          %1530 = vmatprep.subr.mxu0 %v1370
          %1531 = vmatpush1.msra.mxu0 %v1369
          %1532 = vmatprep.subr.mxu0 %v1372
          %1533 = vmatpush1.msra.mxu0 %v1371
          %1534 = vmatprep.subr.mxu0 %v1374
          %1535 = vmatpush1.msra.mxu0 %v1373
          %1536 = vmatprep.subr.mxu0 %v1376
          %1537 = vmatpush1.msra.mxu0 %v1375
          %1538 = vmatprep.subr.mxu0 %v1378
          %1539 = vmatpush1.msra.mxu0 %v1377
          %1540 = vmatprep.subr.mxu0 %v1380
          %1541 = vmatpush1.msra.mxu0 %v1379
          %1542 = vmatprep.subr.mxu0 %v1382
          %1543 = vmatpush1.msra.mxu0 %v1381
          %1544 = vmatprep.subr.mxu0 %v1384
          %1545 = vmatpush1.msra.mxu0 %v1383
          %1546 = vmatprep.subr.mxu0 %v1386
          %1547 = vmatpush1.msra.mxu0 %v1385
          %1548 = vmatprep.subr.mxu0 %v1388
          %1549 = vmatpush1.msra.mxu0 %v1387
          %1550 = vmatprep.subr.mxu0 %v1390
          %1551 = vmatpush1.msra.mxu0 %v1389
          %1552 = vmatprep.subr.mxu0 %v1392
          %1553 = vmatpush1.msra.mxu0 %v1391
          %1554 = vmatprep.subr.mxu0 %v1394
          %1555 = vmatpush1.msra.mxu0 %v1393
          %1556 = vmatprep.subr.mxu0 %v1396
          %1557 = vmatpush1.msra.mxu0 %v1395
          %1558 = vmatprep.subr.mxu0 %v1398
          %1559 = vmatpush1.msra.mxu0 %v1397
          %1560 = vmatprep.subr.mxu0 %v1400
          %1561 = vmatpush1.msra.mxu0 %v1399
          %1562 = vmatprep.subr.mxu0 %v1402
          %1563 = vmatpush1.msra.mxu0 %v1401
          %1564 = vmatprep.subr.mxu0 %v1404
          %1565 = vmatpush1.msra.mxu0 %v1403
          %1566 = vmatprep.subr.mxu0 %v1406
          %1567 = vmatpush1.msra.mxu0 %v1405
          %1568 = vmatprep.subr.mxu0 %v1408
          %1569 = vmatpush1.msra.mxu0 %v1407
          %1570 = vmatprep.mubr.f32.mxu0 %v1482
          %1571 = vmatmul.mubr.f32.gmra.mrb[0].mxu0 %v1478
          %v1572 = vpop.f32.mrb[0].mxu0
          %v1573 = vadd.f32 %v1499, %v1572
          %v1574 = vpop.f32.mrb[0].mxu0
          %v1575 = vadd.f32 %v1503, %v1574
          %1576 = vdwg.mxu0
          %1577 = vmatprep.subr.mxu0 %v1410
          %1578 = vmatpush1.msra.mxu0 %v1409
          %1579 = vmatprep.subr.mxu0 %v1412
          %1580 = vmatpush1.msra.mxu0 %v1411
          %1581 = vmatprep.subr.mxu0 %v1414
          %1582 = vmatpush1.msra.mxu0 %v1413
          %1583 = vmatprep.subr.mxu0 %v1416
          %1584 = vmatpush1.msra.mxu0 %v1415
          %1585 = vmatprep.subr.mxu0 %v1418
          %1586 = vmatpush1.msra.mxu0 %v1417
          %1587 = vmatprep.subr.mxu0 %v1420
          %1588 = vmatpush1.msra.mxu0 %v1419
          %1589 = vmatprep.subr.mxu0 %v1422
          %1590 = vmatpush1.msra.mxu0 %v1421
          %1591 = vmatprep.subr.mxu0 %v1424
          %1592 = vmatpush1.msra.mxu0 %v1423
          %1593 = vmatprep.subr.mxu0 %v1426
          %1594 = vmatpush1.msra.mxu0 %v1425
          %1595 = vmatprep.subr.mxu0 %v1428
          %1596 = vmatpush1.msra.mxu0 %v1427
          %1597 = vmatprep.subr.mxu0 %v1430
          %1598 = vmatpush1.msra.mxu0 %v1429
          %1599 = vmatprep.subr.mxu0 %v1432
          %1600 = vmatpush1.msra.mxu0 %v1431
          %1601 = vmatprep.subr.mxu0 %v1434
          %1602 = vmatpush1.msra.mxu0 %v1433
          %1603 = vmatprep.subr.mxu0 %v1436
          %1604 = vmatpush1.msra.mxu0 %v1435
          %1605 = vmatprep.subr.mxu0 %v1438
          %1606 = vmatpush1.msra.mxu0 %v1437
          %1607 = vmatprep.subr.mxu0 %v1440
          %1608 = vmatpush1.msra.mxu0 %v1439
          %1609 = vmatprep.subr.mxu0 %v1442
          %1610 = vmatpush1.msra.mxu0 %v1441
          %1611 = vmatprep.subr.mxu0 %v1444
          %1612 = vmatpush1.msra.mxu0 %v1443
          %1613 = vmatprep.subr.mxu0 %v1446
          %1614 = vmatpush1.msra.mxu0 %v1445
          %1615 = vmatprep.subr.mxu0 %v1448
          %1616 = vmatpush1.msra.mxu0 %v1447
          %1617 = vmatprep.subr.mxu0 %v1450
          %1618 = vmatpush1.msra.mxu0 %v1449
          %1619 = vmatprep.subr.mxu0 %v1452
          %1620 = vmatpush1.msra.mxu0 %v1451
          %1621 = vmatprep.subr.mxu0 %v1454
          %1622 = vmatpush1.msra.mxu0 %v1453
          %1623 = vmatprep.subr.mxu0 %v1456
          %1624 = vmatpush1.msra.mxu0 %v1455
          %1625 = vmatprep.subr.mxu0 %v1458
          %1626 = vmatpush1.msra.mxu0 %v1457
          %1627 = vmatprep.subr.mxu0 %v1460
          %1628 = vmatpush1.msra.mxu0 %v1459
          %1629 = vmatprep.subr.mxu0 %v1462
          %1630 = vmatpush1.msra.mxu0 %v1461
          %1631 = vmatprep.subr.mxu0 %v1464
          %1632 = vmatpush1.msra.mxu0 %v1463
          %1633 = vmatprep.subr.mxu0 %v1466
          %1634 = vmatpush1.msra.mxu0 %v1465
          %1635 = vmatprep.subr.mxu0 %v1468
          %1636 = vmatpush1.msra.mxu0 %v1467
          %1637 = vmatprep.subr.mxu0 %v1470
          %1638 = vmatpush1.msra.mxu0 %v1469
          %1639 = vmatprep.subr.mxu0 %v1472
          %1640 = vmatpush1.msra.mxu0 %v1471
          %1641 = vmatprep.mubr.f32.mxu0 %v1490
          %1642 = vmatmul.mubr.f32.gmra.mrb[0].mxu0 %v1486
          %v1643 = vpop.f32.mrb[0].mxu0
          %v1644 = vadd.f32 %v1573, %v1643
          %v1645 = vpop.f32.mrb[0].mxu0
          %v1646 = vadd.f32 %v1575, %v1645
          %1647 = vdwg.mxu0
          %v1648 = vld [vmem:[%s544] sm:$0x3f]
          %v1649 = vld [vmem:[#allocation10] sm:$0xff]
          %v1650 = vld [vmem:[#allocation10 + $0x8] sm:$0xff]
          %v1651 = vld [vmem:[#allocation10 + $0x10] sm:$0xff]
          %v1652 = vld [vmem:[#allocation10 + $0x18] sm:$0xff]
          %v1653 = vld [vmem:[#allocation10 + $0x20] sm:$0xff]
          %v1654 = vld [vmem:[#allocation10 + $0x28] sm:$0xff]
          %v1655 = vld [vmem:[#allocation10 + $0x30] sm:$0xff]
          %v1656 = vld [vmem:[#allocation10 + $0x38] sm:$0xff]
          %v1657 = vld [vmem:[#allocation10 + $0x40] sm:$0xff]
          %v1658 = vld [vmem:[#allocation10 + $0x48] sm:$0xff]
          %v1659 = vld [vmem:[#allocation10 + $0x50] sm:$0xff]
          %v1660 = vld [vmem:[#allocation10 + $0x58] sm:$0xff]
          %v1661 = vld [vmem:[#allocation10 + $0x60] sm:$0xff]
          %v1662 = vld [vmem:[#allocation10 + $0x68] sm:$0xff]
          %v1663 = vld [vmem:[#allocation10 + $0x70] sm:$0xff]
          %v1664 = vld [vmem:[#allocation10 + $0x78] sm:$0xff]
          %v1665 = vld [vmem:[#allocation10 + $0x80] sm:$0xff]
          %v1666 = vld [vmem:[#allocation10 + $0x88] sm:$0xff]
          %v1667 = vld [vmem:[#allocation10 + $0x90] sm:$0xff]
          %v1668 = vld [vmem:[#allocation10 + $0x98] sm:$0xff]
          %v1669 = vld [vmem:[#allocation10 + $0xa0] sm:$0xff]
          %v1670 = vld [vmem:[#allocation10 + $0xa8] sm:$0xff]
          %v1671 = vld [vmem:[#allocation10 + $0xb0] sm:$0xff]
          %v1672 = vld [vmem:[#allocation10 + $0xb8] sm:$0xff]
          %v1673 = vld [vmem:[#allocation10 + $0xc0] sm:$0xff]
          %v1674 = vld [vmem:[#allocation10 + $0xc8] sm:$0xff]
          %v1675 = vld [vmem:[#allocation10 + $0xd0] sm:$0xff]
          %v1676 = vld [vmem:[#allocation10 + $0xd8] sm:$0xff]
          %v1677 = vld [vmem:[#allocation10 + $0xe0] sm:$0xff]
          %v1678 = vld [vmem:[#allocation10 + $0xe8] sm:$0xff]
          %v1679 = vld [vmem:[#allocation10 + $0xf0] sm:$0xff]
          %v1680 = vld [vmem:[#allocation10 + $0xf8] sm:$0xff]
          %v1681 = vld [vmem:[#allocation10 + $0x100] sm:$0xff]
          %v1682 = vld [vmem:[#allocation10 + $0x108] sm:$0xff]
          %v1683 = vld [vmem:[#allocation10 + $0x110] sm:$0xff]
          %v1684 = vld [vmem:[#allocation10 + $0x118] sm:$0xff]
          %v1685 = vld [vmem:[#allocation10 + $0x120] sm:$0xff]
          %v1686 = vld [vmem:[#allocation10 + $0x128] sm:$0xff]
          %v1687 = vld [vmem:[#allocation10 + $0x130] sm:$0xff]
          %v1688 = vld [vmem:[#allocation10 + $0x138] sm:$0xff]
          %v1689 = vld [vmem:[#allocation10 + $0x140] sm:$0xff]
          %v1690 = vld [vmem:[#allocation10 + $0x148] sm:$0xff]
          %v1691 = vld [vmem:[#allocation10 + $0x150] sm:$0xff]
          %v1692 = vld [vmem:[#allocation10 + $0x158] sm:$0xff]
          %v1693 = vld [vmem:[#allocation10 + $0x160] sm:$0xff]
          %v1694 = vld [vmem:[#allocation10 + $0x168] sm:$0xff]
          %v1695 = vld [vmem:[#allocation10 + $0x170] sm:$0xff]
          %v1696 = vld [vmem:[#allocation10 + $0x178] sm:$0xff]
          %v1697 = vld [vmem:[#allocation10 + $0x180] sm:$0xff]
          %v1698 = vld [vmem:[#allocation10 + $0x188] sm:$0xff]
          %v1699 = vld [vmem:[#allocation10 + $0x190] sm:$0xff]
          %v1700 = vld [vmem:[#allocation10 + $0x198] sm:$0xff]
          %v1701 = vld [vmem:[#allocation10 + $0x1a0] sm:$0xff]
          %v1702 = vld [vmem:[#allocation10 + $0x1a8] sm:$0xff]
          %v1703 = vld [vmem:[#allocation10 + $0x1b0] sm:$0xff]
          %v1704 = vld [vmem:[#allocation10 + $0x1b8] sm:$0xff]
          %v1705 = vld [vmem:[#allocation10 + $0x1c0] sm:$0xff]
          %v1706 = vld [vmem:[#allocation10 + $0x1c8] sm:$0xff]
          %v1707 = vld [vmem:[#allocation10 + $0x1d0] sm:$0xff]
          %v1708 = vld [vmem:[#allocation10 + $0x1d8] sm:$0xff]
          %v1709 = vld [vmem:[#allocation10 + $0x1e0] sm:$0xff]
          %v1710 = vld [vmem:[#allocation10 + $0x1e8] sm:$0xff]
          %v1711 = vld [vmem:[#allocation10 + $0x1f0] sm:$0xff]
          %v1712 = vld [vmem:[#allocation10 + $0x1f8] sm:$0xff]
          %v1713 = vld [vmem:[#allocation10 + $0x200] sm:$0xff]
          %v1714 = vld [vmem:[#allocation10 + $0x208] sm:$0xff]
          %v1715 = vld [vmem:[#allocation10 + $0x210] sm:$0xff]
          %v1716 = vld [vmem:[#allocation10 + $0x218] sm:$0xff]
          %v1717 = vld [vmem:[#allocation10 + $0x220] sm:$0xff]
          %v1718 = vld [vmem:[#allocation10 + $0x228] sm:$0xff]
          %v1719 = vld [vmem:[#allocation10 + $0x230] sm:$0xff]
          %v1720 = vld [vmem:[#allocation10 + $0x238] sm:$0xff]
          %v1721 = vld [vmem:[#allocation10 + $0x240] sm:$0xff]
          %v1722 = vld [vmem:[#allocation10 + $0x248] sm:$0xff]
          %v1723 = vld [vmem:[#allocation10 + $0x250] sm:$0xff]
          %v1724 = vld [vmem:[#allocation10 + $0x258] sm:$0xff]
          %v1725 = vld [vmem:[#allocation10 + $0x260] sm:$0xff]
          %v1726 = vld [vmem:[#allocation10 + $0x268] sm:$0xff]
          %v1727 = vld [vmem:[#allocation10 + $0x270] sm:$0xff]
          %v1728 = vld [vmem:[#allocation10 + $0x278] sm:$0xff]
          %v1729 = vld [vmem:[#allocation10 + $0x280] sm:$0xff]
          %v1730 = vld [vmem:[#allocation10 + $0x288] sm:$0xff]
          %v1731 = vld [vmem:[#allocation10 + $0x290] sm:$0xff]
          %v1732 = vld [vmem:[#allocation10 + $0x298] sm:$0xff]
          %v1733 = vld [vmem:[#allocation10 + $0x2a0] sm:$0xff]
          %v1734 = vld [vmem:[#allocation10 + $0x2a8] sm:$0xff]
          %v1735 = vld [vmem:[#allocation10 + $0x2b0] sm:$0xff]
          %v1736 = vld [vmem:[#allocation10 + $0x2b8] sm:$0xff]
          %v1737 = vld [vmem:[#allocation10 + $0x2c0] sm:$0xff]
          %v1738 = vld [vmem:[#allocation10 + $0x2c8] sm:$0xff]
          %v1739 = vld [vmem:[#allocation10 + $0x2d0] sm:$0xff]
          %v1740 = vld [vmem:[#allocation10 + $0x2d8] sm:$0xff]
          %v1741 = vld [vmem:[#allocation10 + $0x2e0] sm:$0xff]
          %v1742 = vld [vmem:[#allocation10 + $0x2e8] sm:$0xff]
          %v1743 = vld [vmem:[#allocation10 + $0x2f0] sm:$0xff]
          %v1744 = vld [vmem:[#allocation10 + $0x2f8] sm:$0xff]
          %v1745 = vld [vmem:[#allocation10 + $0x300] sm:$0xff]
          %v1746 = vld [vmem:[#allocation10 + $0x308] sm:$0xff]
          %v1747 = vld [vmem:[#allocation10 + $0x310] sm:$0xff]
          %v1748 = vld [vmem:[#allocation10 + $0x318] sm:$0xff]
          %v1749 = vld [vmem:[#allocation10 + $0x320] sm:$0xff]
          %v1750 = vld [vmem:[#allocation10 + $0x328] sm:$0xff]
          %v1751 = vld [vmem:[#allocation10 + $0x330] sm:$0xff]
          %v1752 = vld [vmem:[#allocation10 + $0x338] sm:$0xff]
          %v1753 = vld [vmem:[#allocation10 + $0x340] sm:$0xff]
          %v1754 = vld [vmem:[#allocation10 + $0x348] sm:$0xff]
          %v1755 = vld [vmem:[#allocation10 + $0x350] sm:$0xff]
          %v1756 = vld [vmem:[#allocation10 + $0x358] sm:$0xff]
          %v1757 = vld [vmem:[#allocation10 + $0x360] sm:$0xff]
          %v1758 = vld [vmem:[#allocation10 + $0x368] sm:$0xff]
          %v1759 = vld [vmem:[#allocation10 + $0x370] sm:$0xff]
          %v1760 = vld [vmem:[#allocation10 + $0x378] sm:$0xff]
          %v1761 = vld [vmem:[#allocation10 + $0x380] sm:$0xff]
          %v1762 = vld [vmem:[#allocation10 + $0x388] sm:$0xff]
          %v1763 = vld [vmem:[#allocation10 + $0x390] sm:$0xff]
          %v1764 = vld [vmem:[#allocation10 + $0x398] sm:$0xff]
          %v1765 = vld [vmem:[#allocation10 + $0x3a0] sm:$0xff]
          %v1766 = vld [vmem:[#allocation10 + $0x3a8] sm:$0xff]
          %v1767 = vld [vmem:[#allocation10 + $0x3b0] sm:$0xff]
          %v1768 = vld [vmem:[#allocation10 + $0x3b8] sm:$0xff]
          %v1769 = vld [vmem:[#allocation10 + $0x3c0] sm:$0xff]
          %v1770 = vld [vmem:[#allocation10 + $0x3c8] sm:$0xff]
          %v1771 = vld [vmem:[#allocation10 + $0x3d0] sm:$0xff]
          %v1772 = vld [vmem:[#allocation10 + $0x3d8] sm:$0xff]
          %v1773 = vld [vmem:[#allocation10 + $0x3e0] sm:$0xff]
          %v1774 = vld [vmem:[#allocation10 + $0x3e8] sm:$0xff]
          %v1775 = vld [vmem:[#allocation10 + $0x3f0] sm:$0xff]
          %v1776 = vld [vmem:[#allocation10 + $0x3f8] sm:$0xff]
          %v1777 = vld [vmem:[#allocation10 + $0x400] sm:$0xff]
          %v1778 = vld [vmem:[#allocation10 + $0x408] sm:$0xff]
          %v1779 = vld [vmem:[#allocation10 + $0x410] sm:$0xff]
          %v1780 = vld [vmem:[#allocation10 + $0x418] sm:$0xff]
          %v1781 = vld [vmem:[#allocation10 + $0x420] sm:$0xff]
          %v1782 = vld [vmem:[#allocation10 + $0x428] sm:$0xff]
          %v1783 = vld [vmem:[#allocation10 + $0x430] sm:$0xff]
          %v1784 = vld [vmem:[#allocation10 + $0x438] sm:$0xff]
          %v1785 = vld [vmem:[#allocation10 + $0x440] sm:$0xff]
          %v1786 = vld [vmem:[#allocation10 + $0x448] sm:$0xff]
          %v1787 = vld [vmem:[#allocation10 + $0x450] sm:$0xff]
          %v1788 = vld [vmem:[#allocation10 + $0x458] sm:$0xff]
          %v1789 = vld [vmem:[#allocation10 + $0x460] sm:$0xff]
          %v1790 = vld [vmem:[#allocation10 + $0x468] sm:$0xff]
          %v1791 = vld [vmem:[#allocation10 + $0x470] sm:$0xff]
          %v1792 = vld [vmem:[#allocation10 + $0x478] sm:$0xff]
          %v1793 = vld [vmem:[#allocation10 + $0x480] sm:$0xff]
          %v1794 = vld [vmem:[#allocation10 + $0x488] sm:$0xff]
          %v1795 = vld [vmem:[#allocation10 + $0x490] sm:$0xff]
          %v1796 = vld [vmem:[#allocation10 + $0x498] sm:$0xff]
          %v1797 = vld [vmem:[#allocation10 + $0x4a0] sm:$0xff]
          %v1798 = vld [vmem:[#allocation10 + $0x4a8] sm:$0xff]
          %v1799 = vld [vmem:[#allocation10 + $0x4b0] sm:$0xff]
          %v1800 = vld [vmem:[#allocation10 + $0x4b8] sm:$0xff]
          %v1801 = vld [vmem:[#allocation10 + $0x4c0] sm:$0xff]
          %v1802 = vld [vmem:[#allocation10 + $0x4c8] sm:$0xff]
          %v1803 = vld [vmem:[#allocation10 + $0x4d0] sm:$0xff]
          %v1804 = vld [vmem:[#allocation10 + $0x4d8] sm:$0xff]
          %v1805 = vld [vmem:[#allocation10 + $0x4e0] sm:$0xff]
          %v1806 = vld [vmem:[#allocation10 + $0x4e8] sm:$0xff]
          %v1807 = vld [vmem:[#allocation10 + $0x4f0] sm:$0xff]
          %v1808 = vld [vmem:[#allocation10 + $0x4f8] sm:$0xff]
          %v1809 = vld [vmem:[#allocation10 + $0x500] sm:$0xff]
          %v1810 = vld [vmem:[#allocation10 + $0x508] sm:$0xff]
          %v1811 = vld [vmem:[#allocation10 + $0x510] sm:$0xff]
          %v1812 = vld [vmem:[#allocation10 + $0x518] sm:$0xff]
          %v1813 = vld [vmem:[#allocation10 + $0x520] sm:$0xff]
          %v1814 = vld [vmem:[#allocation10 + $0x528] sm:$0xff]
          %v1815 = vld [vmem:[#allocation10 + $0x530] sm:$0xff]
          %v1816 = vld [vmem:[#allocation10 + $0x538] sm:$0xff]
          %v1817 = vld [vmem:[#allocation10 + $0x540] sm:$0xff]
          %v1818 = vld [vmem:[#allocation10 + $0x548] sm:$0xff]
          %v1819 = vld [vmem:[#allocation10 + $0x550] sm:$0xff]
          %v1820 = vld [vmem:[#allocation10 + $0x558] sm:$0xff]
          %v1821 = vld [vmem:[#allocation10 + $0x560] sm:$0xff]
          %v1822 = vld [vmem:[#allocation10 + $0x568] sm:$0xff]
          %v1823 = vld [vmem:[#allocation10 + $0x570] sm:$0xff]
          %v1824 = vld [vmem:[#allocation10 + $0x578] sm:$0xff]
          %v1825 = vld [vmem:[#allocation10 + $0x580] sm:$0xff]
          %v1826 = vld [vmem:[#allocation10 + $0x588] sm:$0xff]
          %v1827 = vld [vmem:[#allocation10 + $0x590] sm:$0xff]
          %v1828 = vld [vmem:[#allocation10 + $0x598] sm:$0xff]
          %v1829 = vld [vmem:[#allocation10 + $0x5a0] sm:$0xff]
          %v1830 = vld [vmem:[#allocation10 + $0x5a8] sm:$0xff]
          %v1831 = vld [vmem:[#allocation10 + $0x5b0] sm:$0xff]
          %v1832 = vld [vmem:[#allocation10 + $0x5b8] sm:$0xff]
          %v1833 = vld [vmem:[#allocation10 + $0x5c0] sm:$0xff]
          %v1834 = vld [vmem:[#allocation10 + $0x5c8] sm:$0xff]
          %v1835 = vld [vmem:[#allocation10 + $0x5d0] sm:$0xff]
          %v1836 = vld [vmem:[#allocation10 + $0x5d8] sm:$0xff]
          %v1837 = vld [vmem:[#allocation10 + $0x5e0] sm:$0xff]
          %v1838 = vld [vmem:[#allocation10 + $0x5e8] sm:$0xff]
          %v1839 = vld [vmem:[#allocation10 + $0x5f0] sm:$0xff]
          %v1840 = vld [vmem:[#allocation10 + $0x5f8] sm:$0xff]
          %v1841 = vld [vmem:[%s7] sm:$0x3]
          %v1843 = vlaneseq
          %v1844 = vshrl.u32 %v1843, 7
          %v1845 = vsub.s32 0, %v1844
          %v1846 = vrot.slane %v1648, %v1845
          %v1847 = vlaneseq
          %v1848 = vshrl.u32 %v1847, 7
          %v1849 = vsub.s32 1, %v1848
          %v1850 = vrot.slane %v1648, %v1849
          %v1851 = vlaneseq
          %v1852 = vshrl.u32 %v1851, 7
          %v1853 = vsub.s32 2, %v1852
          %v1854 = vrot.slane %v1648, %v1853
          %v1855 = vlaneseq
          %v1856 = vshrl.u32 %v1855, 7
          %v1857 = vsub.s32 3, %v1856
          %v1858 = vrot.slane %v1648, %v1857
          %v1859 = vlaneseq
          %v1860 = vshrl.u32 %v1859, 7
          %v1861 = vsub.s32 4, %v1860
          %v1862 = vrot.slane %v1648, %v1861
          %v1863 = vlaneseq
          %v1864 = vshrl.u32 %v1863, 7
          %v1865 = vsub.s32 5, %v1864
          %v1866 = vrot.slane %v1648, %v1865
          %v1874 = vlaneseq
          %v1875 = vshrl.u32 %v1874, 7
          %v1876 = vsub.s32 0, %v1875
          %v1877 = vrot.slane %v1841, %v1876
          %v1878 = vlaneseq
          %v1879 = vshrl.u32 %v1878, 7
          %v1880 = vsub.s32 1, %v1879
          %v1881 = vrot.slane %v1841, %v1880
          %1884 = vmatprep.subr.mxu0 %v1650
          %1885 = vmatpush1.msra.mxu0 %v1649
          %1886 = vmatprep.subr.mxu0 %v1652
          %1887 = vmatpush1.msra.mxu0 %v1651
          %1888 = vmatprep.subr.mxu0 %v1654
          %1889 = vmatpush1.msra.mxu0 %v1653
          %1890 = vmatprep.subr.mxu0 %v1656
          %1891 = vmatpush1.msra.mxu0 %v1655
          %1892 = vmatprep.subr.mxu0 %v1658
          %1893 = vmatpush1.msra.mxu0 %v1657
          %1894 = vmatprep.subr.mxu0 %v1660
          %1895 = vmatpush1.msra.mxu0 %v1659
          %1896 = vmatprep.subr.mxu0 %v1662
          %1897 = vmatpush1.msra.mxu0 %v1661
          %1898 = vmatprep.subr.mxu0 %v1664
          %1899 = vmatpush1.msra.mxu0 %v1663
          %1900 = vmatprep.subr.mxu0 %v1666
          %1901 = vmatpush1.msra.mxu0 %v1665
          %1902 = vmatprep.subr.mxu0 %v1668
          %1903 = vmatpush1.msra.mxu0 %v1667
          %1904 = vmatprep.subr.mxu0 %v1670
          %1905 = vmatpush1.msra.mxu0 %v1669
          %1906 = vmatprep.subr.mxu0 %v1672
          %1907 = vmatpush1.msra.mxu0 %v1671
          %1908 = vmatprep.subr.mxu0 %v1674
          %1909 = vmatpush1.msra.mxu0 %v1673
          %1910 = vmatprep.subr.mxu0 %v1676
          %1911 = vmatpush1.msra.mxu0 %v1675
          %1912 = vmatprep.subr.mxu0 %v1678
          %1913 = vmatpush1.msra.mxu0 %v1677
          %1914 = vmatprep.subr.mxu0 %v1680
          %1915 = vmatpush1.msra.mxu0 %v1679
          %1916 = vmatprep.subr.mxu0 %v1682
          %1917 = vmatpush1.msra.mxu0 %v1681
          %1918 = vmatprep.subr.mxu0 %v1684
          %1919 = vmatpush1.msra.mxu0 %v1683
          %1920 = vmatprep.subr.mxu0 %v1686
          %1921 = vmatpush1.msra.mxu0 %v1685
          %1922 = vmatprep.subr.mxu0 %v1688
          %1923 = vmatpush1.msra.mxu0 %v1687
          %1924 = vmatprep.subr.mxu0 %v1690
          %1925 = vmatpush1.msra.mxu0 %v1689
          %1926 = vmatprep.subr.mxu0 %v1692
          %1927 = vmatpush1.msra.mxu0 %v1691
          %1928 = vmatprep.subr.mxu0 %v1694
          %1929 = vmatpush1.msra.mxu0 %v1693
          %1930 = vmatprep.subr.mxu0 %v1696
          %1931 = vmatpush1.msra.mxu0 %v1695
          %1932 = vmatprep.subr.mxu0 %v1698
          %1933 = vmatpush1.msra.mxu0 %v1697
          %1934 = vmatprep.subr.mxu0 %v1700
          %1935 = vmatpush1.msra.mxu0 %v1699
          %1936 = vmatprep.subr.mxu0 %v1702
          %1937 = vmatpush1.msra.mxu0 %v1701
          %1938 = vmatprep.subr.mxu0 %v1704
          %1939 = vmatpush1.msra.mxu0 %v1703
          %1940 = vmatprep.subr.mxu0 %v1706
          %1941 = vmatpush1.msra.mxu0 %v1705
          %1942 = vmatprep.subr.mxu0 %v1708
          %1943 = vmatpush1.msra.mxu0 %v1707
          %1944 = vmatprep.subr.mxu0 %v1710
          %1945 = vmatpush1.msra.mxu0 %v1709
          %1946 = vmatprep.subr.mxu0 %v1712
          %1947 = vmatpush1.msra.mxu0 %v1711
          %1948 = vmatprep.mubr.f32.mxu0 %v1850
          %1949 = vmatmul.mubr.f32.gmra.mrb[0].mxu0 %v1846
          %v1950 = vpop.f32.mrb[0].mxu0
          %v1951 = vadd.f32 %v1877, %v1950
          %v1952 = vpop.f32.mrb[0].mxu0
          %v1953 = vadd.f32 %v1881, %v1952
          %1954 = vdwg.mxu0
          %1955 = vmatprep.subr.mxu0 %v1714
          %1956 = vmatpush1.msra.mxu0 %v1713
          %1957 = vmatprep.subr.mxu0 %v1716
          %1958 = vmatpush1.msra.mxu0 %v1715
          %1959 = vmatprep.subr.mxu0 %v1718
          %1960 = vmatpush1.msra.mxu0 %v1717
          %1961 = vmatprep.subr.mxu0 %v1720
          %1962 = vmatpush1.msra.mxu0 %v1719
          %1963 = vmatprep.subr.mxu0 %v1722
          %1964 = vmatpush1.msra.mxu0 %v1721
          %1965 = vmatprep.subr.mxu0 %v1724
          %1966 = vmatpush1.msra.mxu0 %v1723
          %1967 = vmatprep.subr.mxu0 %v1726
          %1968 = vmatpush1.msra.mxu0 %v1725
          %1969 = vmatprep.subr.mxu0 %v1728
          %1970 = vmatpush1.msra.mxu0 %v1727
          %1971 = vmatprep.subr.mxu0 %v1730
          %1972 = vmatpush1.msra.mxu0 %v1729
          %1973 = vmatprep.subr.mxu0 %v1732
          %1974 = vmatpush1.msra.mxu0 %v1731
          %1975 = vmatprep.subr.mxu0 %v1734
          %1976 = vmatpush1.msra.mxu0 %v1733
          %1977 = vmatprep.subr.mxu0 %v1736
          %1978 = vmatpush1.msra.mxu0 %v1735
          %1979 = vmatprep.subr.mxu0 %v1738
          %1980 = vmatpush1.msra.mxu0 %v1737
          %1981 = vmatprep.subr.mxu0 %v1740
          %1982 = vmatpush1.msra.mxu0 %v1739
          %1983 = vmatprep.subr.mxu0 %v1742
          %1984 = vmatpush1.msra.mxu0 %v1741
          %1985 = vmatprep.subr.mxu0 %v1744
          %1986 = vmatpush1.msra.mxu0 %v1743
          %1987 = vmatprep.subr.mxu0 %v1746
          %1988 = vmatpush1.msra.mxu0 %v1745
          %1989 = vmatprep.subr.mxu0 %v1748
          %1990 = vmatpush1.msra.mxu0 %v1747
          %1991 = vmatprep.subr.mxu0 %v1750
          %1992 = vmatpush1.msra.mxu0 %v1749
          %1993 = vmatprep.subr.mxu0 %v1752
          %1994 = vmatpush1.msra.mxu0 %v1751
          %1995 = vmatprep.subr.mxu0 %v1754
          %1996 = vmatpush1.msra.mxu0 %v1753
          %1997 = vmatprep.subr.mxu0 %v1756
          %1998 = vmatpush1.msra.mxu0 %v1755
          %1999 = vmatprep.subr.mxu0 %v1758
          %2000 = vmatpush1.msra.mxu0 %v1757
          %2001 = vmatprep.subr.mxu0 %v1760
          %2002 = vmatpush1.msra.mxu0 %v1759
          %2003 = vmatprep.subr.mxu0 %v1762
          %2004 = vmatpush1.msra.mxu0 %v1761
          %2005 = vmatprep.subr.mxu0 %v1764
          %2006 = vmatpush1.msra.mxu0 %v1763
          %2007 = vmatprep.subr.mxu0 %v1766
          %2008 = vmatpush1.msra.mxu0 %v1765
          %2009 = vmatprep.subr.mxu0 %v1768
          %2010 = vmatpush1.msra.mxu0 %v1767
          %2011 = vmatprep.subr.mxu0 %v1770
          %2012 = vmatpush1.msra.mxu0 %v1769
          %2013 = vmatprep.subr.mxu0 %v1772
          %2014 = vmatpush1.msra.mxu0 %v1771
          %2015 = vmatprep.subr.mxu0 %v1774
          %2016 = vmatpush1.msra.mxu0 %v1773
          %2017 = vmatprep.subr.mxu0 %v1776
          %2018 = vmatpush1.msra.mxu0 %v1775
          %2019 = vmatprep.mubr.f32.mxu0 %v1858
          %2020 = vmatmul.mubr.f32.gmra.mrb[0].mxu0 %v1854
          %v2021 = vpop.f32.mrb[0].mxu0
          %v2022 = vadd.f32 %v1951, %v2021
          %v2023 = vpop.f32.mrb[0].mxu0
          %v2024 = vadd.f32 %v1953, %v2023
          %2025 = vdwg.mxu0
          %2026 = vmatprep.subr.mxu0 %v1778
          %2027 = vmatpush1.msra.mxu0 %v1777
          %2028 = vmatprep.subr.mxu0 %v1780
          %2029 = vmatpush1.msra.mxu0 %v1779
          %2030 = vmatprep.subr.mxu0 %v1782
          %2031 = vmatpush1.msra.mxu0 %v1781
          %2032 = vmatprep.subr.mxu0 %v1784
          %2033 = vmatpush1.msra.mxu0 %v1783
          %2034 = vmatprep.subr.mxu0 %v1786
          %2035 = vmatpush1.msra.mxu0 %v1785
          %2036 = vmatprep.subr.mxu0 %v1788
          %2037 = vmatpush1.msra.mxu0 %v1787
          %2038 = vmatprep.subr.mxu0 %v1790
          %2039 = vmatpush1.msra.mxu0 %v1789
          %2040 = vmatprep.subr.mxu0 %v1792
          %2041 = vmatpush1.msra.mxu0 %v1791
          %2042 = vmatprep.subr.mxu0 %v1794
          %2043 = vmatpush1.msra.mxu0 %v1793
          %2044 = vmatprep.subr.mxu0 %v1796
          %2045 = vmatpush1.msra.mxu0 %v1795
          %2046 = vmatprep.subr.mxu0 %v1798
          %2047 = vmatpush1.msra.mxu0 %v1797
          %2048 = vmatprep.subr.mxu0 %v1800
          %2049 = vmatpush1.msra.mxu0 %v1799
          %2050 = vmatprep.subr.mxu0 %v1802
          %2051 = vmatpush1.msra.mxu0 %v1801
          %2052 = vmatprep.subr.mxu0 %v1804
          %2053 = vmatpush1.msra.mxu0 %v1803
          %2054 = vmatprep.subr.mxu0 %v1806
          %2055 = vmatpush1.msra.mxu0 %v1805
          %2056 = vmatprep.subr.mxu0 %v1808
          %2057 = vmatpush1.msra.mxu0 %v1807
          %2058 = vmatprep.subr.mxu0 %v1810
          %2059 = vmatpush1.msra.mxu0 %v1809
          %2060 = vmatprep.subr.mxu0 %v1812
          %2061 = vmatpush1.msra.mxu0 %v1811
          %2062 = vmatprep.subr.mxu0 %v1814
          %2063 = vmatpush1.msra.mxu0 %v1813
          %2064 = vmatprep.subr.mxu0 %v1816
          %2065 = vmatpush1.msra.mxu0 %v1815
          %2066 = vmatprep.subr.mxu0 %v1818
          %2067 = vmatpush1.msra.mxu0 %v1817
          %2068 = vmatprep.subr.mxu0 %v1820
          %2069 = vmatpush1.msra.mxu0 %v1819
          %2070 = vmatprep.subr.mxu0 %v1822
          %2071 = vmatpush1.msra.mxu0 %v1821
          %2072 = vmatprep.subr.mxu0 %v1824
          %2073 = vmatpush1.msra.mxu0 %v1823
          %2074 = vmatprep.subr.mxu0 %v1826
          %2075 = vmatpush1.msra.mxu0 %v1825
          %2076 = vmatprep.subr.mxu0 %v1828
          %2077 = vmatpush1.msra.mxu0 %v1827
          %2078 = vmatprep.subr.mxu0 %v1830
          %2079 = vmatpush1.msra.mxu0 %v1829
          %2080 = vmatprep.subr.mxu0 %v1832
          %2081 = vmatpush1.msra.mxu0 %v1831
          %2082 = vmatprep.subr.mxu0 %v1834
          %2083 = vmatpush1.msra.mxu0 %v1833
          %2084 = vmatprep.subr.mxu0 %v1836
          %2085 = vmatpush1.msra.mxu0 %v1835
          %2086 = vmatprep.subr.mxu0 %v1838
          %2087 = vmatpush1.msra.mxu0 %v1837
          %2088 = vmatprep.subr.mxu0 %v1840
          %2089 = vmatpush1.msra.mxu0 %v1839
          %2090 = vmatprep.mubr.f32.mxu0 %v1866
          %2091 = vmatmul.mubr.f32.gmra.mrb[0].mxu0 %v1862
          %v2092 = vpop.f32.mrb[0].mxu0
          %v2093 = vadd.f32 %v2022, %v2092
          %v2094 = vpop.f32.mrb[0].mxu0
          %v2095 = vadd.f32 %v2024, %v2094
          %2096 = vdwg.mxu0
          %v2097 = vld [vmem:[#allocation12] sm:$0xff]
          %v2098 = vld [vmem:[#allocation12 + $0x8] sm:$0xff]
          %v2099 = vld [vmem:[#allocation12 + $0x10] sm:$0xff]
          %v2100 = vld [vmem:[#allocation12 + $0x18] sm:$0xff]
          %v2101 = vld [vmem:[#allocation12 + $0x20] sm:$0xff]
          %v2102 = vld [vmem:[#allocation12 + $0x28] sm:$0xff]
          %v2103 = vld [vmem:[#allocation12 + $0x30] sm:$0xff]
          %v2104 = vld [vmem:[#allocation12 + $0x38] sm:$0xff]
          %v2105 = vld [vmem:[#allocation12 + $0x40] sm:$0xff]
          %v2106 = vld [vmem:[#allocation12 + $0x48] sm:$0xff]
          %v2107 = vld [vmem:[#allocation12 + $0x50] sm:$0xff]
          %v2108 = vld [vmem:[#allocation12 + $0x58] sm:$0xff]
          %v2109 = vld [vmem:[#allocation12 + $0x60] sm:$0xff]
          %v2110 = vld [vmem:[#allocation12 + $0x68] sm:$0xff]
          %v2111 = vld [vmem:[#allocation12 + $0x70] sm:$0xff]
          %v2112 = vld [vmem:[#allocation12 + $0x78] sm:$0xff]
          %v2113 = vld [vmem:[#allocation12 + $0x80] sm:$0xff]
          %v2114 = vld [vmem:[#allocation12 + $0x88] sm:$0xff]
          %v2115 = vld [vmem:[#allocation12 + $0x90] sm:$0xff]
          %v2116 = vld [vmem:[#allocation12 + $0x98] sm:$0xff]
          %v2117 = vld [vmem:[#allocation12 + $0xa0] sm:$0xff]
          %v2118 = vld [vmem:[#allocation12 + $0xa8] sm:$0xff]
          %v2119 = vld [vmem:[#allocation12 + $0xb0] sm:$0xff]
          %v2120 = vld [vmem:[#allocation12 + $0xb8] sm:$0xff]
          %v2121 = vld [vmem:[#allocation12 + $0xc0] sm:$0xff]
          %v2122 = vld [vmem:[#allocation12 + $0xc8] sm:$0xff]
          %v2123 = vld [vmem:[#allocation12 + $0xd0] sm:$0xff]
          %v2124 = vld [vmem:[#allocation12 + $0xd8] sm:$0xff]
          %v2125 = vld [vmem:[#allocation12 + $0xe0] sm:$0xff]
          %v2126 = vld [vmem:[#allocation12 + $0xe8] sm:$0xff]
          %v2127 = vld [vmem:[#allocation12 + $0xf0] sm:$0xff]
          %v2128 = vld [vmem:[#allocation12 + $0xf8] sm:$0xff]
          %v2129 = vld [vmem:[#allocation12 + $0x100] sm:$0xff]
          %v2130 = vld [vmem:[#allocation12 + $0x108] sm:$0xff]
          %v2131 = vld [vmem:[#allocation12 + $0x110] sm:$0xff]
          %v2132 = vld [vmem:[#allocation12 + $0x118] sm:$0xff]
          %v2133 = vld [vmem:[#allocation12 + $0x120] sm:$0xff]
          %v2134 = vld [vmem:[#allocation12 + $0x128] sm:$0xff]
          %v2135 = vld [vmem:[#allocation12 + $0x130] sm:$0xff]
          %v2136 = vld [vmem:[#allocation12 + $0x138] sm:$0xff]
          %v2137 = vld [vmem:[#allocation12 + $0x140] sm:$0xff]
          %v2138 = vld [vmem:[#allocation12 + $0x148] sm:$0xff]
          %v2139 = vld [vmem:[#allocation12 + $0x150] sm:$0xff]
          %v2140 = vld [vmem:[#allocation12 + $0x158] sm:$0xff]
          %v2141 = vld [vmem:[#allocation12 + $0x160] sm:$0xff]
          %v2142 = vld [vmem:[#allocation12 + $0x168] sm:$0xff]
          %v2143 = vld [vmem:[#allocation12 + $0x170] sm:$0xff]
          %v2144 = vld [vmem:[#allocation12 + $0x178] sm:$0xff]
          %v2145 = vld [vmem:[#allocation12 + $0x180] sm:$0xff]
          %v2146 = vld [vmem:[#allocation12 + $0x188] sm:$0xff]
          %v2147 = vld [vmem:[#allocation12 + $0x190] sm:$0xff]
          %v2148 = vld [vmem:[#allocation12 + $0x198] sm:$0xff]
          %v2149 = vld [vmem:[#allocation12 + $0x1a0] sm:$0xff]
          %v2150 = vld [vmem:[#allocation12 + $0x1a8] sm:$0xff]
          %v2151 = vld [vmem:[#allocation12 + $0x1b0] sm:$0xff]
          %v2152 = vld [vmem:[#allocation12 + $0x1b8] sm:$0xff]
          %v2153 = vld [vmem:[#allocation12 + $0x1c0] sm:$0xff]
          %v2154 = vld [vmem:[#allocation12 + $0x1c8] sm:$0xff]
          %v2155 = vld [vmem:[#allocation12 + $0x1d0] sm:$0xff]
          %v2156 = vld [vmem:[#allocation12 + $0x1d8] sm:$0xff]
          %v2157 = vld [vmem:[#allocation12 + $0x1e0] sm:$0xff]
          %v2158 = vld [vmem:[#allocation12 + $0x1e8] sm:$0xff]
          %v2159 = vld [vmem:[#allocation12 + $0x1f0] sm:$0xff]
          %v2160 = vld [vmem:[#allocation12 + $0x1f8] sm:$0xff]
          %v2161 = vld [vmem:[#allocation12 + $0x200] sm:$0xff]
          %v2162 = vld [vmem:[#allocation12 + $0x208] sm:$0xff]
          %v2163 = vld [vmem:[#allocation12 + $0x210] sm:$0xff]
          %v2164 = vld [vmem:[#allocation12 + $0x218] sm:$0xff]
          %v2165 = vld [vmem:[#allocation12 + $0x220] sm:$0xff]
          %v2166 = vld [vmem:[#allocation12 + $0x228] sm:$0xff]
          %v2167 = vld [vmem:[#allocation12 + $0x230] sm:$0xff]
          %v2168 = vld [vmem:[#allocation12 + $0x238] sm:$0xff]
          %v2169 = vld [vmem:[#allocation12 + $0x240] sm:$0xff]
          %v2170 = vld [vmem:[#allocation12 + $0x248] sm:$0xff]
          %v2171 = vld [vmem:[#allocation12 + $0x250] sm:$0xff]
          %v2172 = vld [vmem:[#allocation12 + $0x258] sm:$0xff]
          %v2173 = vld [vmem:[#allocation12 + $0x260] sm:$0xff]
          %v2174 = vld [vmem:[#allocation12 + $0x268] sm:$0xff]
          %v2175 = vld [vmem:[#allocation12 + $0x270] sm:$0xff]
          %v2176 = vld [vmem:[#allocation12 + $0x278] sm:$0xff]
          %v2177 = vld [vmem:[#allocation12 + $0x280] sm:$0xff]
          %v2178 = vld [vmem:[#allocation12 + $0x288] sm:$0xff]
          %v2179 = vld [vmem:[#allocation12 + $0x290] sm:$0xff]
          %v2180 = vld [vmem:[#allocation12 + $0x298] sm:$0xff]
          %v2181 = vld [vmem:[#allocation12 + $0x2a0] sm:$0xff]
          %v2182 = vld [vmem:[#allocation12 + $0x2a8] sm:$0xff]
          %v2183 = vld [vmem:[#allocation12 + $0x2b0] sm:$0xff]
          %v2184 = vld [vmem:[#allocation12 + $0x2b8] sm:$0xff]
          %v2185 = vld [vmem:[#allocation12 + $0x2c0] sm:$0xff]
          %v2186 = vld [vmem:[#allocation12 + $0x2c8] sm:$0xff]
          %v2187 = vld [vmem:[#allocation12 + $0x2d0] sm:$0xff]
          %v2188 = vld [vmem:[#allocation12 + $0x2d8] sm:$0xff]
          %v2189 = vld [vmem:[#allocation12 + $0x2e0] sm:$0xff]
          %v2190 = vld [vmem:[#allocation12 + $0x2e8] sm:$0xff]
          %v2191 = vld [vmem:[#allocation12 + $0x2f0] sm:$0xff]
          %v2192 = vld [vmem:[#allocation12 + $0x2f8] sm:$0xff]
          %v2193 = vld [vmem:[#allocation12 + $0x300] sm:$0xff]
          %v2194 = vld [vmem:[#allocation12 + $0x308] sm:$0xff]
          %v2195 = vld [vmem:[#allocation12 + $0x310] sm:$0xff]
          %v2196 = vld [vmem:[#allocation12 + $0x318] sm:$0xff]
          %v2197 = vld [vmem:[#allocation12 + $0x320] sm:$0xff]
          %v2198 = vld [vmem:[#allocation12 + $0x328] sm:$0xff]
          %v2199 = vld [vmem:[#allocation12 + $0x330] sm:$0xff]
          %v2200 = vld [vmem:[#allocation12 + $0x338] sm:$0xff]
          %v2201 = vld [vmem:[#allocation12 + $0x340] sm:$0xff]
          %v2202 = vld [vmem:[#allocation12 + $0x348] sm:$0xff]
          %v2203 = vld [vmem:[#allocation12 + $0x350] sm:$0xff]
          %v2204 = vld [vmem:[#allocation12 + $0x358] sm:$0xff]
          %v2205 = vld [vmem:[#allocation12 + $0x360] sm:$0xff]
          %v2206 = vld [vmem:[#allocation12 + $0x368] sm:$0xff]
          %v2207 = vld [vmem:[#allocation12 + $0x370] sm:$0xff]
          %v2208 = vld [vmem:[#allocation12 + $0x378] sm:$0xff]
          %v2209 = vld [vmem:[#allocation12 + $0x380] sm:$0xff]
          %v2210 = vld [vmem:[#allocation12 + $0x388] sm:$0xff]
          %v2211 = vld [vmem:[#allocation12 + $0x390] sm:$0xff]
          %v2212 = vld [vmem:[#allocation12 + $0x398] sm:$0xff]
          %v2213 = vld [vmem:[#allocation12 + $0x3a0] sm:$0xff]
          %v2214 = vld [vmem:[#allocation12 + $0x3a8] sm:$0xff]
          %v2215 = vld [vmem:[#allocation12 + $0x3b0] sm:$0xff]
          %v2216 = vld [vmem:[#allocation12 + $0x3b8] sm:$0xff]
          %v2217 = vld [vmem:[#allocation12 + $0x3c0] sm:$0xff]
          %v2218 = vld [vmem:[#allocation12 + $0x3c8] sm:$0xff]
          %v2219 = vld [vmem:[#allocation12 + $0x3d0] sm:$0xff]
          %v2220 = vld [vmem:[#allocation12 + $0x3d8] sm:$0xff]
          %v2221 = vld [vmem:[#allocation12 + $0x3e0] sm:$0xff]
          %v2222 = vld [vmem:[#allocation12 + $0x3e8] sm:$0xff]
          %v2223 = vld [vmem:[#allocation12 + $0x3f0] sm:$0xff]
          %v2224 = vld [vmem:[#allocation12 + $0x3f8] sm:$0xff]
          %v2225 = vld [vmem:[#allocation12 + $0x400] sm:$0xff]
          %v2226 = vld [vmem:[#allocation12 + $0x408] sm:$0xff]
          %v2227 = vld [vmem:[#allocation12 + $0x410] sm:$0xff]
          %v2228 = vld [vmem:[#allocation12 + $0x418] sm:$0xff]
          %v2229 = vld [vmem:[#allocation12 + $0x420] sm:$0xff]
          %v2230 = vld [vmem:[#allocation12 + $0x428] sm:$0xff]
          %v2231 = vld [vmem:[#allocation12 + $0x430] sm:$0xff]
          %v2232 = vld [vmem:[#allocation12 + $0x438] sm:$0xff]
          %v2233 = vld [vmem:[#allocation12 + $0x440] sm:$0xff]
          %v2234 = vld [vmem:[#allocation12 + $0x448] sm:$0xff]
          %v2235 = vld [vmem:[#allocation12 + $0x450] sm:$0xff]
          %v2236 = vld [vmem:[#allocation12 + $0x458] sm:$0xff]
          %v2237 = vld [vmem:[#allocation12 + $0x460] sm:$0xff]
          %v2238 = vld [vmem:[#allocation12 + $0x468] sm:$0xff]
          %v2239 = vld [vmem:[#allocation12 + $0x470] sm:$0xff]
          %v2240 = vld [vmem:[#allocation12 + $0x478] sm:$0xff]
          %v2241 = vld [vmem:[#allocation12 + $0x480] sm:$0xff]
          %v2242 = vld [vmem:[#allocation12 + $0x488] sm:$0xff]
          %v2243 = vld [vmem:[#allocation12 + $0x490] sm:$0xff]
          %v2244 = vld [vmem:[#allocation12 + $0x498] sm:$0xff]
          %v2245 = vld [vmem:[#allocation12 + $0x4a0] sm:$0xff]
          %v2246 = vld [vmem:[#allocation12 + $0x4a8] sm:$0xff]
          %v2247 = vld [vmem:[#allocation12 + $0x4b0] sm:$0xff]
          %v2248 = vld [vmem:[#allocation12 + $0x4b8] sm:$0xff]
          %v2249 = vld [vmem:[#allocation12 + $0x4c0] sm:$0xff]
          %v2250 = vld [vmem:[#allocation12 + $0x4c8] sm:$0xff]
          %v2251 = vld [vmem:[#allocation12 + $0x4d0] sm:$0xff]
          %v2252 = vld [vmem:[#allocation12 + $0x4d8] sm:$0xff]
          %v2253 = vld [vmem:[#allocation12 + $0x4e0] sm:$0xff]
          %v2254 = vld [vmem:[#allocation12 + $0x4e8] sm:$0xff]
          %v2255 = vld [vmem:[#allocation12 + $0x4f0] sm:$0xff]
          %v2256 = vld [vmem:[#allocation12 + $0x4f8] sm:$0xff]
          %v2257 = vld [vmem:[#allocation12 + $0x500] sm:$0xff]
          %v2258 = vld [vmem:[#allocation12 + $0x508] sm:$0xff]
          %v2259 = vld [vmem:[#allocation12 + $0x510] sm:$0xff]
          %v2260 = vld [vmem:[#allocation12 + $0x518] sm:$0xff]
          %v2261 = vld [vmem:[#allocation12 + $0x520] sm:$0xff]
          %v2262 = vld [vmem:[#allocation12 + $0x528] sm:$0xff]
          %v2263 = vld [vmem:[#allocation12 + $0x530] sm:$0xff]
          %v2264 = vld [vmem:[#allocation12 + $0x538] sm:$0xff]
          %v2265 = vld [vmem:[#allocation12 + $0x540] sm:$0xff]
          %v2266 = vld [vmem:[#allocation12 + $0x548] sm:$0xff]
          %v2267 = vld [vmem:[#allocation12 + $0x550] sm:$0xff]
          %v2268 = vld [vmem:[#allocation12 + $0x558] sm:$0xff]
          %v2269 = vld [vmem:[#allocation12 + $0x560] sm:$0xff]
          %v2270 = vld [vmem:[#allocation12 + $0x568] sm:$0xff]
          %v2271 = vld [vmem:[#allocation12 + $0x570] sm:$0xff]
          %v2272 = vld [vmem:[#allocation12 + $0x578] sm:$0xff]
          %v2273 = vld [vmem:[#allocation12 + $0x580] sm:$0xff]
          %v2274 = vld [vmem:[#allocation12 + $0x588] sm:$0xff]
          %v2275 = vld [vmem:[#allocation12 + $0x590] sm:$0xff]
          %v2276 = vld [vmem:[#allocation12 + $0x598] sm:$0xff]
          %v2277 = vld [vmem:[#allocation12 + $0x5a0] sm:$0xff]
          %v2278 = vld [vmem:[#allocation12 + $0x5a8] sm:$0xff]
          %v2279 = vld [vmem:[#allocation12 + $0x5b0] sm:$0xff]
          %v2280 = vld [vmem:[#allocation12 + $0x5b8] sm:$0xff]
          %v2281 = vld [vmem:[#allocation12 + $0x5c0] sm:$0xff]
          %v2282 = vld [vmem:[#allocation12 + $0x5c8] sm:$0xff]
          %v2283 = vld [vmem:[#allocation12 + $0x5d0] sm:$0xff]
          %v2284 = vld [vmem:[#allocation12 + $0x5d8] sm:$0xff]
          %v2285 = vld [vmem:[#allocation12 + $0x5e0] sm:$0xff]
          %v2286 = vld [vmem:[#allocation12 + $0x5e8] sm:$0xff]
          %v2287 = vld [vmem:[#allocation12 + $0x5f0] sm:$0xff]
          %v2288 = vld [vmem:[#allocation12 + $0x5f8] sm:$0xff]
          %v2289 = vld [vmem:[#allocation12 + $0x600] sm:$0xff]
          %v2290 = vld [vmem:[#allocation12 + $0x608] sm:$0xff]
          %v2291 = vld [vmem:[#allocation12 + $0x610] sm:$0xff]
          %v2292 = vld [vmem:[#allocation12 + $0x618] sm:$0xff]
          %v2293 = vld [vmem:[#allocation12 + $0x620] sm:$0xff]
          %v2294 = vld [vmem:[#allocation12 + $0x628] sm:$0xff]
          %v2295 = vld [vmem:[#allocation12 + $0x630] sm:$0xff]
          %v2296 = vld [vmem:[#allocation12 + $0x638] sm:$0xff]
          %v2297 = vld [vmem:[#allocation12 + $0x640] sm:$0xff]
          %v2298 = vld [vmem:[#allocation12 + $0x648] sm:$0xff]
          %v2299 = vld [vmem:[#allocation12 + $0x650] sm:$0xff]
          %v2300 = vld [vmem:[#allocation12 + $0x658] sm:$0xff]
          %v2301 = vld [vmem:[#allocation12 + $0x660] sm:$0xff]
          %v2302 = vld [vmem:[#allocation12 + $0x668] sm:$0xff]
          %v2303 = vld [vmem:[#allocation12 + $0x670] sm:$0xff]
          %v2304 = vld [vmem:[#allocation12 + $0x678] sm:$0xff]
          %v2305 = vld [vmem:[#allocation12 + $0x680] sm:$0xff]
          %v2306 = vld [vmem:[#allocation12 + $0x688] sm:$0xff]
          %v2307 = vld [vmem:[#allocation12 + $0x690] sm:$0xff]
          %v2308 = vld [vmem:[#allocation12 + $0x698] sm:$0xff]
          %v2309 = vld [vmem:[#allocation12 + $0x6a0] sm:$0xff]
          %v2310 = vld [vmem:[#allocation12 + $0x6a8] sm:$0xff]
          %v2311 = vld [vmem:[#allocation12 + $0x6b0] sm:$0xff]
          %v2312 = vld [vmem:[#allocation12 + $0x6b8] sm:$0xff]
          %v2313 = vld [vmem:[#allocation12 + $0x6c0] sm:$0xff]
          %v2314 = vld [vmem:[#allocation12 + $0x6c8] sm:$0xff]
          %v2315 = vld [vmem:[#allocation12 + $0x6d0] sm:$0xff]
          %v2316 = vld [vmem:[#allocation12 + $0x6d8] sm:$0xff]
          %v2317 = vld [vmem:[#allocation12 + $0x6e0] sm:$0xff]
          %v2318 = vld [vmem:[#allocation12 + $0x6e8] sm:$0xff]
          %v2319 = vld [vmem:[#allocation12 + $0x6f0] sm:$0xff]
          %v2320 = vld [vmem:[#allocation12 + $0x6f8] sm:$0xff]
          %v2321 = vld [vmem:[#allocation12 + $0x700] sm:$0xff]
          %v2322 = vld [vmem:[#allocation12 + $0x708] sm:$0xff]
          %v2323 = vld [vmem:[#allocation12 + $0x710] sm:$0xff]
          %v2324 = vld [vmem:[#allocation12 + $0x718] sm:$0xff]
          %v2325 = vld [vmem:[#allocation12 + $0x720] sm:$0xff]
          %v2326 = vld [vmem:[#allocation12 + $0x728] sm:$0xff]
          %v2327 = vld [vmem:[#allocation12 + $0x730] sm:$0xff]
          %v2328 = vld [vmem:[#allocation12 + $0x738] sm:$0xff]
          %v2329 = vld [vmem:[#allocation12 + $0x740] sm:$0xff]
          %v2330 = vld [vmem:[#allocation12 + $0x748] sm:$0xff]
          %v2331 = vld [vmem:[#allocation12 + $0x750] sm:$0xff]
          %v2332 = vld [vmem:[#allocation12 + $0x758] sm:$0xff]
          %v2333 = vld [vmem:[#allocation12 + $0x760] sm:$0xff]
          %v2334 = vld [vmem:[#allocation12 + $0x768] sm:$0xff]
          %v2335 = vld [vmem:[#allocation12 + $0x770] sm:$0xff]
          %v2336 = vld [vmem:[#allocation12 + $0x778] sm:$0xff]
          %v2337 = vld [vmem:[#allocation12 + $0x780] sm:$0xff]
          %v2338 = vld [vmem:[#allocation12 + $0x788] sm:$0xff]
          %v2339 = vld [vmem:[#allocation12 + $0x790] sm:$0xff]
          %v2340 = vld [vmem:[#allocation12 + $0x798] sm:$0xff]
          %v2341 = vld [vmem:[#allocation12 + $0x7a0] sm:$0xff]
          %v2342 = vld [vmem:[#allocation12 + $0x7a8] sm:$0xff]
          %v2343 = vld [vmem:[#allocation12 + $0x7b0] sm:$0xff]
          %v2344 = vld [vmem:[#allocation12 + $0x7b8] sm:$0xff]
          %v2345 = vld [vmem:[#allocation12 + $0x7c0] sm:$0xff]
          %v2346 = vld [vmem:[#allocation12 + $0x7c8] sm:$0xff]
          %v2347 = vld [vmem:[#allocation12 + $0x7d0] sm:$0xff]
          %v2348 = vld [vmem:[#allocation12 + $0x7d8] sm:$0xff]
          %v2349 = vld [vmem:[#allocation12 + $0x7e0] sm:$0xff]
          %v2350 = vld [vmem:[#allocation12 + $0x7e8] sm:$0xff]
          %v2351 = vld [vmem:[#allocation12 + $0x7f0] sm:$0xff]
          %v2352 = vld [vmem:[#allocation12 + $0x7f8] sm:$0xff]
          %2353 = vmatprep.subr.mxu0 %v2226
          %2354 = vmatpush1.msra.mxu0 %v2225
          %2355 = vmatprep.subr.mxu0 %v2230
          %2356 = vmatpush1.msra.mxu0 %v2229
          %2357 = vmatprep.subr.mxu0 %v2234
          %2358 = vmatpush1.msra.mxu0 %v2233
          %2359 = vmatprep.subr.mxu0 %v2238
          %2360 = vmatpush1.msra.mxu0 %v2237
          %2361 = vmatprep.subr.mxu0 %v2242
          %2362 = vmatpush1.msra.mxu0 %v2241
          %2363 = vmatprep.subr.mxu0 %v2246
          %2364 = vmatpush1.msra.mxu0 %v2245
          %2365 = vmatprep.subr.mxu0 %v2250
          %2366 = vmatpush1.msra.mxu0 %v2249
          %2367 = vmatprep.subr.mxu0 %v2254
          %2368 = vmatpush1.msra.mxu0 %v2253
          %2369 = vmatprep.subr.mxu0 %v2258
          %2370 = vmatpush1.msra.mxu0 %v2257
          %2371 = vmatprep.subr.mxu0 %v2262
          %2372 = vmatpush1.msra.mxu0 %v2261
          %2373 = vmatprep.subr.mxu0 %v2266
          %2374 = vmatpush1.msra.mxu0 %v2265
          %2375 = vmatprep.subr.mxu0 %v2270
          %2376 = vmatpush1.msra.mxu0 %v2269
          %2377 = vmatprep.subr.mxu0 %v2274
          %2378 = vmatpush1.msra.mxu0 %v2273
          %2379 = vmatprep.subr.mxu0 %v2278
          %2380 = vmatpush1.msra.mxu0 %v2277
          %2381 = vmatprep.subr.mxu0 %v2282
          %2382 = vmatpush1.msra.mxu0 %v2281
          %2383 = vmatprep.subr.mxu0 %v2286
          %2384 = vmatpush1.msra.mxu0 %v2285
          %2385 = vmatprep.subr.mxu0 %v2290
          %2386 = vmatpush1.msra.mxu0 %v2289
          %2387 = vmatprep.subr.mxu0 %v2294
          %2388 = vmatpush1.msra.mxu0 %v2293
          %2389 = vmatprep.subr.mxu0 %v2298
          %2390 = vmatpush1.msra.mxu0 %v2297
          %2391 = vmatprep.subr.mxu0 %v2302
          %2392 = vmatpush1.msra.mxu0 %v2301
          %2393 = vmatprep.subr.mxu0 %v2306
          %2394 = vmatpush1.msra.mxu0 %v2305
          %2395 = vmatprep.subr.mxu0 %v2310
          %2396 = vmatpush1.msra.mxu0 %v2309
          %2397 = vmatprep.subr.mxu0 %v2314
          %2398 = vmatpush1.msra.mxu0 %v2313
          %2399 = vmatprep.subr.mxu0 %v2318
          %2400 = vmatpush1.msra.mxu0 %v2317
          %2401 = vmatprep.subr.mxu0 %v2322
          %2402 = vmatpush1.msra.mxu0 %v2321
          %2403 = vmatprep.subr.mxu0 %v2326
          %2404 = vmatpush1.msra.mxu0 %v2325
          %2405 = vmatprep.subr.mxu0 %v2330
          %2406 = vmatpush1.msra.mxu0 %v2329
          %2407 = vmatprep.subr.mxu0 %v2334
          %2408 = vmatpush1.msra.mxu0 %v2333
          %2409 = vmatprep.subr.mxu0 %v2338
          %2410 = vmatpush1.msra.mxu0 %v2337
          %2411 = vmatprep.subr.mxu0 %v2342
          %2412 = vmatpush1.msra.mxu0 %v2341
          %2413 = vmatprep.subr.mxu0 %v2346
          %2414 = vmatpush1.msra.mxu0 %v2345
          %2415 = vmatprep.subr.mxu0 %v2350
          %2416 = vmatpush1.msra.mxu0 %v2349
          %2417 = vmatprep.mubr.f32.mxu0 %v2095
          %2418 = vmatmul.mubr.f32.gmra.mrb[0].mxu0 %v2093
          %v2419 = vpop.f32.mrb[0].mxu0
          %v2420 = vadd.f32 0.0, %v2419
          %v2421 = vpop.f32.mrb[0].mxu0
          %v2422 = vadd.f32 0.0, %v2421
          %2423 = vdwg.mxu0
          %2424 = vmatprep.subr.mxu0 %v2228
          %2425 = vmatpush1.msra.mxu0 %v2227
          %2426 = vmatprep.subr.mxu0 %v2232
          %2427 = vmatpush1.msra.mxu0 %v2231
          %2428 = vmatprep.subr.mxu0 %v2236
          %2429 = vmatpush1.msra.mxu0 %v2235
          %2430 = vmatprep.subr.mxu0 %v2240
          %2431 = vmatpush1.msra.mxu0 %v2239
          %2432 = vmatprep.subr.mxu0 %v2244
          %2433 = vmatpush1.msra.mxu0 %v2243
          %2434 = vmatprep.subr.mxu0 %v2248
          %2435 = vmatpush1.msra.mxu0 %v2247
          %2436 = vmatprep.subr.mxu0 %v2252
          %2437 = vmatpush1.msra.mxu0 %v2251
          %2438 = vmatprep.subr.mxu0 %v2256
          %2439 = vmatpush1.msra.mxu0 %v2255
          %2440 = vmatprep.subr.mxu0 %v2260
          %2441 = vmatpush1.msra.mxu0 %v2259
          %2442 = vmatprep.subr.mxu0 %v2264
          %2443 = vmatpush1.msra.mxu0 %v2263
          %2444 = vmatprep.subr.mxu0 %v2268
          %2445 = vmatpush1.msra.mxu0 %v2267
          %2446 = vmatprep.subr.mxu0 %v2272
          %2447 = vmatpush1.msra.mxu0 %v2271
          %2448 = vmatprep.subr.mxu0 %v2276
          %2449 = vmatpush1.msra.mxu0 %v2275
          %2450 = vmatprep.subr.mxu0 %v2280
          %2451 = vmatpush1.msra.mxu0 %v2279
          %2452 = vmatprep.subr.mxu0 %v2284
          %2453 = vmatpush1.msra.mxu0 %v2283
          %2454 = vmatprep.subr.mxu0 %v2288
          %2455 = vmatpush1.msra.mxu0 %v2287
          %2456 = vmatprep.subr.mxu0 %v2292
          %2457 = vmatpush1.msra.mxu0 %v2291
          %2458 = vmatprep.subr.mxu0 %v2296
          %2459 = vmatpush1.msra.mxu0 %v2295
          %2460 = vmatprep.subr.mxu0 %v2300
          %2461 = vmatpush1.msra.mxu0 %v2299
          %2462 = vmatprep.subr.mxu0 %v2304
          %2463 = vmatpush1.msra.mxu0 %v2303
          %2464 = vmatprep.subr.mxu0 %v2308
          %2465 = vmatpush1.msra.mxu0 %v2307
          %2466 = vmatprep.subr.mxu0 %v2312
          %2467 = vmatpush1.msra.mxu0 %v2311
          %2468 = vmatprep.subr.mxu0 %v2316
          %2469 = vmatpush1.msra.mxu0 %v2315
          %2470 = vmatprep.subr.mxu0 %v2320
          %2471 = vmatpush1.msra.mxu0 %v2319
          %2472 = vmatprep.subr.mxu0 %v2324
          %2473 = vmatpush1.msra.mxu0 %v2323
          %2474 = vmatprep.subr.mxu0 %v2328
          %2475 = vmatpush1.msra.mxu0 %v2327
          %2476 = vmatprep.subr.mxu0 %v2332
          %2477 = vmatpush1.msra.mxu0 %v2331
          %2478 = vmatprep.subr.mxu0 %v2336
          %2479 = vmatpush1.msra.mxu0 %v2335
          %2480 = vmatprep.subr.mxu0 %v2340
          %2481 = vmatpush1.msra.mxu0 %v2339
          %2482 = vmatprep.subr.mxu0 %v2344
          %2483 = vmatpush1.msra.mxu0 %v2343
          %2484 = vmatprep.subr.mxu0 %v2348
          %2485 = vmatpush1.msra.mxu0 %v2347
          %2486 = vmatprep.subr.mxu0 %v2352
          %2487 = vmatpush1.msra.mxu0 %v2351
          %2488 = vmatprep.mubr.f32.mxu0 %v2095
          %2489 = vmatmul.mubr.f32.gmra.mrb[0].mxu0 %v2093
          %v2490 = vpop.f32.mrb[0].mxu0
          %v2491 = vadd.f32 0.0, %v2490
          %v2492 = vpop.f32.mrb[0].mxu0
          %v2493 = vadd.f32 0.0, %v2492
          %2494 = vdwg.mxu0
          %2495 = vmatprep.subr.mxu0 %v2098
          %2496 = vmatpush1.msra.mxu0 %v2097
          %2497 = vmatprep.subr.mxu0 %v2102
          %2498 = vmatpush1.msra.mxu0 %v2101
          %2499 = vmatprep.subr.mxu0 %v2106
          %2500 = vmatpush1.msra.mxu0 %v2105
          %2501 = vmatprep.subr.mxu0 %v2110
          %2502 = vmatpush1.msra.mxu0 %v2109
          %2503 = vmatprep.subr.mxu0 %v2114
          %2504 = vmatpush1.msra.mxu0 %v2113
          %2505 = vmatprep.subr.mxu0 %v2118
          %2506 = vmatpush1.msra.mxu0 %v2117
          %2507 = vmatprep.subr.mxu0 %v2122
          %2508 = vmatpush1.msra.mxu0 %v2121
          %2509 = vmatprep.subr.mxu0 %v2126
          %2510 = vmatpush1.msra.mxu0 %v2125
          %2511 = vmatprep.subr.mxu0 %v2130
          %2512 = vmatpush1.msra.mxu0 %v2129
          %2513 = vmatprep.subr.mxu0 %v2134
          %2514 = vmatpush1.msra.mxu0 %v2133
          %2515 = vmatprep.subr.mxu0 %v2138
          %2516 = vmatpush1.msra.mxu0 %v2137
          %2517 = vmatprep.subr.mxu0 %v2142
          %2518 = vmatpush1.msra.mxu0 %v2141
          %2519 = vmatprep.subr.mxu0 %v2146
          %2520 = vmatpush1.msra.mxu0 %v2145
          %2521 = vmatprep.subr.mxu0 %v2150
          %2522 = vmatpush1.msra.mxu0 %v2149
          %2523 = vmatprep.subr.mxu0 %v2154
          %2524 = vmatpush1.msra.mxu0 %v2153
          %2525 = vmatprep.subr.mxu0 %v2158
          %2526 = vmatpush1.msra.mxu0 %v2157
          %2527 = vmatprep.subr.mxu0 %v2162
          %2528 = vmatpush1.msra.mxu0 %v2161
          %2529 = vmatprep.subr.mxu0 %v2166
          %2530 = vmatpush1.msra.mxu0 %v2165
          %2531 = vmatprep.subr.mxu0 %v2170
          %2532 = vmatpush1.msra.mxu0 %v2169
          %2533 = vmatprep.subr.mxu0 %v2174
          %2534 = vmatpush1.msra.mxu0 %v2173
          %2535 = vmatprep.subr.mxu0 %v2178
          %2536 = vmatpush1.msra.mxu0 %v2177
          %2537 = vmatprep.subr.mxu0 %v2182
          %2538 = vmatpush1.msra.mxu0 %v2181
          %2539 = vmatprep.subr.mxu0 %v2186
          %2540 = vmatpush1.msra.mxu0 %v2185
          %2541 = vmatprep.subr.mxu0 %v2190
          %2542 = vmatpush1.msra.mxu0 %v2189
          %2543 = vmatprep.subr.mxu0 %v2194
          %2544 = vmatpush1.msra.mxu0 %v2193
          %2545 = vmatprep.subr.mxu0 %v2198
          %2546 = vmatpush1.msra.mxu0 %v2197
          %2547 = vmatprep.subr.mxu0 %v2202
          %2548 = vmatpush1.msra.mxu0 %v2201
          %2549 = vmatprep.subr.mxu0 %v2206
          %2550 = vmatpush1.msra.mxu0 %v2205
          %2551 = vmatprep.subr.mxu0 %v2210
          %2552 = vmatpush1.msra.mxu0 %v2209
          %2553 = vmatprep.subr.mxu0 %v2214
          %2554 = vmatpush1.msra.mxu0 %v2213
          %2555 = vmatprep.subr.mxu0 %v2218
          %2556 = vmatpush1.msra.mxu0 %v2217
          %2557 = vmatprep.subr.mxu0 %v2222
          %2558 = vmatpush1.msra.mxu0 %v2221
          %2559 = vmatprep.mubr.f32.mxu0 %v1646
          %2560 = vmatmul.mubr.f32.gmra.mrb[0].mxu0 %v1644
          %v2561 = vpop.f32.mrb[0].mxu0
          %v2562 = vadd.f32 %v2420, %v2561
          %v2563 = vpop.f32.mrb[0].mxu0
          %v2564 = vadd.f32 %v2422, %v2563
          %2565 = vdwg.mxu0
          %2566 = vmatprep.subr.mxu0 %v2100
          %2567 = vmatpush1.msra.mxu0 %v2099
          %2568 = vmatprep.subr.mxu0 %v2104
          %2569 = vmatpush1.msra.mxu0 %v2103
          %2570 = vmatprep.subr.mxu0 %v2108
          %2571 = vmatpush1.msra.mxu0 %v2107
          %2572 = vmatprep.subr.mxu0 %v2112
          %2573 = vmatpush1.msra.mxu0 %v2111
          %2574 = vmatprep.subr.mxu0 %v2116
          %2575 = vmatpush1.msra.mxu0 %v2115
          %2576 = vmatprep.subr.mxu0 %v2120
          %2577 = vmatpush1.msra.mxu0 %v2119
          %2578 = vmatprep.subr.mxu0 %v2124
          %2579 = vmatpush1.msra.mxu0 %v2123
          %2580 = vmatprep.subr.mxu0 %v2128
          %2581 = vmatpush1.msra.mxu0 %v2127
          %2582 = vmatprep.subr.mxu0 %v2132
          %2583 = vmatpush1.msra.mxu0 %v2131
          %2584 = vmatprep.subr.mxu0 %v2136
          %2585 = vmatpush1.msra.mxu0 %v2135
          %2586 = vmatprep.subr.mxu0 %v2140
          %2587 = vmatpush1.msra.mxu0 %v2139
          %2588 = vmatprep.subr.mxu0 %v2144
          %2589 = vmatpush1.msra.mxu0 %v2143
          %2590 = vmatprep.subr.mxu0 %v2148
          %2591 = vmatpush1.msra.mxu0 %v2147
          %2592 = vmatprep.subr.mxu0 %v2152
          %2593 = vmatpush1.msra.mxu0 %v2151
          %2594 = vmatprep.subr.mxu0 %v2156
          %2595 = vmatpush1.msra.mxu0 %v2155
          %2596 = vmatprep.subr.mxu0 %v2160
          %2597 = vmatpush1.msra.mxu0 %v2159
          %2598 = vmatprep.subr.mxu0 %v2164
          %2599 = vmatpush1.msra.mxu0 %v2163
          %2600 = vmatprep.subr.mxu0 %v2168
          %2601 = vmatpush1.msra.mxu0 %v2167
          %2602 = vmatprep.subr.mxu0 %v2172
          %2603 = vmatpush1.msra.mxu0 %v2171
          %2604 = vmatprep.subr.mxu0 %v2176
          %2605 = vmatpush1.msra.mxu0 %v2175
          %2606 = vmatprep.subr.mxu0 %v2180
          %2607 = vmatpush1.msra.mxu0 %v2179
          %2608 = vmatprep.subr.mxu0 %v2184
          %2609 = vmatpush1.msra.mxu0 %v2183
          %2610 = vmatprep.subr.mxu0 %v2188
          %2611 = vmatpush1.msra.mxu0 %v2187
          %2612 = vmatprep.subr.mxu0 %v2192
          %2613 = vmatpush1.msra.mxu0 %v2191
          %2614 = vmatprep.subr.mxu0 %v2196
          %2615 = vmatpush1.msra.mxu0 %v2195
          %2616 = vmatprep.subr.mxu0 %v2200
          %2617 = vmatpush1.msra.mxu0 %v2199
          %2618 = vmatprep.subr.mxu0 %v2204
          %2619 = vmatpush1.msra.mxu0 %v2203
          %2620 = vmatprep.subr.mxu0 %v2208
          %2621 = vmatpush1.msra.mxu0 %v2207
          %2622 = vmatprep.subr.mxu0 %v2212
          %2623 = vmatpush1.msra.mxu0 %v2211
          %2624 = vmatprep.subr.mxu0 %v2216
          %2625 = vmatpush1.msra.mxu0 %v2215
          %2626 = vmatprep.subr.mxu0 %v2220
          %2627 = vmatpush1.msra.mxu0 %v2219
          %2628 = vmatprep.subr.mxu0 %v2224
          %2629 = vmatpush1.msra.mxu0 %v2223
          %2630 = vmatprep.mubr.f32.mxu0 %v1646
          %2631 = vmatmul.mubr.f32.gmra.mrb[0].mxu0 %v1644
          %v2632 = vpop.f32.mrb[0].mxu0
          %v2633 = vadd.f32 %v2491, %v2632
          %v2634 = vpop.f32.mrb[0].mxu0
          %v2635 = vadd.f32 %v2493, %v2634
          %2636 = vdwg.mxu0
          %v2637 = vld [vmem:[%s9] sm:$0xf]
          %v2639 = vlaneseq
          %v2640 = vshrl.u32 %v2639, 7
          %v2641 = vsub.s32 0, %v2640
          %v2642 = vrot.slane %v2637, %v2641
          %v2643 = vlaneseq
          %v2644 = vshrl.u32 %v2643, 7
          %v2645 = vsub.s32 1, %v2644
          %v2646 = vrot.slane %v2637, %v2645
          %v2647 = vlaneseq
          %v2648 = vshrl.u32 %v2647, 7
          %v2649 = vsub.s32 2, %v2648
          %v2650 = vrot.slane %v2637, %v2649
          %v2651 = vlaneseq
          %v2652 = vshrl.u32 %v2651, 7
          %v2653 = vsub.s32 3, %v2652
          %v2654 = vrot.slane %v2637, %v2653
          %v2659 = vadd.f32 %v2562, %v2642
          %v2660 = vadd.f32 %v2564, %v2646
          %v2661 = vadd.f32 %v2633, %v2650
          %v2662 = vadd.f32 %v2635, %v2654
          %vm2663 = vcmask 1040384
          %v2664 = vsel %vm2663, %v2659, 0.0
          %v2665 = vsel %vm2663, %v2660, 0.0
          %v2666 = vadd.f32 %v2664, %v2665
          %v2667 = vsel %vm2663, %v2661, 0.0
          %v2668 = vadd.f32 %v2666, %v2667
          %v2669 = vsel %vm2663, %v2662, 0.0
          %v2670 = vadd.f32 %v2668, %v2669
          %2671 = vadd.xlane.f32.xlu0 %v2670
          %v2672 = vpop.xlane.xlu0 %2671
          %v2673 = vrcp.pop 512.0
          %v2674 = vmul.f32 %v2672, %v2673
          %v2675 = vsub.f32 %v2659, %v2674
          %v2676 = vsub.f32 %v2660, %v2674
          %v2677 = vsub.f32 %v2661, %v2674
          %v2678 = vsub.f32 %v2662, %v2674
          %v2679 = vmul.f32 %v2675, %v2675
          %v2680 = vmul.f32 %v2676, %v2676
          %v2681 = vmul.f32 %v2677, %v2677
          %v2682 = vmul.f32 %v2678, %v2678
          %v2683 = vsel %vm2663, %v2679, 0.0
          %v2684 = vsel %vm2663, %v2680, 0.0
          %v2685 = vadd.f32 %v2683, %v2684
          %v2686 = vsel %vm2663, %v2681, 0.0
          %v2687 = vadd.f32 %v2685, %v2686
          %v2688 = vsel %vm2663, %v2682, 0.0
          %v2689 = vadd.f32 %v2687, %v2688
          %2690 = vadd.xlane.f32.xlu0 %v2689
          %v2691 = vpop.xlane.xlu0 %2690
          %v2692 = vmul.f32 %v2691, %v2673
          %v2693 = vadd.f32 %v2692, 1e-05
          %v2694 = vrsqrt.pop %v2693
          %v2695 = vmul.f32 %v2675, %v2694
          %v2696 = vmul.f32 %v2676, %v2694
          %v2697 = vmul.f32 %v2677, %v2694
          %v2698 = vmul.f32 %v2678, %v2694
          %v2699 = vld [vmem:[%s10] sm:$0xf]
          %v2701 = vlaneseq
          %v2702 = vshrl.u32 %v2701, 7
          %v2703 = vsub.s32 0, %v2702
          %v2704 = vrot.slane %v2699, %v2703
          %v2705 = vlaneseq
          %v2706 = vshrl.u32 %v2705, 7
          %v2707 = vsub.s32 1, %v2706
          %v2708 = vrot.slane %v2699, %v2707
          %v2709 = vlaneseq
          %v2710 = vshrl.u32 %v2709, 7
          %v2711 = vsub.s32 2, %v2710
          %v2712 = vrot.slane %v2699, %v2711
          %v2713 = vlaneseq
          %v2714 = vshrl.u32 %v2713, 7
          %v2715 = vsub.s32 3, %v2714
          %v2716 = vrot.slane %v2699, %v2715
          %v2721 = vmul.f32 %v2695, %v2704
          %v2722 = vmul.f32 %v2696, %v2708
          %v2723 = vmul.f32 %v2697, %v2712
          %v2724 = vmul.f32 %v2698, %v2716
          %v2725 = vld [vmem:[%s11] sm:$0xf]
          %v2727 = vlaneseq
          %v2728 = vshrl.u32 %v2727, 7
          %v2729 = vsub.s32 0, %v2728
          %v2730 = vrot.slane %v2725, %v2729
          %v2731 = vlaneseq
          %v2732 = vshrl.u32 %v2731, 7
          %v2733 = vsub.s32 1, %v2732
          %v2734 = vrot.slane %v2725, %v2733
          %v2735 = vlaneseq
          %v2736 = vshrl.u32 %v2735, 7
          %v2737 = vsub.s32 2, %v2736
          %v2738 = vrot.slane %v2725, %v2737
          %v2739 = vlaneseq
          %v2740 = vshrl.u32 %v2739, 7
          %v2741 = vsub.s32 3, %v2740
          %v2742 = vrot.slane %v2725, %v2741
          %v2747 = vadd.f32 %v2721, %v2730
          %v2748 = vadd.f32 %v2722, %v2734
          %v2749 = vadd.f32 %v2723, %v2738
          %v2750 = vadd.f32 %v2724, %v2742
          %v2751 = vmax.f32 %v2747, 0.0
          %v2752 = vmax.f32 %v2748, 0.0
          %v2753 = vmax.f32 %v2749, 0.0
          %v2754 = vmax.f32 %v2750, 0.0
          %v2755 = vld [vmem:[#allocation13] sm:$0xff]
          %v2756 = vld [vmem:[#allocation13 + $0x8] sm:$0xff]
          %v2757 = vld [vmem:[#allocation13 + $0x10] sm:$0xff]
          %v2758 = vld [vmem:[#allocation13 + $0x18] sm:$0xff]
          %v2759 = vld [vmem:[#allocation13 + $0x20] sm:$0xff]
          %v2760 = vld [vmem:[#allocation13 + $0x28] sm:$0xff]
          %v2761 = vld [vmem:[#allocation13 + $0x30] sm:$0xff]
          %v2762 = vld [vmem:[#allocation13 + $0x38] sm:$0xff]
          %v2763 = vld [vmem:[#allocation13 + $0x40] sm:$0xff]
          %v2764 = vld [vmem:[#allocation13 + $0x48] sm:$0xff]
          %v2765 = vld [vmem:[#allocation13 + $0x50] sm:$0xff]
          %v2766 = vld [vmem:[#allocation13 + $0x58] sm:$0xff]
          %v2767 = vld [vmem:[#allocation13 + $0x60] sm:$0xff]
          %v2768 = vld [vmem:[#allocation13 + $0x68] sm:$0xff]
          %v2769 = vld [vmem:[#allocation13 + $0x70] sm:$0xff]
          %v2770 = vld [vmem:[#allocation13 + $0x78] sm:$0xff]
          %v2771 = vld [vmem:[#allocation13 + $0x80] sm:$0xff]
          %v2772 = vld [vmem:[#allocation13 + $0x88] sm:$0xff]
          %v2773 = vld [vmem:[#allocation13 + $0x90] sm:$0xff]
          %v2774 = vld [vmem:[#allocation13 + $0x98] sm:$0xff]
          %v2775 = vld [vmem:[#allocation13 + $0xa0] sm:$0xff]
          %v2776 = vld [vmem:[#allocation13 + $0xa8] sm:$0xff]
          %v2777 = vld [vmem:[#allocation13 + $0xb0] sm:$0xff]
          %v2778 = vld [vmem:[#allocation13 + $0xb8] sm:$0xff]
          %v2779 = vld [vmem:[#allocation13 + $0xc0] sm:$0xff]
          %v2780 = vld [vmem:[#allocation13 + $0xc8] sm:$0xff]
          %v2781 = vld [vmem:[#allocation13 + $0xd0] sm:$0xff]
          %v2782 = vld [vmem:[#allocation13 + $0xd8] sm:$0xff]
          %v2783 = vld [vmem:[#allocation13 + $0xe0] sm:$0xff]
          %v2784 = vld [vmem:[#allocation13 + $0xe8] sm:$0xff]
          %v2785 = vld [vmem:[#allocation13 + $0xf0] sm:$0xff]
          %v2786 = vld [vmem:[#allocation13 + $0xf8] sm:$0xff]
          %v2787 = vld [vmem:[#allocation13 + $0x100] sm:$0xff]
          %v2788 = vld [vmem:[#allocation13 + $0x108] sm:$0xff]
          %v2789 = vld [vmem:[#allocation13 + $0x110] sm:$0xff]
          %v2790 = vld [vmem:[#allocation13 + $0x118] sm:$0xff]
          %v2791 = vld [vmem:[#allocation13 + $0x120] sm:$0xff]
          %v2792 = vld [vmem:[#allocation13 + $0x128] sm:$0xff]
          %v2793 = vld [vmem:[#allocation13 + $0x130] sm:$0xff]
          %v2794 = vld [vmem:[#allocation13 + $0x138] sm:$0xff]
          %v2795 = vld [vmem:[#allocation13 + $0x140] sm:$0xff]
          %v2796 = vld [vmem:[#allocation13 + $0x148] sm:$0xff]
          %v2797 = vld [vmem:[#allocation13 + $0x150] sm:$0xff]
          %v2798 = vld [vmem:[#allocation13 + $0x158] sm:$0xff]
          %v2799 = vld [vmem:[#allocation13 + $0x160] sm:$0xff]
          %v2800 = vld [vmem:[#allocation13 + $0x168] sm:$0xff]
          %v2801 = vld [vmem:[#allocation13 + $0x170] sm:$0xff]
          %v2802 = vld [vmem:[#allocation13 + $0x178] sm:$0xff]
          %v2803 = vld [vmem:[#allocation13 + $0x180] sm:$0xff]
          %v2804 = vld [vmem:[#allocation13 + $0x188] sm:$0xff]
          %v2805 = vld [vmem:[#allocation13 + $0x190] sm:$0xff]
          %v2806 = vld [vmem:[#allocation13 + $0x198] sm:$0xff]
          %v2807 = vld [vmem:[#allocation13 + $0x1a0] sm:$0xff]
          %v2808 = vld [vmem:[#allocation13 + $0x1a8] sm:$0xff]
          %v2809 = vld [vmem:[#allocation13 + $0x1b0] sm:$0xff]
          %v2810 = vld [vmem:[#allocation13 + $0x1b8] sm:$0xff]
          %v2811 = vld [vmem:[#allocation13 + $0x1c0] sm:$0xff]
          %v2812 = vld [vmem:[#allocation13 + $0x1c8] sm:$0xff]
          %v2813 = vld [vmem:[#allocation13 + $0x1d0] sm:$0xff]
          %v2814 = vld [vmem:[#allocation13 + $0x1d8] sm:$0xff]
          %v2815 = vld [vmem:[#allocation13 + $0x1e0] sm:$0xff]
          %v2816 = vld [vmem:[#allocation13 + $0x1e8] sm:$0xff]
          %v2817 = vld [vmem:[#allocation13 + $0x1f0] sm:$0xff]
          %v2818 = vld [vmem:[#allocation13 + $0x1f8] sm:$0xff]
          %v2819 = vld [vmem:[%s13] sm:$0x1]
          %2820 = vmatprep.subr.mxu0 0.0
          %2821 = vmatpush1.msra.mxu0 %v2755
          %2822 = vmatprep.subr.mxu0 0.0
          %2823 = vmatpush1.msra.mxu0 %v2756
          %2824 = vmatprep.subr.mxu0 0.0
          %2825 = vmatpush1.msra.mxu0 %v2757
          %2826 = vmatprep.subr.mxu0 0.0
          %2827 = vmatpush1.msra.mxu0 %v2758
          %2828 = vmatprep.subr.mxu0 0.0
          %2829 = vmatpush1.msra.mxu0 %v2759
          %2830 = vmatprep.subr.mxu0 0.0
          %2831 = vmatpush1.msra.mxu0 %v2760
          %2832 = vmatprep.subr.mxu0 0.0
          %2833 = vmatpush1.msra.mxu0 %v2761
          %2834 = vmatprep.subr.mxu0 0.0
          %2835 = vmatpush1.msra.mxu0 %v2762
          %2836 = vmatprep.subr.mxu0 0.0
          %2837 = vmatpush1.msra.mxu0 %v2763
          %2838 = vmatprep.subr.mxu0 0.0
          %2839 = vmatpush1.msra.mxu0 %v2764
          %2840 = vmatprep.subr.mxu0 0.0
          %2841 = vmatpush1.msra.mxu0 %v2765
          %2842 = vmatprep.subr.mxu0 0.0
          %2843 = vmatpush1.msra.mxu0 %v2766
          %2844 = vmatprep.subr.mxu0 0.0
          %2845 = vmatpush1.msra.mxu0 %v2767
          %2846 = vmatprep.subr.mxu0 0.0
          %2847 = vmatpush1.msra.mxu0 %v2768
          %2848 = vmatprep.subr.mxu0 0.0
          %2849 = vmatpush1.msra.mxu0 %v2769
          %2850 = vmatprep.subr.mxu0 0.0
          %2851 = vmatpush1.msra.mxu0 %v2770
          %2852 = vmatprep.subr.mxu0 0.0
          %2853 = vmatpush1.msra.mxu0 %v2771
          %2854 = vmatprep.subr.mxu0 0.0
          %2855 = vmatpush1.msra.mxu0 %v2772
          %2856 = vmatprep.subr.mxu0 0.0
          %2857 = vmatpush1.msra.mxu0 %v2773
          %2858 = vmatprep.subr.mxu0 0.0
          %2859 = vmatpush1.msra.mxu0 %v2774
          %2860 = vmatprep.subr.mxu0 0.0
          %2861 = vmatpush1.msra.mxu0 %v2775
          %2862 = vmatprep.subr.mxu0 0.0
          %2863 = vmatpush1.msra.mxu0 %v2776
          %2864 = vmatprep.subr.mxu0 0.0
          %2865 = vmatpush1.msra.mxu0 %v2777
          %2866 = vmatprep.subr.mxu0 0.0
          %2867 = vmatpush1.msra.mxu0 %v2778
          %2868 = vmatprep.subr.mxu0 0.0
          %2869 = vmatpush1.msra.mxu0 %v2779
          %2870 = vmatprep.subr.mxu0 0.0
          %2871 = vmatpush1.msra.mxu0 %v2780
          %2872 = vmatprep.subr.mxu0 0.0
          %2873 = vmatpush1.msra.mxu0 %v2781
          %2874 = vmatprep.subr.mxu0 0.0
          %2875 = vmatpush1.msra.mxu0 %v2782
          %2876 = vmatprep.subr.mxu0 0.0
          %2877 = vmatpush1.msra.mxu0 %v2783
          %2878 = vmatprep.subr.mxu0 0.0
          %2879 = vmatpush1.msra.mxu0 %v2784
          %2880 = vmatprep.subr.mxu0 0.0
          %2881 = vmatpush1.msra.mxu0 %v2785
          %2882 = vmatprep.subr.mxu0 0.0
          %2883 = vmatpush1.msra.mxu0 %v2786
          %2884 = vmatprep.mubr.f32.mxu0 %v2752
          %2885 = vmatmul.mubr.f32.gmra.mrb[0].mxu0 %v2751
          %v2886 = vpop.f32.mrb[0].mxu0
          %v2887 = vadd.f32 %v2819, %v2886
          %v2888 = vpop.f32.mrb[0].mxu0
          %2889 = vdwg.mxu0
          %2890 = vmatprep.subr.mxu0 0.0
          %2891 = vmatpush1.msra.mxu0 %v2787
          %2892 = vmatprep.subr.mxu0 0.0
          %2893 = vmatpush1.msra.mxu0 %v2788
          %2894 = vmatprep.subr.mxu0 0.0
          %2895 = vmatpush1.msra.mxu0 %v2789
          %2896 = vmatprep.subr.mxu0 0.0
          %2897 = vmatpush1.msra.mxu0 %v2790
          %2898 = vmatprep.subr.mxu0 0.0
          %2899 = vmatpush1.msra.mxu0 %v2791
          %2900 = vmatprep.subr.mxu0 0.0
          %2901 = vmatpush1.msra.mxu0 %v2792
          %2902 = vmatprep.subr.mxu0 0.0
          %2903 = vmatpush1.msra.mxu0 %v2793
          %2904 = vmatprep.subr.mxu0 0.0
          %2905 = vmatpush1.msra.mxu0 %v2794
          %2906 = vmatprep.subr.mxu0 0.0
          %2907 = vmatpush1.msra.mxu0 %v2795
          %2908 = vmatprep.subr.mxu0 0.0
          %2909 = vmatpush1.msra.mxu0 %v2796
          %2910 = vmatprep.subr.mxu0 0.0
          %2911 = vmatpush1.msra.mxu0 %v2797
          %2912 = vmatprep.subr.mxu0 0.0
          %2913 = vmatpush1.msra.mxu0 %v2798
          %2914 = vmatprep.subr.mxu0 0.0
          %2915 = vmatpush1.msra.mxu0 %v2799
          %2916 = vmatprep.subr.mxu0 0.0
          %2917 = vmatpush1.msra.mxu0 %v2800
          %2918 = vmatprep.subr.mxu0 0.0
          %2919 = vmatpush1.msra.mxu0 %v2801
          %2920 = vmatprep.subr.mxu0 0.0
          %2921 = vmatpush1.msra.mxu0 %v2802
          %2922 = vmatprep.subr.mxu0 0.0
          %2923 = vmatpush1.msra.mxu0 %v2803
          %2924 = vmatprep.subr.mxu0 0.0
          %2925 = vmatpush1.msra.mxu0 %v2804
          %2926 = vmatprep.subr.mxu0 0.0
          %2927 = vmatpush1.msra.mxu0 %v2805
          %2928 = vmatprep.subr.mxu0 0.0
          %2929 = vmatpush1.msra.mxu0 %v2806
          %2930 = vmatprep.subr.mxu0 0.0
          %2931 = vmatpush1.msra.mxu0 %v2807
          %2932 = vmatprep.subr.mxu0 0.0
          %2933 = vmatpush1.msra.mxu0 %v2808
          %2934 = vmatprep.subr.mxu0 0.0
          %2935 = vmatpush1.msra.mxu0 %v2809
          %2936 = vmatprep.subr.mxu0 0.0
          %2937 = vmatpush1.msra.mxu0 %v2810
          %2938 = vmatprep.subr.mxu0 0.0
          %2939 = vmatpush1.msra.mxu0 %v2811
          %2940 = vmatprep.subr.mxu0 0.0
          %2941 = vmatpush1.msra.mxu0 %v2812
          %2942 = vmatprep.subr.mxu0 0.0
          %2943 = vmatpush1.msra.mxu0 %v2813
          %2944 = vmatprep.subr.mxu0 0.0
          %2945 = vmatpush1.msra.mxu0 %v2814
          %2946 = vmatprep.subr.mxu0 0.0
          %2947 = vmatpush1.msra.mxu0 %v2815
          %2948 = vmatprep.subr.mxu0 0.0
          %2949 = vmatpush1.msra.mxu0 %v2816
          %2950 = vmatprep.subr.mxu0 0.0
          %2951 = vmatpush1.msra.mxu0 %v2817
          %2952 = vmatprep.subr.mxu0 0.0
          %2953 = vmatpush1.msra.mxu0 %v2818
          %2954 = vmatprep.mubr.f32.mxu0 %v2754
          %2955 = vmatmul.mubr.f32.gmra.mrb[0].mxu0 %v2753
          %v2956 = vpop.f32.mrb[0].mxu0
          %v2957 = vadd.f32 %v2887, %v2956
          %v2958 = vpop.f32.mrb[0].mxu0
          %2959 = vdwg.mxu0
          %2960 = vst [vmem:[%s608] sm:$0x1] %v2957
        $region112: #{tpu_custom_call.1} parent=75 // pred_fallthru
          _
        %s2961 = sand.u32 %s360, 1
        %s2962 = scalar_lea.sflag [#allocation5], %s2961
        %s2963 = sand.u32 %s360, 1
        %s2964 = scalar_lea.vmem [#allocation15], %s2963
        // Predicated region
        $region113: #{tpu_custom_call.1} parent=75 // pred_check
          %p2965 = pneg %p370
        $region114: #{tpu_custom_call.1} parent=75 // pred_check_branch
          %2967 = sbr.rel (%p2965) target = $region116
        $region115: #{tpu_custom_call.1} parent=75 // pred_region
          %s2969 = ssub.s32 16, 16
          %2970 = vsyncadd %s2962, %s2969
          %s2971 = smul.addr %s38, 16
          %s2972 = scalar_lea.hbm %s14, %s2971
          %s2974 = sshll.u32 %s2964, 4
          %s2975 = int_to_ptr.vmem [resolvable:$true] %s2974
          %2977 = dma.vmem_to_hbm [thread:$0]  %s2975, 16, %s2972, %s2962
        $region116: #{tpu_custom_call.1} parent=75 // pred_fallthru
          _
      $region76: #{tpu_custom_call.1} parent=5 // pred_fallthru
        _
      %p2978 = scmp.le.s32.totalorder 2, %s29
      // Predicated region
      $region117: #{tpu_custom_call.1} parent=5 // pred_check
        %p2979 = pneg %p2978
      $region118: #{tpu_custom_call.1} parent=5 // pred_check_branch
        %2981 = sbr.rel (%p2979) target = $region120
      $region119: #{tpu_custom_call.1} parent=5 // pred_region
        %s2982 = ssub.s32 %s29, 2
        // Predicated region
        $region121: #{tpu_custom_call.1} parent=119 // pred_check
          %p2983 = pneg %p376
        $region122: #{tpu_custom_call.1} parent=119 // pred_check_branch
          %2985 = sbr.rel (%p2983) target = $region124
        $region123: #{tpu_custom_call.1} parent=119 // pred_region
          %s2986 = sand.u32 %s361, 1
          %s2987 = scalar_lea.sflag [#allocation5], %s2986
          %s2988 = sand.u32 %s361, 1
          %s2989 = scalar_lea.vmem [#allocation15], %s2988
          %2990 = dma.done %s2987, 16
        $region124: #{tpu_custom_call.1} parent=119 // pred_fallthru
          _
      $region120: #{tpu_custom_call.1} parent=5 // pred_fallthru
        _
    $region6: #{tpu_custom_call.1} parent=1 // loop_footer
      %s33 = sadd.s32 1, %s29
    $region7: #{tpu_custom_call.1} parent=1 // loop_footer_branch
      %28 = sbr.rel target = $region3
    $region8: #{tpu_custom_call.1} parent=1 // loop_exit
      _
    %2991 = vsyncpa [#allocation4], 1
    %s2992 = scalar_lea.sflag [#allocation4], 1
    %2993 = vsyncpa %s2992, 1
    %2994 = vsyncpa [#allocation7], 1
    %2995 = vsyncpa [#allocation11], 1
    %2996 = vsyncpa [#allocation14], 1
    %2997 = vsyncpa [#allocation5], 1
    %s2998 = scalar_lea.sflag [#allocation5], 1
    %2999 = vsyncpa %s2998, 1

</llo_original>
